<compile_context>
chip_gen: v7x
topology: tpu7x:2x2x1
jax: 0.10.0
libtpu: 0.0.40
codegen_flags: <defaults>
</compile_context>

<pallas_src>
import functools

import jax
import jax.numpy as jnp
import numpy as np
from jax import lax
from jax.experimental import pallas as pl
from jax.experimental.pallas import tpu as pltpu

_PW = 8          # sublane-aligned halo width along W (left & right)
_PACK = 2        # batch images packed into the lane (channel) dim per grid step


# ---------------------------------------------------------------------------
# Fused KSFA kernel: one grid step == one PAIR of batch images (channels packed
# to 2C = 128 lanes), all intermediates VMEM-resident.
# ---------------------------------------------------------------------------
def _ksfa_kernel(x_ref, w0_ref, b0_ref, ws_ref, bs_ref,
                 w12a_ref, w12b_ref, b12_ref, mavg_ref,
                 wfc1_ref, bfc1_ref, wfc2d_ref, wcv_ref, bcv_ref,
                 o_ref, xp0_ref, xp1_ref, *, H, W, CP):
    PW = _PW
    f32 = jnp.float32
    bf16 = jnp.bfloat16

    x = x_ref[0]                                        # (H, W, CP)

    # ---- depthwise 3x3 conv, padding=1 (halo-only zeroing of VMEM scratch) --
    xp0_ref[:, 0:PW, :] = jnp.zeros((H + 2, PW, CP), f32)                  # left strip
    xp0_ref[:, PW + W:PW + W + PW, :] = jnp.zeros((H + 2, PW, CP), f32)    # right strip
    xp0_ref[0:1, PW:PW + W, :] = jnp.zeros((1, W, CP), f32)                # top row
    xp0_ref[H + 1:H + 2, PW:PW + W, :] = jnp.zeros((1, W, CP), f32)        # bottom row
    xp0_ref[1:1 + H, PW:PW + W, :] = x                                     # aligned interior

    w0 = w0_ref[...]                                    # (9, CP)  hoisted load
    acc = None
    for ky in range(3):
        for kx in range(3):
            k = ky * 3 + kx
            win = xp0_ref[ky:ky + H, PW - 1 + kx:PW - 1 + kx + W, :]
            term = win * w0[k:k + 1]
            acc = term if acc is None else acc + term
    a1dw = acc + b0_ref[...]                            # (H, W, CP)

    # ---- depthwise 5x5 conv, dilation=2, padding=4 --------------------------
    xp1_ref[:, 0:PW, :] = jnp.zeros((H + 8, PW, CP), f32)
    xp1_ref[:, PW + W:PW + W + PW, :] = jnp.zeros((H + 8, PW, CP), f32)
    xp1_ref[0:4, PW:PW + W, :] = jnp.zeros((4, W, CP), f32)
    xp1_ref[H + 4:H + 8, PW:PW + W, :] = jnp.zeros((4, W, CP), f32)
    xp1_ref[4:4 + H, PW:PW + W, :] = a1dw

    ws = ws_ref[...]                                    # (25, CP) hoisted load
    acc = None
    for ky in range(5):
        for kx in range(5):
            k = ky * 5 + kx
            win = xp1_ref[2 * ky:2 * ky + H,
                          PW - 4 + 2 * kx:PW - 4 + 2 * kx + W, :]
            term = win * ws[k:k + 1]
            acc = term if acc is None else acc + term
    a2dw = acc + bs_ref[...]                            # (H, W, CP)

    # ---- conv1 | conv2 as two block-diagonal MXU matmuls (bf16 ops, f32 acc) -
    hw = H * W
    a1m = a1dw.reshape(hw, CP).astype(bf16)
    a2m = a2dw.reshape(hw, CP).astype(bf16)
    attn = (jnp.dot(a1m, w12a_ref[...], preferred_element_type=f32)
            + jnp.dot(a2m, w12b_ref[...], preferred_element_type=f32)
            + b12_ref[...])                             # (HW, CP) = [attn1|attn2] per image

    # ---- per-image channel mean (avg_attn), broadcast via block-diag matmul -
    avg = jnp.dot(attn.astype(bf16), mavg_ref[...],
                  preferred_element_type=f32)           # (HW, CP), mean broadcast per image

    # ---- per-image global average pool + channel-attention MLP --------------
    pooled = jnp.mean(attn, axis=0, keepdims=True)      # (1, CP), segmented per image
    z = jnp.maximum(
        jnp.dot(pooled.astype(bf16), wfc1_ref[...], preferred_element_type=f32)
        + bfc1_ref[...], 0.0)                           # (1, 2d)  (BN folded into fc1)
    # 2-way softmax == sigmoid of the logit difference (wfc2d precomputed host-side)
    a_full = jax.nn.sigmoid(
        jnp.dot(z.astype(bf16), wfc2d_ref[...], preferred_element_type=f32))   # (1, CP)

    # ---- weighted fuse + final 1x1 conv (stacked, block-diag) + sigmoid gate -
    t = (attn * a_full * avg).astype(bf16)              # (HW, CP)
    y = jnp.dot(t, wcv_ref[...], preferred_element_type=f32) + bcv_ref[...]
    o_ref[0] = x * jax.nn.sigmoid(y).reshape(H, W, CP)


# ---------------------------------------------------------------------------
# Full forward (NCHW in/out; NHWC with 2-image channel packing inside)
# ---------------------------------------------------------------------------
def ksfa_forward(x_nchw, params):
    f32 = jnp.float32
    bf16 = jnp.bfloat16
    P = _PACK

    x = jnp.transpose(x_nchw, (0, 2, 3, 1)).astype(f32)    # NCHW -> NHWC
    B, H, W, C = x.shape
    Ch = C // 2
    d = params["w_fc1"].shape[1]

    # Pack P images per grid step along channels (pad batch if needed).
    pad_b = (-B) % P
    if pad_b:
        x = jnp.concatenate([x, jnp.zeros((pad_b, H, W, C), f32)], axis=0)
    Bp = (B + pad_b) // P
    CP = P * C
    xp = x.reshape(Bp, P, H, W, C).transpose(0, 2, 3, 1, 4).reshape(Bp, H, W, CP)

    def tile_c(v):                       # repeat per-image channel data P times (lane packing)
        return jnp.concatenate([v] * P, axis=-1)

    def block_diag(m):                   # (a, b) -> (P*a, P*b) block diagonal (no image mixing)
        a, b = m.shape
        out = jnp.zeros((P * a, P * b), m.dtype)
        for i in range(P):
            out = out.at[i * a:(i + 1) * a, i * b:(i + 1) * b].set(m)
        return out

    # Depthwise weights / biases (f32, VPU path).
    w0 = tile_c(params["w_conv0"].reshape(9, C))
    b0 = tile_c(params["b_conv0"].reshape(1, C))
    ws = tile_c(params["w_spatial"].reshape(25, C))
    bs = tile_c(params["b_spatial"].reshape(1, C))

    # conv1 / conv2 merged: per-image column layout is [attn1 | attn2].
    zblk = jnp.zeros((C, Ch), f32)
    w12a = block_diag(jnp.concatenate([params["w_conv1"], zblk], axis=1)).astype(bf16)  # (2C,2C)
    w12b = block_diag(jnp.concatenate([zblk, params["w_conv2"]], axis=1)).astype(bf16)  # (2C,2C)
    b12 = tile_c(jnp.concatenate([params["b_conv1"], params["b_conv2"]]).reshape(1, C))

    # Per-image channel-mean broadcast matrix (segmented so images don't mix).
    mavg = block_diag(jnp.full((C, C), 1.0 / C, f32)).astype(bf16)                      # (2C,2C)

    # fc1 with inference-mode BatchNorm folded in.
    scale = params["bn_gamma"] / jnp.sqrt(params["bn_var"] + 1e-5)
    wfc1 = block_diag(params["w_fc1"] * scale[None, :]).astype(bf16)                    # (2C,2d)
    bfc1 = tile_c((params["bn_beta"] - params["bn_mean"] * scale).reshape(1, d))

    # fc2 weight difference: sigmoid(z @ wfc2d) == 2-way softmax over the split.
    wfc2 = params["w_fc2"]
    wfc2_sw = jnp.concatenate([wfc2[:, Ch:], wfc2[:, :Ch]], axis=1)
    wfc2d = block_diag(wfc2 - wfc2_sw).astype(bf16)                                     # (2d,2C)

    # Final 1x1 conv: stacked [w_conv; w_conv] per image, block-diag over images.
    wcv = block_diag(jnp.concatenate([params["w_conv"], params["w_conv"]],
                                     axis=0)).astype(bf16)                              # (2C,2C)
    bcv = tile_c(params["b_conv"].reshape(1, C))

    kern = functools.partial(_ksfa_kernel, H=H, W=W, CP=CP)

    def wspec(shape):
        return pl.BlockSpec(shape, lambda b, _s=shape: tuple(0 for _ in _s))

    out = pl.pallas_call(
        kern,
        out_shape=jax.ShapeDtypeStruct((Bp, H, W, CP), f32),
        grid=(Bp,),
        in_specs=[
            pl.BlockSpec((1, H, W, CP), lambda b: (b, 0, 0, 0)),   # packed input
            wspec((9, CP)), wspec((1, CP)),                        # dw 3x3
            wspec((25, CP)), wspec((1, CP)),                       # dw 5x5 dil2
            wspec((CP, CP)), wspec((CP, CP)), wspec((1, CP)),      # merged 1x1 convs
            wspec((CP, CP)),                                       # channel-mean matrix
            wspec((CP, P * d)), wspec((1, P * d)),                 # fc1 (BN folded)
            wspec((P * d, CP)),                                    # fc2 (softmax diff)
            wspec((CP, CP)), wspec((1, CP)),                       # final 1x1 conv
        ],
        out_specs=pl.BlockSpec((1, H, W, CP), lambda b: (b, 0, 0, 0)),
        scratch_shapes=[
            pltpu.VMEM((H + 2, W + 2 * _PW, CP), f32),     # 3x3 halo buffer
            pltpu.VMEM((H + 8, W + 2 * _PW, CP), f32),     # 5x5 dil-2 halo buffer
        ],
        compiler_params=pltpu.CompilerParams(
            dimension_semantics=("parallel",),
            vmem_limit_bytes=32 * 1024 * 1024,
        ),
    )(xp, w0, b0, ws, bs, w12a, w12b, b12, mavg, wfc1, bfc1, wfc2d, wcv, bcv)

    out = (out.reshape(Bp, H, W, P, C).transpose(0, 3, 1, 2, 4)
              .reshape(Bp * P, H, W, C))
    if pad_b:
        out = out[:B]
    return jnp.transpose(out, (0, 3, 1, 2))               # NHWC -> NCHW


# ---------------------------------------------------------------------------
# Pure-JAX reference (faithful to the PyTorch forward) for correctness check
# ---------------------------------------------------------------------------
def _channel_attention_ref(pooled, p):
    z = pooled @ p["w_fc1"]
    z = (z - p["bn_mean"]) / jnp.sqrt(p["bn_var"] + 1e-5) * p["bn_gamma"] + p["bn_beta"]
    z = jnp.maximum(z, 0.0)
    ab = z @ p["w_fc2"]
    B, C = ab.shape
    ab = jax.nn.softmax(ab.reshape(B, 2, C // 2), axis=1)
    return ab[:, 0, :], ab[:, 1, :]


def ksfa_reference(x_nchw, p):
    hp = lax.Precision.HIGHEST
    x = jnp.transpose(x_nchw, (0, 2, 3, 1)).astype(jnp.float32)
    B, H, W, C = x.shape
    dn = ("NHWC", "HWIO", "NHWC")
    a1dw = lax.conv_general_dilated(
        x, p["w_conv0"].reshape(3, 3, 1, C), (1, 1), ((1, 1), (1, 1)),
        dimension_numbers=dn, feature_group_count=C, precision=hp) + p["b_conv0"]
    a2dw = lax.conv_general_dilated(
        a1dw, p["w_spatial"].reshape(5, 5, 1, C), (1, 1), ((4, 4), (4, 4)),
        rhs_dilation=(2, 2), dimension_numbers=dn, feature_group_count=C,
        precision=hp) + p["b_spatial"]
    attn1 = jnp.einsum("bhwc,cd->bhwd", a1dw, p["w_conv1"], precision=hp) + p["b_conv1"]
    attn2 = jnp.einsum("bhwc,cd->bhwd", a2dw, p["w_conv2"], precision=hp) + p["b_conv2"]
    attn = jnp.concatenate([attn1, attn2], axis=-1)
    avg_attn = jnp.mean(attn, axis=-1, keepdims=True)
    pooled = jnp.mean(attn, axis=(1, 2))
    a1, a2 = _channel_attention_ref(pooled, p)
    w1 = a1[:, None, None, :] * avg_attn
    w2 = a2[:, None, None, :] * avg_attn
    attn_c = attn1 * w1 + attn2 * w2
    y = jnp.einsum("bhwc,cd->bhwd", attn_c, p["w_conv"], precision=hp) + p["b_conv"]
    out = x * jax.nn.sigmoid(y)
    return jnp.transpose(out, (0, 3, 1, 2))


# ---------------------------------------------------------------------------
# Deterministic parameter initialization (synthetic; shapes match the module)
# ---------------------------------------------------------------------------
def init_params(key, dim, r=16, L=32):
    d = max(dim // r, L)
    ks = jax.random.split(key, 12)

    def u(k, shape, fan_in):
        bound = 1.0 / np.sqrt(fan_in)
        return jax.random.uniform(k, shape, jnp.float32, -bound, bound)

    return {
        "w_conv0":   u(ks[0], (3, 3, dim), 9),          # depthwise 3x3 (HW C)
        "b_conv0":   u(ks[1], (dim,), 9),
        "w_spatial": u(ks[2], (5, 5, dim), 25),         # depthwise 5x5 dil=2
        "b_spatial": u(ks[3], (dim,), 25),
        "w_conv1":   u(ks[4], (dim, dim // 2), dim),    # 1x1: C -> C/2
        "b_conv1":   u(ks[5], (dim // 2,), dim),
        "w_conv2":   u(ks[6], (dim, dim // 2), dim),
        "b_conv2":   u(ks[7], (dim // 2,), dim),
        "w_fc1":     u(ks[8], (dim, d), dim),           # no bias
        "bn_gamma":  jnp.ones((d,), jnp.float32),
        "bn_beta":   jnp.zeros((d,), jnp.float32),
        "bn_mean":   jnp.zeros((d,), jnp.float32),
        "bn_var":    jnp.ones((d,), jnp.float32),
        "w_fc2":     u(ks[9], (d, dim), d),             # no bias
        "w_conv":    u(ks[10], (dim // 2, dim), dim // 2),
        "b_conv":    u(ks[11], (dim,), dim // 2),
    }


if __name__ == "__main__":
    key = jax.random.PRNGKey(0)
    kx_, kp = jax.random.split(key)
    B, dim, H, W = 2, 64, 16, 16            # x: NCHW = (2, 64, 16, 16)
    x = jax.random.normal(kx_, (B, dim, H, W), jnp.float32)
    params = init_params(kp, dim)

    out = jax.jit(ksfa_forward)(x, params)
    out = jax.block_until_ready(out)
    assert out.shape == (B, dim, H, W)

    ref = ksfa_reference(x, params)
    np.testing.assert_allclose(np.asarray(out), np.asarray(ref), rtol=5e-3, atol=1e-3)

    print("KERNEL_OK")
</pallas_src>

<mosaic_0001>
module attributes {stable_mosaic.version = 11 : i64} {
  func.func @_ksfa_kernel(%arg0: i32, %arg1: memref<1x16x16x128xf32, #tpu.memory_space<vmem>>, %arg2: memref<9x128xf32, #tpu.memory_space<vmem>>, %arg3: memref<1x128xf32, #tpu.memory_space<vmem>>, %arg4: memref<25x128xf32, #tpu.memory_space<vmem>>, %arg5: memref<1x128xf32, #tpu.memory_space<vmem>>, %arg6: memref<128x128xbf16, #tpu.memory_space<vmem>>, %arg7: memref<128x128xbf16, #tpu.memory_space<vmem>>, %arg8: memref<1x128xf32, #tpu.memory_space<vmem>>, %arg9: memref<128x128xbf16, #tpu.memory_space<vmem>>, %arg10: memref<128x64xbf16, #tpu.memory_space<vmem>>, %arg11: memref<1x64xf32, #tpu.memory_space<vmem>>, %arg12: memref<64x128xbf16, #tpu.memory_space<vmem>>, %arg13: memref<128x128xbf16, #tpu.memory_space<vmem>>, %arg14: memref<1x128xf32, #tpu.memory_space<vmem>>, %arg15: memref<1x16x16x128xf32, #tpu.memory_space<vmem>>, %arg16: memref<18x32x128xf32, #tpu.memory_space<vmem>>, %arg17: memref<24x32x128xf32, #tpu.memory_space<vmem>>) attributes {dimension_semantics = [#tpu.dimension_semantics<parallel>], iteration_bounds = array<i64: 1>, scalar_prefetch = 0 : i64, scratch_operands = 2 : i64, tpu.core_type = #tpu.core_type<tc>, window_params = [{transform_indices = @transform_0, window_bounds = array<i64: 1, 16, 16, 128>}, {pipeline_mode = #tpu.pipeline_mode<synchronous>, transform_indices = @transform_1, window_bounds = array<i64: 9, 128>}, {pipeline_mode = #tpu.pipeline_mode<synchronous>, transform_indices = @transform_2, window_bounds = array<i64: 1, 128>}, {pipeline_mode = #tpu.pipeline_mode<synchronous>, transform_indices = @transform_3, window_bounds = array<i64: 25, 128>}, {pipeline_mode = #tpu.pipeline_mode<synchronous>, transform_indices = @transform_4, window_bounds = array<i64: 1, 128>}, {pipeline_mode = #tpu.pipeline_mode<synchronous>, transform_indices = @transform_5, window_bounds = array<i64: 128, 128>}, {pipeline_mode = #tpu.pipeline_mode<synchronous>, transform_indices = @transform_6, window_bounds = array<i64: 128, 128>}, {pipeline_mode = #tpu.pipeline_mode<synchronous>, transform_indices = @transform_7, window_bounds = array<i64: 1, 128>}, {pipeline_mode = #tpu.pipeline_mode<synchronous>, transform_indices = @transform_8, window_bounds = array<i64: 128, 128>}, {pipeline_mode = #tpu.pipeline_mode<synchronous>, transform_indices = @transform_9, window_bounds = array<i64: 128, 64>}, {pipeline_mode = #tpu.pipeline_mode<synchronous>, transform_indices = @transform_10, window_bounds = array<i64: 1, 64>}, {pipeline_mode = #tpu.pipeline_mode<synchronous>, transform_indices = @transform_11, window_bounds = array<i64: 64, 128>}, {pipeline_mode = #tpu.pipeline_mode<synchronous>, transform_indices = @transform_12, window_bounds = array<i64: 128, 128>}, {pipeline_mode = #tpu.pipeline_mode<synchronous>, transform_indices = @transform_13, window_bounds = array<i64: 1, 128>}, {transform_indices = @transform_14, window_bounds = array<i64: 1, 16, 16, 128>}]} {
    %c0 = arith.constant 0 : index
    %c0_0 = arith.constant 0 : index
    %c0_1 = arith.constant 0 : index
    %c0_2 = arith.constant 0 : index
    %0 = vector.load %arg1[%c0, %c0_0, %c0_1, %c0_2] : memref<1x16x16x128xf32, #tpu.memory_space<vmem>>, vector<1x16x16x128xf32>
    %1 = vector.shape_cast %0 : vector<1x16x16x128xf32> to vector<16x16x128xf32>
    %cst = arith.constant 0.000000e+00 : f32
    %2 = vector.broadcast %cst : f32 to vector<18x8x128xf32>
    %c0_3 = arith.constant 0 : index
    %c0_4 = arith.constant 0 : index
    %c0_5 = arith.constant 0 : index
    %3 = vector.load %arg16[%c0_3, %c0_4, %c0_5] : memref<18x32x128xf32, #tpu.memory_space<vmem>>, vector<18x8x128xf32>
    tpu.vector_store %arg16[%c0_3, %c0_4, %c0_5], %2 {strides = array<i32>} : memref<18x32x128xf32, #tpu.memory_space<vmem>>, vector<18x8x128xf32>,
    %cst_6 = arith.constant 0.000000e+00 : f32
    %4 = vector.broadcast %cst_6 : f32 to vector<18x8x128xf32>
    %c0_7 = arith.constant 0 : index
    %c24 = arith.constant 24 : index
    %c0_8 = arith.constant 0 : index
    %5 = vector.load %arg16[%c0_7, %c24, %c0_8] : memref<18x32x128xf32, #tpu.memory_space<vmem>>, vector<18x8x128xf32>
    tpu.vector_store %arg16[%c0_7, %c24, %c0_8], %4 {strides = array<i32>} : memref<18x32x128xf32, #tpu.memory_space<vmem>>, vector<18x8x128xf32>,
    %cst_9 = arith.constant 0.000000e+00 : f32
    %6 = vector.broadcast %cst_9 : f32 to vector<1x16x128xf32>
    %c0_10 = arith.constant 0 : index
    %c8 = arith.constant 8 : index
    %c0_11 = arith.constant 0 : index
    %7 = vector.load %arg16[%c0_10, %c8, %c0_11] : memref<18x32x128xf32, #tpu.memory_space<vmem>>, vector<1x16x128xf32>
    tpu.vector_store %arg16[%c0_10, %c8, %c0_11], %6 {strides = array<i32>} : memref<18x32x128xf32, #tpu.memory_space<vmem>>, vector<1x16x128xf32>,
    %cst_12 = arith.constant 0.000000e+00 : f32
    %8 = vector.broadcast %cst_12 : f32 to vector<1x16x128xf32>
    %c17 = arith.constant 17 : index
    %c8_13 = arith.constant 8 : index
    %c0_14 = arith.constant 0 : index
    %9 = vector.load %arg16[%c17, %c8_13, %c0_14] : memref<18x32x128xf32, #tpu.memory_space<vmem>>, vector<1x16x128xf32>
    tpu.vector_store %arg16[%c17, %c8_13, %c0_14], %8 {strides = array<i32>} : memref<18x32x128xf32, #tpu.memory_space<vmem>>, vector<1x16x128xf32>,
    %c1 = arith.constant 1 : index
    %c8_15 = arith.constant 8 : index
    %c0_16 = arith.constant 0 : index
    %10 = vector.load %arg16[%c1, %c8_15, %c0_16] : memref<18x32x128xf32, #tpu.memory_space<vmem>>, vector<16x16x128xf32>
    tpu.vector_store %arg16[%c1, %c8_15, %c0_16], %1 {strides = array<i32>} : memref<18x32x128xf32, #tpu.memory_space<vmem>>, vector<16x16x128xf32>,
    %c0_17 = arith.constant 0 : index
    %c0_18 = arith.constant 0 : index
    %11 = vector.load %arg2[%c0_17, %c0_18] : memref<9x128xf32, #tpu.memory_space<vmem>>, vector<9x128xf32>
    %c0_19 = arith.constant 0 : index
    %c7 = arith.constant 7 : index
    %c0_20 = arith.constant 0 : index
    %12 = vector.load %arg16[%c0_19, %c7, %c0_20] : memref<18x32x128xf32, #tpu.memory_space<vmem>>, vector<16x16x128xf32>
    %13 = vector.extract_strided_slice %11 {offsets = [0, 0], sizes = [1, 128], strides = [1, 1]} : vector<9x128xf32> to vector<1x128xf32>
    %14 = vector.shape_cast %13 : vector<1x128xf32> to vector<1x1x128xf32>
    %15 = vector.broadcast %14 : vector<1x1x128xf32> to vector<16x16x128xf32>
    %16 = arith.mulf %12, %15 : vector<16x16x128xf32>
    %c0_21 = arith.constant 0 : index
    %c8_22 = arith.constant 8 : index
    %c0_23 = arith.constant 0 : index
    %17 = vector.load %arg16[%c0_21, %c8_22, %c0_23] : memref<18x32x128xf32, #tpu.memory_space<vmem>>, vector<16x16x128xf32>
    %18 = vector.extract_strided_slice %11 {offsets = [1, 0], sizes = [1, 128], strides = [1, 1]} : vector<9x128xf32> to vector<1x128xf32>
    %19 = vector.shape_cast %18 : vector<1x128xf32> to vector<1x1x128xf32>
    %20 = vector.broadcast %19 : vector<1x1x128xf32> to vector<16x16x128xf32>
    %21 = arith.mulf %17, %20 : vector<16x16x128xf32>
    %22 = arith.addf %16, %21 : vector<16x16x128xf32>
    %c0_24 = arith.constant 0 : index
    %c9 = arith.constant 9 : index
    %c0_25 = arith.constant 0 : index
    %23 = vector.load %arg16[%c0_24, %c9, %c0_25] : memref<18x32x128xf32, #tpu.memory_space<vmem>>, vector<16x16x128xf32>
    %24 = vector.extract_strided_slice %11 {offsets = [2, 0], sizes = [1, 128], strides = [1, 1]} : vector<9x128xf32> to vector<1x128xf32>
    %25 = vector.shape_cast %24 : vector<1x128xf32> to vector<1x1x128xf32>
    %26 = vector.broadcast %25 : vector<1x1x128xf32> to vector<16x16x128xf32>
    %27 = arith.mulf %23, %26 : vector<16x16x128xf32>
    %28 = arith.addf %22, %27 : vector<16x16x128xf32>
    %c1_26 = arith.constant 1 : index
    %c7_27 = arith.constant 7 : index
    %c0_28 = arith.constant 0 : index
    %29 = vector.load %arg16[%c1_26, %c7_27, %c0_28] : memref<18x32x128xf32, #tpu.memory_space<vmem>>, vector<16x16x128xf32>
    %30 = vector.extract_strided_slice %11 {offsets = [3, 0], sizes = [1, 128], strides = [1, 1]} : vector<9x128xf32> to vector<1x128xf32>
    %31 = vector.shape_cast %30 : vector<1x128xf32> to vector<1x1x128xf32>
    %32 = vector.broadcast %31 : vector<1x1x128xf32> to vector<16x16x128xf32>
    %33 = arith.mulf %29, %32 : vector<16x16x128xf32>
    %34 = arith.addf %28, %33 : vector<16x16x128xf32>
    %c1_29 = arith.constant 1 : index
    %c8_30 = arith.constant 8 : index
    %c0_31 = arith.constant 0 : index
    %35 = vector.load %arg16[%c1_29, %c8_30, %c0_31] : memref<18x32x128xf32, #tpu.memory_space<vmem>>, vector<16x16x128xf32>
    %36 = vector.extract_strided_slice %11 {offsets = [4, 0], sizes = [1, 128], strides = [1, 1]} : vector<9x128xf32> to vector<1x128xf32>
    %37 = vector.shape_cast %36 : vector<1x128xf32> to vector<1x1x128xf32>
    %38 = vector.broadcast %37 : vector<1x1x128xf32> to vector<16x16x128xf32>
    %39 = arith.mulf %35, %38 : vector<16x16x128xf32>
    %40 = arith.addf %34, %39 : vector<16x16x128xf32>
    %c1_32 = arith.constant 1 : index
    %c9_33 = arith.constant 9 : index
    %c0_34 = arith.constant 0 : index
    %41 = vector.load %arg16[%c1_32, %c9_33, %c0_34] : memref<18x32x128xf32, #tpu.memory_space<vmem>>, vector<16x16x128xf32>
    %42 = vector.extract_strided_slice %11 {offsets = [5, 0], sizes = [1, 128], strides = [1, 1]} : vector<9x128xf32> to vector<1x128xf32>
    %43 = vector.shape_cast %42 : vector<1x128xf32> to vector<1x1x128xf32>
    %44 = vector.broadcast %43 : vector<1x1x128xf32> to vector<16x16x128xf32>
    %45 = arith.mulf %41, %44 : vector<16x16x128xf32>
    %46 = arith.addf %40, %45 : vector<16x16x128xf32>
    %c2 = arith.constant 2 : index
    %c7_35 = arith.constant 7 : index
    %c0_36 = arith.constant 0 : index
    %47 = vector.load %arg16[%c2, %c7_35, %c0_36] : memref<18x32x128xf32, #tpu.memory_space<vmem>>, vector<16x16x128xf32>
    %48 = vector.extract_strided_slice %11 {offsets = [6, 0], sizes = [1, 128], strides = [1, 1]} : vector<9x128xf32> to vector<1x128xf32>
    %49 = vector.shape_cast %48 : vector<1x128xf32> to vector<1x1x128xf32>
    %50 = vector.broadcast %49 : vector<1x1x128xf32> to vector<16x16x128xf32>
    %51 = arith.mulf %47, %50 : vector<16x16x128xf32>
    %52 = arith.addf %46, %51 : vector<16x16x128xf32>
    %c2_37 = arith.constant 2 : index
    %c8_38 = arith.constant 8 : index
    %c0_39 = arith.constant 0 : index
    %53 = vector.load %arg16[%c2_37, %c8_38, %c0_39] : memref<18x32x128xf32, #tpu.memory_space<vmem>>, vector<16x16x128xf32>
    %54 = vector.extract_strided_slice %11 {offsets = [7, 0], sizes = [1, 128], strides = [1, 1]} : vector<9x128xf32> to vector<1x128xf32>
    %55 = vector.shape_cast %54 : vector<1x128xf32> to vector<1x1x128xf32>
    %56 = vector.broadcast %55 : vector<1x1x128xf32> to vector<16x16x128xf32>
    %57 = arith.mulf %53, %56 : vector<16x16x128xf32>
    %58 = arith.addf %52, %57 : vector<16x16x128xf32>
    %c2_40 = arith.constant 2 : index
    %c9_41 = arith.constant 9 : index
    %c0_42 = arith.constant 0 : index
    %59 = vector.load %arg16[%c2_40, %c9_41, %c0_42] : memref<18x32x128xf32, #tpu.memory_space<vmem>>, vector<16x16x128xf32>
    %60 = vector.extract_strided_slice %11 {offsets = [8, 0], sizes = [1, 128], strides = [1, 1]} : vector<9x128xf32> to vector<1x128xf32>
    %61 = vector.shape_cast %60 : vector<1x128xf32> to vector<1x1x128xf32>
    %62 = vector.broadcast %61 : vector<1x1x128xf32> to vector<16x16x128xf32>
    %63 = arith.mulf %59, %62 : vector<16x16x128xf32>
    %64 = arith.addf %58, %63 : vector<16x16x128xf32>
    %c0_43 = arith.constant 0 : index
    %c0_44 = arith.constant 0 : index
    %65 = vector.load %arg3[%c0_43, %c0_44] : memref<1x128xf32, #tpu.memory_space<vmem>>, vector<1x128xf32>
    %66 = vector.shape_cast %65 : vector<1x128xf32> to vector<1x1x128xf32>
    %67 = vector.broadcast %66 : vector<1x1x128xf32> to vector<16x16x128xf32>
    %68 = arith.addf %64, %67 : vector<16x16x128xf32>
    %cst_45 = arith.constant 0.000000e+00 : f32
    %69 = vector.broadcast %cst_45 : f32 to vector<24x8x128xf32>
    %c0_46 = arith.constant 0 : index
    %c0_47 = arith.constant 0 : index
    %c0_48 = arith.constant 0 : index
    %70 = vector.load %arg17[%c0_46, %c0_47, %c0_48] : memref<24x32x128xf32, #tpu.memory_space<vmem>>, vector<24x8x128xf32>
    tpu.vector_store %arg17[%c0_46, %c0_47, %c0_48], %69 {strides = array<i32>} : memref<24x32x128xf32, #tpu.memory_space<vmem>>, vector<24x8x128xf32>,
    %cst_49 = arith.constant 0.000000e+00 : f32
    %71 = vector.broadcast %cst_49 : f32 to vector<24x8x128xf32>
    %c0_50 = arith.constant 0 : index
    %c24_51 = arith.constant 24 : index
    %c0_52 = arith.constant 0 : index
    %72 = vector.load %arg17[%c0_50, %c24_51, %c0_52] : memref<24x32x128xf32, #tpu.memory_space<vmem>>, vector<24x8x128xf32>
    tpu.vector_store %arg17[%c0_50, %c24_51, %c0_52], %71 {strides = array<i32>} : memref<24x32x128xf32, #tpu.memory_space<vmem>>, vector<24x8x128xf32>,
    %cst_53 = arith.constant 0.000000e+00 : f32
    %73 = vector.broadcast %cst_53 : f32 to vector<4x16x128xf32>
    %c0_54 = arith.constant 0 : index
    %c8_55 = arith.constant 8 : index
    %c0_56 = arith.constant 0 : index
    %74 = vector.load %arg17[%c0_54, %c8_55, %c0_56] : memref<24x32x128xf32, #tpu.memory_space<vmem>>, vector<4x16x128xf32>
    tpu.vector_store %arg17[%c0_54, %c8_55, %c0_56], %73 {strides = array<i32>} : memref<24x32x128xf32, #tpu.memory_space<vmem>>, vector<4x16x128xf32>,
    %cst_57 = arith.constant 0.000000e+00 : f32
    %75 = vector.broadcast %cst_57 : f32 to vector<4x16x128xf32>
    %c20 = arith.constant 20 : index
    %c8_58 = arith.constant 8 : index
    %c0_59 = arith.constant 0 : index
    %76 = vector.load %arg17[%c20, %c8_58, %c0_59] : memref<24x32x128xf32, #tpu.memory_space<vmem>>, vector<4x16x128xf32>
    tpu.vector_store %arg17[%c20, %c8_58, %c0_59], %75 {strides = array<i32>} : memref<24x32x128xf32, #tpu.memory_space<vmem>>, vector<4x16x128xf32>,
    %c4 = arith.constant 4 : index
    %c8_60 = arith.constant 8 : index
    %c0_61 = arith.constant 0 : index
    %77 = vector.load %arg17[%c4, %c8_60, %c0_61] : memref<24x32x128xf32, #tpu.memory_space<vmem>>, vector<16x16x128xf32>
    tpu.vector_store %arg17[%c4, %c8_60, %c0_61], %68 {strides = array<i32>} : memref<24x32x128xf32, #tpu.memory_space<vmem>>, vector<16x16x128xf32>,
    %c0_62 = arith.constant 0 : index
    %c0_63 = arith.constant 0 : index
    %78 = vector.load %arg4[%c0_62, %c0_63] : memref<25x128xf32, #tpu.memory_space<vmem>>, vector<25x128xf32>
    %c0_64 = arith.constant 0 : index
    %c4_65 = arith.constant 4 : index
    %c0_66 = arith.constant 0 : index
    %79 = vector.load %arg17[%c0_64, %c4_65, %c0_66] : memref<24x32x128xf32, #tpu.memory_space<vmem>>, vector<16x16x128xf32>
    %80 = vector.extract_strided_slice %78 {offsets = [0, 0], sizes = [1, 128], strides = [1, 1]} : vector<25x128xf32> to vector<1x128xf32>
    %81 = vector.shape_cast %80 : vector<1x128xf32> to vector<1x1x128xf32>
    %82 = vector.broadcast %81 : vector<1x1x128xf32> to vector<16x16x128xf32>
    %83 = arith.mulf %79, %82 : vector<16x16x128xf32>
    %c0_67 = arith.constant 0 : index
    %c6 = arith.constant 6 : index
    %c0_68 = arith.constant 0 : index
    %84 = vector.load %arg17[%c0_67, %c6, %c0_68] : memref<24x32x128xf32, #tpu.memory_space<vmem>>, vector<16x16x128xf32>
    %85 = vector.extract_strided_slice %78 {offsets = [1, 0], sizes = [1, 128], strides = [1, 1]} : vector<25x128xf32> to vector<1x128xf32>
    %86 = vector.shape_cast %85 : vector<1x128xf32> to vector<1x1x128xf32>
    %87 = vector.broadcast %86 : vector<1x1x128xf32> to vector<16x16x128xf32>
    %88 = arith.mulf %84, %87 : vector<16x16x128xf32>
    %89 = arith.addf %83, %88 : vector<16x16x128xf32>
    %c0_69 = arith.constant 0 : index
    %c8_70 = arith.constant 8 : index
    %c0_71 = arith.constant 0 : index
    %90 = vector.load %arg17[%c0_69, %c8_70, %c0_71] : memref<24x32x128xf32, #tpu.memory_space<vmem>>, vector<16x16x128xf32>
    %91 = vector.extract_strided_slice %78 {offsets = [2, 0], sizes = [1, 128], strides = [1, 1]} : vector<25x128xf32> to vector<1x128xf32>
    %92 = vector.shape_cast %91 : vector<1x128xf32> to vector<1x1x128xf32>
    %93 = vector.broadcast %92 : vector<1x1x128xf32> to vector<16x16x128xf32>
    %94 = arith.mulf %90, %93 : vector<16x16x128xf32>
    %95 = arith.addf %89, %94 : vector<16x16x128xf32>
    %c0_72 = arith.constant 0 : index
    %c10 = arith.constant 10 : index
    %c0_73 = arith.constant 0 : index
    %96 = vector.load %arg17[%c0_72, %c10, %c0_73] : memref<24x32x128xf32, #tpu.memory_space<vmem>>, vector<16x16x128xf32>
    %97 = vector.extract_strided_slice %78 {offsets = [3, 0], sizes = [1, 128], strides = [1, 1]} : vector<25x128xf32> to vector<1x128xf32>
    %98 = vector.shape_cast %97 : vector<1x128xf32> to vector<1x1x128xf32>
    %99 = vector.broadcast %98 : vector<1x1x128xf32> to vector<16x16x128xf32>
    %100 = arith.mulf %96, %99 : vector<16x16x128xf32>
    %101 = arith.addf %95, %100 : vector<16x16x128xf32>
    %c0_74 = arith.constant 0 : index
    %c12 = arith.constant 12 : index
    %c0_75 = arith.constant 0 : index
    %102 = vector.load %arg17[%c0_74, %c12, %c0_75] : memref<24x32x128xf32, #tpu.memory_space<vmem>>, vector<16x16x128xf32>
    %103 = vector.extract_strided_slice %78 {offsets = [4, 0], sizes = [1, 128], strides = [1, 1]} : vector<25x128xf32> to vector<1x128xf32>
    %104 = vector.shape_cast %103 : vector<1x128xf32> to vector<1x1x128xf32>
    %105 = vector.broadcast %104 : vector<1x1x128xf32> to vector<16x16x128xf32>
    %106 = arith.mulf %102, %105 : vector<16x16x128xf32>
    %107 = arith.addf %101, %106 : vector<16x16x128xf32>
    %c2_76 = arith.constant 2 : index
    %c4_77 = arith.constant 4 : index
    %c0_78 = arith.constant 0 : index
    %108 = vector.load %arg17[%c2_76, %c4_77, %c0_78] : memref<24x32x128xf32, #tpu.memory_space<vmem>>, vector<16x16x128xf32>
    %109 = vector.extract_strided_slice %78 {offsets = [5, 0], sizes = [1, 128], strides = [1, 1]} : vector<25x128xf32> to vector<1x128xf32>
    %110 = vector.shape_cast %109 : vector<1x128xf32> to vector<1x1x128xf32>
    %111 = vector.broadcast %110 : vector<1x1x128xf32> to vector<16x16x128xf32>
    %112 = arith.mulf %108, %111 : vector<16x16x128xf32>
    %113 = arith.addf %107, %112 : vector<16x16x128xf32>
    %c2_79 = arith.constant 2 : index
    %c6_80 = arith.constant 6 : index
    %c0_81 = arith.constant 0 : index
    %114 = vector.load %arg17[%c2_79, %c6_80, %c0_81] : memref<24x32x128xf32, #tpu.memory_space<vmem>>, vector<16x16x128xf32>
    %115 = vector.extract_strided_slice %78 {offsets = [6, 0], sizes = [1, 128], strides = [1, 1]} : vector<25x128xf32> to vector<1x128xf32>
    %116 = vector.shape_cast %115 : vector<1x128xf32> to vector<1x1x128xf32>
    %117 = vector.broadcast %116 : vector<1x1x128xf32> to vector<16x16x128xf32>
    %118 = arith.mulf %114, %117 : vector<16x16x128xf32>
    %119 = arith.addf %113, %118 : vector<16x16x128xf32>
    %c2_82 = arith.constant 2 : index
    %c8_83 = arith.constant 8 : index
    %c0_84 = arith.constant 0 : index
    %120 = vector.load %arg17[%c2_82, %c8_83, %c0_84] : memref<24x32x128xf32, #tpu.memory_space<vmem>>, vector<16x16x128xf32>
    %121 = vector.extract_strided_slice %78 {offsets = [7, 0], sizes = [1, 128], strides = [1, 1]} : vector<25x128xf32> to vector<1x128xf32>
    %122 = vector.shape_cast %121 : vector<1x128xf32> to vector<1x1x128xf32>
    %123 = vector.broadcast %122 : vector<1x1x128xf32> to vector<16x16x128xf32>
    %124 = arith.mulf %120, %123 : vector<16x16x128xf32>
    %125 = arith.addf %119, %124 : vector<16x16x128xf32>
    %c2_85 = arith.constant 2 : index
    %c10_86 = arith.constant 10 : index
    %c0_87 = arith.constant 0 : index
    %126 = vector.load %arg17[%c2_85, %c10_86, %c0_87] : memref<24x32x128xf32, #tpu.memory_space<vmem>>, vector<16x16x128xf32>
    %127 = vector.extract_strided_slice %78 {offsets = [8, 0], sizes = [1, 128], strides = [1, 1]} : vector<25x128xf32> to vector<1x128xf32>
    %128 = vector.shape_cast %127 : vector<1x128xf32> to vector<1x1x128xf32>
    %129 = vector.broadcast %128 : vector<1x1x128xf32> to vector<16x16x128xf32>
    %130 = arith.mulf %126, %129 : vector<16x16x128xf32>
    %131 = arith.addf %125, %130 : vector<16x16x128xf32>
    %c2_88 = arith.constant 2 : index
    %c12_89 = arith.constant 12 : index
    %c0_90 = arith.constant 0 : index
    %132 = vector.load %arg17[%c2_88, %c12_89, %c0_90] : memref<24x32x128xf32, #tpu.memory_space<vmem>>, vector<16x16x128xf32>
    %133 = vector.extract_strided_slice %78 {offsets = [9, 0], sizes = [1, 128], strides = [1, 1]} : vector<25x128xf32> to vector<1x128xf32>
    %134 = vector.shape_cast %133 : vector<1x128xf32> to vector<1x1x128xf32>
    %135 = vector.broadcast %134 : vector<1x1x128xf32> to vector<16x16x128xf32>
    %136 = arith.mulf %132, %135 : vector<16x16x128xf32>
    %137 = arith.addf %131, %136 : vector<16x16x128xf32>
    %c4_91 = arith.constant 4 : index
    %c4_92 = arith.constant 4 : index
    %c0_93 = arith.constant 0 : index
    %138 = vector.load %arg17[%c4_91, %c4_92, %c0_93] : memref<24x32x128xf32, #tpu.memory_space<vmem>>, vector<16x16x128xf32>
    %139 = vector.extract_strided_slice %78 {offsets = [10, 0], sizes = [1, 128], strides = [1, 1]} : vector<25x128xf32> to vector<1x128xf32>
    %140 = vector.shape_cast %139 : vector<1x128xf32> to vector<1x1x128xf32>
    %141 = vector.broadcast %140 : vector<1x1x128xf32> to vector<16x16x128xf32>
    %142 = arith.mulf %138, %141 : vector<16x16x128xf32>
    %143 = arith.addf %137, %142 : vector<16x16x128xf32>
    %c4_94 = arith.constant 4 : index
    %c6_95 = arith.constant 6 : index
    %c0_96 = arith.constant 0 : index
    %144 = vector.load %arg17[%c4_94, %c6_95, %c0_96] : memref<24x32x128xf32, #tpu.memory_space<vmem>>, vector<16x16x128xf32>
    %145 = vector.extract_strided_slice %78 {offsets = [11, 0], sizes = [1, 128], strides = [1, 1]} : vector<25x128xf32> to vector<1x128xf32>
    %146 = vector.shape_cast %145 : vector<1x128xf32> to vector<1x1x128xf32>
    %147 = vector.broadcast %146 : vector<1x1x128xf32> to vector<16x16x128xf32>
    %148 = arith.mulf %144, %147 : vector<16x16x128xf32>
    %149 = arith.addf %143, %148 : vector<16x16x128xf32>
    %c4_97 = arith.constant 4 : index
    %c8_98 = arith.constant 8 : index
    %c0_99 = arith.constant 0 : index
    %150 = vector.load %arg17[%c4_97, %c8_98, %c0_99] : memref<24x32x128xf32, #tpu.memory_space<vmem>>, vector<16x16x128xf32>
    %151 = vector.extract_strided_slice %78 {offsets = [12, 0], sizes = [1, 128], strides = [1, 1]} : vector<25x128xf32> to vector<1x128xf32>
    %152 = vector.shape_cast %151 : vector<1x128xf32> to vector<1x1x128xf32>
    %153 = vector.broadcast %152 : vector<1x1x128xf32> to vector<16x16x128xf32>
    %154 = arith.mulf %150, %153 : vector<16x16x128xf32>
    %155 = arith.addf %149, %154 : vector<16x16x128xf32>
    %c4_100 = arith.constant 4 : index
    %c10_101 = arith.constant 10 : index
    %c0_102 = arith.constant 0 : index
    %156 = vector.load %arg17[%c4_100, %c10_101, %c0_102] : memref<24x32x128xf32, #tpu.memory_space<vmem>>, vector<16x16x128xf32>
    %157 = vector.extract_strided_slice %78 {offsets = [13, 0], sizes = [1, 128], strides = [1, 1]} : vector<25x128xf32> to vector<1x128xf32>
    %158 = vector.shape_cast %157 : vector<1x128xf32> to vector<1x1x128xf32>
    %159 = vector.broadcast %158 : vector<1x1x128xf32> to vector<16x16x128xf32>
    %160 = arith.mulf %156, %159 : vector<16x16x128xf32>
    %161 = arith.addf %155, %160 : vector<16x16x128xf32>
    %c4_103 = arith.constant 4 : index
    %c12_104 = arith.constant 12 : index
    %c0_105 = arith.constant 0 : index
    %162 = vector.load %arg17[%c4_103, %c12_104, %c0_105] : memref<24x32x128xf32, #tpu.memory_space<vmem>>, vector<16x16x128xf32>
    %163 = vector.extract_strided_slice %78 {offsets = [14, 0], sizes = [1, 128], strides = [1, 1]} : vector<25x128xf32> to vector<1x128xf32>
    %164 = vector.shape_cast %163 : vector<1x128xf32> to vector<1x1x128xf32>
    %165 = vector.broadcast %164 : vector<1x1x128xf32> to vector<16x16x128xf32>
    %166 = arith.mulf %162, %165 : vector<16x16x128xf32>
    %167 = arith.addf %161, %166 : vector<16x16x128xf32>
    %c6_106 = arith.constant 6 : index
    %c4_107 = arith.constant 4 : index
    %c0_108 = arith.constant 0 : index
    %168 = vector.load %arg17[%c6_106, %c4_107, %c0_108] : memref<24x32x128xf32, #tpu.memory_space<vmem>>, vector<16x16x128xf32>
    %169 = vector.extract_strided_slice %78 {offsets = [15, 0], sizes = [1, 128], strides = [1, 1]} : vector<25x128xf32> to vector<1x128xf32>
    %170 = vector.shape_cast %169 : vector<1x128xf32> to vector<1x1x128xf32>
    %171 = vector.broadcast %170 : vector<1x1x128xf32> to vector<16x16x128xf32>
    %172 = arith.mulf %168, %171 : vector<16x16x128xf32>
    %173 = arith.addf %167, %172 : vector<16x16x128xf32>
    %c6_109 = arith.constant 6 : index
    %c6_110 = arith.constant 6 : index
    %c0_111 = arith.constant 0 : index
    %174 = vector.load %arg17[%c6_109, %c6_110, %c0_111] : memref<24x32x128xf32, #tpu.memory_space<vmem>>, vector<16x16x128xf32>
    %175 = vector.extract_strided_slice %78 {offsets = [16, 0], sizes = [1, 128], strides = [1, 1]} : vector<25x128xf32> to vector<1x128xf32>
    %176 = vector.shape_cast %175 : vector<1x128xf32> to vector<1x1x128xf32>
    %177 = vector.broadcast %176 : vector<1x1x128xf32> to vector<16x16x128xf32>
    %178 = arith.mulf %174, %177 : vector<16x16x128xf32>
    %179 = arith.addf %173, %178 : vector<16x16x128xf32>
    %c6_112 = arith.constant 6 : index
    %c8_113 = arith.constant 8 : index
    %c0_114 = arith.constant 0 : index
    %180 = vector.load %arg17[%c6_112, %c8_113, %c0_114] : memref<24x32x128xf32, #tpu.memory_space<vmem>>, vector<16x16x128xf32>
    %181 = vector.extract_strided_slice %78 {offsets = [17, 0], sizes = [1, 128], strides = [1, 1]} : vector<25x128xf32> to vector<1x128xf32>
    %182 = vector.shape_cast %181 : vector<1x128xf32> to vector<1x1x128xf32>
    %183 = vector.broadcast %182 : vector<1x1x128xf32> to vector<16x16x128xf32>
    %184 = arith.mulf %180, %183 : vector<16x16x128xf32>
    %185 = arith.addf %179, %184 : vector<16x16x128xf32>
    %c6_115 = arith.constant 6 : index
    %c10_116 = arith.constant 10 : index
    %c0_117 = arith.constant 0 : index
    %186 = vector.load %arg17[%c6_115, %c10_116, %c0_117] : memref<24x32x128xf32, #tpu.memory_space<vmem>>, vector<16x16x128xf32>
    %187 = vector.extract_strided_slice %78 {offsets = [18, 0], sizes = [1, 128], strides = [1, 1]} : vector<25x128xf32> to vector<1x128xf32>
    %188 = vector.shape_cast %187 : vector<1x128xf32> to vector<1x1x128xf32>
    %189 = vector.broadcast %188 : vector<1x1x128xf32> to vector<16x16x128xf32>
    %190 = arith.mulf %186, %189 : vector<16x16x128xf32>
    %191 = arith.addf %185, %190 : vector<16x16x128xf32>
    %c6_118 = arith.constant 6 : index
    %c12_119 = arith.constant 12 : index
    %c0_120 = arith.constant 0 : index
    %192 = vector.load %arg17[%c6_118, %c12_119, %c0_120] : memref<24x32x128xf32, #tpu.memory_space<vmem>>, vector<16x16x128xf32>
    %193 = vector.extract_strided_slice %78 {offsets = [19, 0], sizes = [1, 128], strides = [1, 1]} : vector<25x128xf32> to vector<1x128xf32>
    %194 = vector.shape_cast %193 : vector<1x128xf32> to vector<1x1x128xf32>
    %195 = vector.broadcast %194 : vector<1x1x128xf32> to vector<16x16x128xf32>
    %196 = arith.mulf %192, %195 : vector<16x16x128xf32>
    %197 = arith.addf %191, %196 : vector<16x16x128xf32>
    %c8_121 = arith.constant 8 : index
    %c4_122 = arith.constant 4 : index
    %c0_123 = arith.constant 0 : index
    %198 = vector.load %arg17[%c8_121, %c4_122, %c0_123] : memref<24x32x128xf32, #tpu.memory_space<vmem>>, vector<16x16x128xf32>
    %199 = vector.extract_strided_slice %78 {offsets = [20, 0], sizes = [1, 128], strides = [1, 1]} : vector<25x128xf32> to vector<1x128xf32>
    %200 = vector.shape_cast %199 : vector<1x128xf32> to vector<1x1x128xf32>
    %201 = vector.broadcast %200 : vector<1x1x128xf32> to vector<16x16x128xf32>
    %202 = arith.mulf %198, %201 : vector<16x16x128xf32>
    %203 = arith.addf %197, %202 : vector<16x16x128xf32>
    %c8_124 = arith.constant 8 : index
    %c6_125 = arith.constant 6 : index
    %c0_126 = arith.constant 0 : index
    %204 = vector.load %arg17[%c8_124, %c6_125, %c0_126] : memref<24x32x128xf32, #tpu.memory_space<vmem>>, vector<16x16x128xf32>
    %205 = vector.extract_strided_slice %78 {offsets = [21, 0], sizes = [1, 128], strides = [1, 1]} : vector<25x128xf32> to vector<1x128xf32>
    %206 = vector.shape_cast %205 : vector<1x128xf32> to vector<1x1x128xf32>
    %207 = vector.broadcast %206 : vector<1x1x128xf32> to vector<16x16x128xf32>
    %208 = arith.mulf %204, %207 : vector<16x16x128xf32>
    %209 = arith.addf %203, %208 : vector<16x16x128xf32>
    %c8_127 = arith.constant 8 : index
    %c8_128 = arith.constant 8 : index
    %c0_129 = arith.constant 0 : index
    %210 = vector.load %arg17[%c8_127, %c8_128, %c0_129] : memref<24x32x128xf32, #tpu.memory_space<vmem>>, vector<16x16x128xf32>
    %211 = vector.extract_strided_slice %78 {offsets = [22, 0], sizes = [1, 128], strides = [1, 1]} : vector<25x128xf32> to vector<1x128xf32>
    %212 = vector.shape_cast %211 : vector<1x128xf32> to vector<1x1x128xf32>
    %213 = vector.broadcast %212 : vector<1x1x128xf32> to vector<16x16x128xf32>
    %214 = arith.mulf %210, %213 : vector<16x16x128xf32>
    %215 = arith.addf %209, %214 : vector<16x16x128xf32>
    %c8_130 = arith.constant 8 : index
    %c10_131 = arith.constant 10 : index
    %c0_132 = arith.constant 0 : index
    %216 = vector.load %arg17[%c8_130, %c10_131, %c0_132] : memref<24x32x128xf32, #tpu.memory_space<vmem>>, vector<16x16x128xf32>
    %217 = vector.extract_strided_slice %78 {offsets = [23, 0], sizes = [1, 128], strides = [1, 1]} : vector<25x128xf32> to vector<1x128xf32>
    %218 = vector.shape_cast %217 : vector<1x128xf32> to vector<1x1x128xf32>
    %219 = vector.broadcast %218 : vector<1x1x128xf32> to vector<16x16x128xf32>
    %220 = arith.mulf %216, %219 : vector<16x16x128xf32>
    %221 = arith.addf %215, %220 : vector<16x16x128xf32>
    %c8_133 = arith.constant 8 : index
    %c12_134 = arith.constant 12 : index
    %c0_135 = arith.constant 0 : index
    %222 = vector.load %arg17[%c8_133, %c12_134, %c0_135] : memref<24x32x128xf32, #tpu.memory_space<vmem>>, vector<16x16x128xf32>
    %223 = vector.extract_strided_slice %78 {offsets = [24, 0], sizes = [1, 128], strides = [1, 1]} : vector<25x128xf32> to vector<1x128xf32>
    %224 = vector.shape_cast %223 : vector<1x128xf32> to vector<1x1x128xf32>
    %225 = vector.broadcast %224 : vector<1x1x128xf32> to vector<16x16x128xf32>
    %226 = arith.mulf %222, %225 : vector<16x16x128xf32>
    %227 = arith.addf %221, %226 : vector<16x16x128xf32>
    %c0_136 = arith.constant 0 : index
    %c0_137 = arith.constant 0 : index
    %228 = vector.load %arg5[%c0_136, %c0_137] : memref<1x128xf32, #tpu.memory_space<vmem>>, vector<1x128xf32>
    %229 = vector.shape_cast %228 : vector<1x128xf32> to vector<1x1x128xf32>
    %230 = vector.broadcast %229 : vector<1x1x128xf32> to vector<16x16x128xf32>
    %231 = arith.addf %227, %230 : vector<16x16x128xf32>
    %232 = vector.shape_cast %68 : vector<16x16x128xf32> to vector<256x128xf32>
    %233 = arith.truncf %232 : vector<256x128xf32> to vector<256x128xbf16>
    %234 = vector.shape_cast %231 : vector<16x16x128xf32> to vector<256x128xf32>
    %235 = arith.truncf %234 : vector<256x128xf32> to vector<256x128xbf16>
    %c0_138 = arith.constant 0 : index
    %c0_139 = arith.constant 0 : index
    %236 = vector.load %arg6[%c0_138, %c0_139] : memref<128x128xbf16, #tpu.memory_space<vmem>>, vector<128x128xbf16>
    %cst_140 = arith.constant dense<0.000000e+00> : vector<256x128xf32>
    %237 = tpu.matmul %233, %236, %cst_140 {dimension_numbers = #tpu.dot_dimension_numbers<[1], [0], [0], [1], [0, 0, 1, 1], [], []>} : vector<256x128xbf16>, vector<128x128xbf16>, vector<256x128xf32> -> vector<256x128xf32>
    %c0_141 = arith.constant 0 : index
    %c0_142 = arith.constant 0 : index
    %238 = vector.load %arg7[%c0_141, %c0_142] : memref<128x128xbf16, #tpu.memory_space<vmem>>, vector<128x128xbf16>
    %cst_143 = arith.constant dense<0.000000e+00> : vector<256x128xf32>
    %239 = tpu.matmul %235, %238, %cst_143 {dimension_numbers = #tpu.dot_dimension_numbers<[1], [0], [0], [1], [0, 0, 1, 1], [], []>} : vector<256x128xbf16>, vector<128x128xbf16>, vector<256x128xf32> -> vector<256x128xf32>
    %240 = arith.addf %237, %239 : vector<256x128xf32>
    %c0_144 = arith.constant 0 : index
    %c0_145 = arith.constant 0 : index
    %241 = vector.load %arg8[%c0_144, %c0_145] : memref<1x128xf32, #tpu.memory_space<vmem>>, vector<1x128xf32>
    %242 = vector.broadcast %241 : vector<1x128xf32> to vector<256x128xf32>
    %243 = arith.addf %240, %242 : vector<256x128xf32>
    %244 = arith.truncf %243 : vector<256x128xf32> to vector<256x128xbf16>
    %c0_146 = arith.constant 0 : index
    %c0_147 = arith.constant 0 : index
    %245 = vector.load %arg9[%c0_146, %c0_147] : memref<128x128xbf16, #tpu.memory_space<vmem>>, vector<128x128xbf16>
    %cst_148 = arith.constant dense<0.000000e+00> : vector<256x128xf32>
    %246 = tpu.matmul %244, %245, %cst_148 {dimension_numbers = #tpu.dot_dimension_numbers<[1], [0], [0], [1], [0, 0, 1, 1], [], []>} : vector<256x128xbf16>, vector<128x128xbf16>, vector<256x128xf32> -> vector<256x128xf32>
    %cst_149 = arith.constant dense<0.000000e+00> : vector<128xf32>
    %247 = vector.multi_reduction <add>, %243, %cst_149 [0] : vector<256x128xf32> to vector<128xf32>
    %248 = vector.shape_cast %247 : vector<128xf32> to vector<1x128xf32>
    %cst_150 = arith.constant 2.560000e+02 : f32
    %249 = vector.broadcast %cst_150 : f32 to vector<1x128xf32>
    %250 = arith.divf %248, %249 : vector<1x128xf32>
    %251 = arith.truncf %250 : vector<1x128xf32> to vector<1x128xbf16>
    %c0_151 = arith.constant 0 : index
    %c0_152 = arith.constant 0 : index
    %252 = vector.load %arg10[%c0_151, %c0_152] : memref<128x64xbf16, #tpu.memory_space<vmem>>, vector<128x64xbf16>
    %cst_153 = arith.constant dense<0.000000e+00> : vector<1x64xf32>
    %253 = tpu.matmul %251, %252, %cst_153 {dimension_numbers = #tpu.dot_dimension_numbers<[1], [0], [0], [1], [0, 0, 1, 1], [], []>} : vector<1x128xbf16>, vector<128x64xbf16>, vector<1x64xf32> -> vector<1x64xf32>
    %c0_154 = arith.constant 0 : index
    %c0_155 = arith.constant 0 : index
    %254 = vector.load %arg11[%c0_154, %c0_155] : memref<1x64xf32, #tpu.memory_space<vmem>>, vector<1x64xf32>
    %255 = arith.addf %253, %254 : vector<1x64xf32>
    %cst_156 = arith.constant 0.000000e+00 : f32
    %256 = vector.broadcast %cst_156 : f32 to vector<1x64xf32>
    %257 = arith.maximumf %255, %256 : vector<1x64xf32>
    %258 = arith.truncf %257 : vector<1x64xf32> to vector<1x64xbf16>
    %c0_157 = arith.constant 0 : index
    %c0_158 = arith.constant 0 : index
    %259 = vector.load %arg12[%c0_157, %c0_158] : memref<64x128xbf16, #tpu.memory_space<vmem>>, vector<64x128xbf16>
    %cst_159 = arith.constant dense<0.000000e+00> : vector<1x128xf32>
    %260 = tpu.matmul %258, %259, %cst_159 {dimension_numbers = #tpu.dot_dimension_numbers<[1], [0], [0], [1], [0, 0, 1, 1], [], []>} : vector<1x64xbf16>, vector<64x128xbf16>, vector<1x128xf32> -> vector<1x128xf32>
    %261 = arith.negf %260 : vector<1x128xf32>
    %262 = math.exp %261 : vector<1x128xf32>
    %cst_160 = arith.constant 1.000000e+00 : f32
    %263 = vector.broadcast %cst_160 : f32 to vector<1x128xf32>
    %264 = arith.addf %263, %262 : vector<1x128xf32>
    %265 = arith.divf %263, %264 : vector<1x128xf32>
    %266 = vector.broadcast %265 : vector<1x128xf32> to vector<256x128xf32>
    %267 = arith.mulf %243, %266 : vector<256x128xf32>
    %268 = arith.mulf %267, %246 : vector<256x128xf32>
    %269 = arith.truncf %268 : vector<256x128xf32> to vector<256x128xbf16>
    %c0_161 = arith.constant 0 : index
    %c0_162 = arith.constant 0 : index
    %270 = vector.load %arg13[%c0_161, %c0_162] : memref<128x128xbf16, #tpu.memory_space<vmem>>, vector<128x128xbf16>
    %cst_163 = arith.constant dense<0.000000e+00> : vector<256x128xf32>
    %271 = tpu.matmul %269, %270, %cst_163 {dimension_numbers = #tpu.dot_dimension_numbers<[1], [0], [0], [1], [0, 0, 1, 1], [], []>} : vector<256x128xbf16>, vector<128x128xbf16>, vector<256x128xf32> -> vector<256x128xf32>
    %c0_164 = arith.constant 0 : index
    %c0_165 = arith.constant 0 : index
    %272 = vector.load %arg14[%c0_164, %c0_165] : memref<1x128xf32, #tpu.memory_space<vmem>>, vector<1x128xf32>
    %273 = vector.broadcast %272 : vector<1x128xf32> to vector<256x128xf32>
    %274 = arith.addf %271, %273 : vector<256x128xf32>
    %275 = arith.negf %274 : vector<256x128xf32>
    %276 = math.exp %275 : vector<256x128xf32>
    %cst_166 = arith.constant 1.000000e+00 : f32
    %277 = vector.broadcast %cst_166 : f32 to vector<256x128xf32>
    %278 = arith.addf %277, %276 : vector<256x128xf32>
    %279 = arith.divf %277, %278 : vector<256x128xf32>
    %280 = vector.shape_cast %279 : vector<256x128xf32> to vector<16x16x128xf32>
    %281 = arith.mulf %1, %280 : vector<16x16x128xf32>
    %c0_167 = arith.constant 0 : index
    %c0_168 = arith.constant 0 : index
    %c0_169 = arith.constant 0 : index
    %c0_170 = arith.constant 0 : index
    %282 = vector.load %arg15[%c0_167, %c0_168, %c0_169, %c0_170] : memref<1x16x16x128xf32, #tpu.memory_space<vmem>>, vector<1x16x16x128xf32>
    %283 = vector.shape_cast %282 : vector<1x16x16x128xf32> to vector<16x16x128xf32>
    %284 = vector.shape_cast %281 : vector<16x16x128xf32> to vector<1x16x16x128xf32>
    tpu.vector_store %arg15[%c0_167, %c0_168, %c0_169, %c0_170], %284 {strides = array<i32>} : memref<1x16x16x128xf32, #tpu.memory_space<vmem>>, vector<1x16x16x128xf32>,
    return
  }
  func.func @transform_0(%arg0: i32) -> (i32, i32, i32, i32) {
    %c0_i32 = arith.constant 0 : i32
    %c0_i32_0 = arith.constant 0 : i32
    %c0_i32_1 = arith.constant 0 : i32
    %c0_i32_2 = arith.constant 0 : i32
    return %arg0, %c0_i32, %c0_i32_0, %c0_i32_1 : i32, i32, i32, i32
  }
  func.func @transform_1(%arg0: i32) -> (i32, i32) {
    %c0_i32 = arith.constant 0 : i32
    %c0_i32_0 = arith.constant 0 : i32
    %c0_i32_1 = arith.constant 0 : i32
    return %c0_i32, %c0_i32_0 : i32, i32
  }
  func.func @transform_2(%arg0: i32) -> (i32, i32) {
    %c0_i32 = arith.constant 0 : i32
    %c0_i32_0 = arith.constant 0 : i32
    %c0_i32_1 = arith.constant 0 : i32
    return %c0_i32, %c0_i32_0 : i32, i32
  }
  func.func @transform_3(%arg0: i32) -> (i32, i32) {
    %c0_i32 = arith.constant 0 : i32
    %c0_i32_0 = arith.constant 0 : i32
    %c0_i32_1 = arith.constant 0 : i32
    return %c0_i32, %c0_i32_0 : i32, i32
  }
  func.func @transform_4(%arg0: i32) -> (i32, i32) {
    %c0_i32 = arith.constant 0 : i32
    %c0_i32_0 = arith.constant 0 : i32
    %c0_i32_1 = arith.constant 0 : i32
    return %c0_i32, %c0_i32_0 : i32, i32
  }
  func.func @transform_5(%arg0: i32) -> (i32, i32) {
    %c0_i32 = arith.constant 0 : i32
    %c0_i32_0 = arith.constant 0 : i32
    %c0_i32_1 = arith.constant 0 : i32
    return %c0_i32, %c0_i32_0 : i32, i32
  }
  func.func @transform_6(%arg0: i32) -> (i32, i32) {
    %c0_i32 = arith.constant 0 : i32
    %c0_i32_0 = arith.constant 0 : i32
    %c0_i32_1 = arith.constant 0 : i32
    return %c0_i32, %c0_i32_0 : i32, i32
  }
  func.func @transform_7(%arg0: i32) -> (i32, i32) {
    %c0_i32 = arith.constant 0 : i32
    %c0_i32_0 = arith.constant 0 : i32
    %c0_i32_1 = arith.constant 0 : i32
    return %c0_i32, %c0_i32_0 : i32, i32
  }
  func.func @transform_8(%arg0: i32) -> (i32, i32) {
    %c0_i32 = arith.constant 0 : i32
    %c0_i32_0 = arith.constant 0 : i32
    %c0_i32_1 = arith.constant 0 : i32
    return %c0_i32, %c0_i32_0 : i32, i32
  }
  func.func @transform_9(%arg0: i32) -> (i32, i32) {
    %c0_i32 = arith.constant 0 : i32
    %c0_i32_0 = arith.constant 0 : i32
    %c0_i32_1 = arith.constant 0 : i32
    return %c0_i32, %c0_i32_0 : i32, i32
  }
  func.func @transform_10(%arg0: i32) -> (i32, i32) {
    %c0_i32 = arith.constant 0 : i32
    %c0_i32_0 = arith.constant 0 : i32
    %c0_i32_1 = arith.constant 0 : i32
    return %c0_i32, %c0_i32_0 : i32, i32
  }
  func.func @transform_11(%arg0: i32) -> (i32, i32) {
    %c0_i32 = arith.constant 0 : i32
    %c0_i32_0 = arith.constant 0 : i32
    %c0_i32_1 = arith.constant 0 : i32
    return %c0_i32, %c0_i32_0 : i32, i32
  }
  func.func @transform_12(%arg0: i32) -> (i32, i32) {
    %c0_i32 = arith.constant 0 : i32
    %c0_i32_0 = arith.constant 0 : i32
    %c0_i32_1 = arith.constant 0 : i32
    return %c0_i32, %c0_i32_0 : i32, i32
  }
  func.func @transform_13(%arg0: i32) -> (i32, i32) {
    %c0_i32 = arith.constant 0 : i32
    %c0_i32_0 = arith.constant 0 : i32
    %c0_i32_1 = arith.constant 0 : i32
    return %c0_i32, %c0_i32_0 : i32, i32
  }
  func.func @transform_14(%arg0: i32) -> (i32, i32, i32, i32) {
    %c0_i32 = arith.constant 0 : i32
    %c0_i32_0 = arith.constant 0 : i32
    %c0_i32_1 = arith.constant 0 : i32
    %c0_i32_2 = arith.constant 0 : i32
    return %arg0, %c0_i32, %c0_i32_0, %c0_i32_1 : i32, i32, i32, i32
  }
}

</mosaic_0001>

<llo_original>
// kernel: ksfa_forward.1
$region0: #{ksfa_forward.1}
  #allocation0 [shape = 'u32[]', space=smem, size = 0x4, offset = 0x4, fixed_abs, tag = 'smem constant byte address 0x4 - core index']
  #allocation1 [shape = 'u32[144,128]{1,0:T(1,128)}', space=vmem, size = 0x12000, scoped, tag = 'internal scratch']
  #allocation2 [shape = 'f32[18,32,128]{2,1,0:T(8,128)}', space=vmem, size = 0x48000, scoped, tag = 'scratch operand']
  #allocation3 [shape = 'f32[24,32,128]{2,1,0:T(8,128)}', space=vmem, size = 0x60000, scoped, tag = 'scratch operand']
  %s0 = inlined_call_operand.vmem [shape: f32[1,16,16,128], index: 0, kind: input, shape index: {}]
  %s1 = inlined_call_operand.vmem [shape: f32[9,128], index: 1, kind: input, shape index: {}]
  %s2 = inlined_call_operand.vmem [shape: f32[1,128], index: 2, kind: input, shape index: {}]
  %s3 = inlined_call_operand.vmem [shape: f32[25,128], index: 3, kind: input, shape index: {}]
  %s4 = inlined_call_operand.vmem [shape: f32[1,128], index: 4, kind: input, shape index: {}]
  %s5 = inlined_call_operand.vmem [shape: bf16[128,128], index: 5, kind: input, shape index: {}]
  %s6 = inlined_call_operand.vmem [shape: bf16[128,128], index: 6, kind: input, shape index: {}]
  %s7 = inlined_call_operand.vmem [shape: f32[1,128], index: 7, kind: input, shape index: {}]
  %s8 = inlined_call_operand.vmem [shape: bf16[128,128], index: 8, kind: input, shape index: {}]
  %s9 = inlined_call_operand.vmem [shape: bf16[128,64], index: 9, kind: input, shape index: {}]
  %s10 = inlined_call_operand.vmem [shape: f32[1,64], index: 10, kind: input, shape index: {}]
  %s11 = inlined_call_operand.vmem [shape: bf16[64,128], index: 11, kind: input, shape index: {}]
  %s12 = inlined_call_operand.vmem [shape: bf16[128,128], index: 12, kind: input, shape index: {}]
  %s13 = inlined_call_operand.vmem [shape: f32[1,128], index: 13, kind: input, shape index: {}]
  %s14 = inlined_call_operand.vmem [shape: f32[1,16,16,128], index: 14, kind: output, shape index: {}]
  %s15 = sld [smem:[#allocation0]]
  $region66: #{ksfa_forward.1} parent=0
    _
  %s17 = ssub.s32 1, %s15
  %s18 = scalar_select 0, %s17, %s15
  // Predicated region
  $region2: #{ksfa_forward.1} parent=0 // pred_check
    _
  $region3: #{ksfa_forward.1} parent=0 // pred_check_branch
    %20 = sbr.rel (0) target = $region5
  $region4: #{ksfa_forward.1} parent=0 // pred_region
    _
  $region5: #{ksfa_forward.1} parent=0 // pred_fallthru
    _
  // Predicated region
  $region6: #{ksfa_forward.1} parent=0 // pred_check
    _
  $region7: #{ksfa_forward.1} parent=0 // pred_check_branch
    %22 = sbr.rel (0) target = $region9
  $region8: #{ksfa_forward.1} parent=0 // pred_region
    _
  $region9: #{ksfa_forward.1} parent=0 // pred_fallthru
    _
  // Predicated region
  $region10: #{ksfa_forward.1} parent=0 // pred_check
    _
  $region11: #{ksfa_forward.1} parent=0 // pred_check_branch
    %24 = sbr.rel (0) target = $region13
  $region12: #{ksfa_forward.1} parent=0 // pred_region
    _
  $region13: #{ksfa_forward.1} parent=0 // pred_fallthru
    _
  // Predicated region
  $region14: #{ksfa_forward.1} parent=0 // pred_check
    _
  $region15: #{ksfa_forward.1} parent=0 // pred_check_branch
    %26 = sbr.rel (0) target = $region17
  $region16: #{ksfa_forward.1} parent=0 // pred_region
    _
  $region17: #{ksfa_forward.1} parent=0 // pred_fallthru
    _
  // Predicated region
  $region18: #{ksfa_forward.1} parent=0 // pred_check
    _
  $region19: #{ksfa_forward.1} parent=0 // pred_check_branch
    %28 = sbr.rel (0) target = $region21
  $region20: #{ksfa_forward.1} parent=0 // pred_region
    _
  $region21: #{ksfa_forward.1} parent=0 // pred_fallthru
    _
  // Predicated region
  $region22: #{ksfa_forward.1} parent=0 // pred_check
    _
  $region23: #{ksfa_forward.1} parent=0 // pred_check_branch
    %30 = sbr.rel (0) target = $region25
  $region24: #{ksfa_forward.1} parent=0 // pred_region
    _
  $region25: #{ksfa_forward.1} parent=0 // pred_fallthru
    _
  // Predicated region
  $region26: #{ksfa_forward.1} parent=0 // pred_check
    _
  $region27: #{ksfa_forward.1} parent=0 // pred_check_branch
    %32 = sbr.rel (0) target = $region29
  $region28: #{ksfa_forward.1} parent=0 // pred_region
    _
  $region29: #{ksfa_forward.1} parent=0 // pred_fallthru
    _
  // Predicated region
  $region30: #{ksfa_forward.1} parent=0 // pred_check
    _
  $region31: #{ksfa_forward.1} parent=0 // pred_check_branch
    %34 = sbr.rel (0) target = $region33
  $region32: #{ksfa_forward.1} parent=0 // pred_region
    _
  $region33: #{ksfa_forward.1} parent=0 // pred_fallthru
    _
  // Predicated region
  $region34: #{ksfa_forward.1} parent=0 // pred_check
    _
  $region35: #{ksfa_forward.1} parent=0 // pred_check_branch
    %36 = sbr.rel (0) target = $region37
  $region36: #{ksfa_forward.1} parent=0 // pred_region
    _
  $region37: #{ksfa_forward.1} parent=0 // pred_fallthru
    _
  // Predicated region
  $region38: #{ksfa_forward.1} parent=0 // pred_check
    _
  $region39: #{ksfa_forward.1} parent=0 // pred_check_branch
    %38 = sbr.rel (0) target = $region41
  $region40: #{ksfa_forward.1} parent=0 // pred_region
    _
  $region41: #{ksfa_forward.1} parent=0 // pred_fallthru
    _
  // Predicated region
  $region42: #{ksfa_forward.1} parent=0 // pred_check
    _
  $region43: #{ksfa_forward.1} parent=0 // pred_check_branch
    %40 = sbr.rel (0) target = $region45
  $region44: #{ksfa_forward.1} parent=0 // pred_region
    _
  $region45: #{ksfa_forward.1} parent=0 // pred_fallthru
    _
  // Predicated region
  $region46: #{ksfa_forward.1} parent=0 // pred_check
    _
  $region47: #{ksfa_forward.1} parent=0 // pred_check_branch
    %42 = sbr.rel (0) target = $region49
  $region48: #{ksfa_forward.1} parent=0 // pred_region
    _
  $region49: #{ksfa_forward.1} parent=0 // pred_fallthru
    _
  // Predicated region
  $region50: #{ksfa_forward.1} parent=0 // pred_check
    _
  $region51: #{ksfa_forward.1} parent=0 // pred_check_branch
    %44 = sbr.rel (0) target = $region53
  $region52: #{ksfa_forward.1} parent=0 // pred_region
    _
  $region53: #{ksfa_forward.1} parent=0 // pred_fallthru
    _
  // Predicated region
  $region54: #{ksfa_forward.1} parent=0 // pred_check
    _
  $region55: #{ksfa_forward.1} parent=0 // pred_check_branch
    %46 = sbr.rel (0) target = $region57
  $region56: #{ksfa_forward.1} parent=0 // pred_region
    _
  $region57: #{ksfa_forward.1} parent=0 // pred_fallthru
    _
  %v48 = vld [vmem:[%s0] sm:$0xff]
  %v49 = vld [vmem:[%s0 + $0x8] sm:$0xff]
  %v50 = vld [vmem:[%s0 + $0x10] sm:$0xff]
  %v51 = vld [vmem:[%s0 + $0x18] sm:$0xff]
  %v52 = vld [vmem:[%s0 + $0x20] sm:$0xff]
  %v53 = vld [vmem:[%s0 + $0x28] sm:$0xff]
  %v54 = vld [vmem:[%s0 + $0x30] sm:$0xff]
  %v55 = vld [vmem:[%s0 + $0x38] sm:$0xff]
  %v56 = vld [vmem:[%s0 + $0x40] sm:$0xff]
  %v57 = vld [vmem:[%s0 + $0x48] sm:$0xff]
  %v58 = vld [vmem:[%s0 + $0x50] sm:$0xff]
  %v59 = vld [vmem:[%s0 + $0x58] sm:$0xff]
  %v60 = vld [vmem:[%s0 + $0x60] sm:$0xff]
  %v61 = vld [vmem:[%s0 + $0x68] sm:$0xff]
  %v62 = vld [vmem:[%s0 + $0x70] sm:$0xff]
  %v63 = vld [vmem:[%s0 + $0x78] sm:$0xff]
  %v64 = vld [vmem:[%s0 + $0x80] sm:$0xff]
  %v65 = vld [vmem:[%s0 + $0x88] sm:$0xff]
  %v66 = vld [vmem:[%s0 + $0x90] sm:$0xff]
  %v67 = vld [vmem:[%s0 + $0x98] sm:$0xff]
  %v68 = vld [vmem:[%s0 + $0xa0] sm:$0xff]
  %v69 = vld [vmem:[%s0 + $0xa8] sm:$0xff]
  %v70 = vld [vmem:[%s0 + $0xb0] sm:$0xff]
  %v71 = vld [vmem:[%s0 + $0xb8] sm:$0xff]
  %v72 = vld [vmem:[%s0 + $0xc0] sm:$0xff]
  %v73 = vld [vmem:[%s0 + $0xc8] sm:$0xff]
  %v74 = vld [vmem:[%s0 + $0xd0] sm:$0xff]
  %v75 = vld [vmem:[%s0 + $0xd8] sm:$0xff]
  %v76 = vld [vmem:[%s0 + $0xe0] sm:$0xff]
  %v77 = vld [vmem:[%s0 + $0xe8] sm:$0xff]
  %v78 = vld [vmem:[%s0 + $0xf0] sm:$0xff]
  %v79 = vld [vmem:[%s0 + $0xf8] sm:$0xff]
  %80 = vst [vmem:[#allocation2] sm:$0xff] 0.0
  %81 = vst [vmem:[#allocation2 + $0x20] sm:$0xff] 0.0
  %82 = vst [vmem:[#allocation2 + $0x40] sm:$0xff] 0.0
  %83 = vst [vmem:[#allocation2 + $0x60] sm:$0xff] 0.0
  %84 = vst [vmem:[#allocation2 + $0x80] sm:$0xff] 0.0
  %85 = vst [vmem:[#allocation2 + $0xa0] sm:$0xff] 0.0
  %86 = vst [vmem:[#allocation2 + $0xc0] sm:$0xff] 0.0
  %87 = vst [vmem:[#allocation2 + $0xe0] sm:$0xff] 0.0
  %88 = vst [vmem:[#allocation2 + $0x100] sm:$0xff] 0.0
  %89 = vst [vmem:[#allocation2 + $0x120] sm:$0xff] 0.0
  %90 = vst [vmem:[#allocation2 + $0x140] sm:$0xff] 0.0
  %91 = vst [vmem:[#allocation2 + $0x160] sm:$0xff] 0.0
  %92 = vst [vmem:[#allocation2 + $0x180] sm:$0xff] 0.0
  %93 = vst [vmem:[#allocation2 + $0x1a0] sm:$0xff] 0.0
  %94 = vst [vmem:[#allocation2 + $0x1c0] sm:$0xff] 0.0
  %95 = vst [vmem:[#allocation2 + $0x1e0] sm:$0xff] 0.0
  %96 = vst [vmem:[#allocation2 + $0x200] sm:$0xff] 0.0
  %97 = vst [vmem:[#allocation2 + $0x220] sm:$0xff] 0.0
  %98 = vst [vmem:[#allocation2 + $0x18] sm:$0xff] 0.0
  %99 = vst [vmem:[#allocation2 + $0x38] sm:$0xff] 0.0
  %100 = vst [vmem:[#allocation2 + $0x58] sm:$0xff] 0.0
  %101 = vst [vmem:[#allocation2 + $0x78] sm:$0xff] 0.0
  %102 = vst [vmem:[#allocation2 + $0x98] sm:$0xff] 0.0
  %103 = vst [vmem:[#allocation2 + $0xb8] sm:$0xff] 0.0
  %104 = vst [vmem:[#allocation2 + $0xd8] sm:$0xff] 0.0
  %105 = vst [vmem:[#allocation2 + $0xf8] sm:$0xff] 0.0
  %106 = vst [vmem:[#allocation2 + $0x118] sm:$0xff] 0.0
  %107 = vst [vmem:[#allocation2 + $0x138] sm:$0xff] 0.0
  %108 = vst [vmem:[#allocation2 + $0x158] sm:$0xff] 0.0
  %109 = vst [vmem:[#allocation2 + $0x178] sm:$0xff] 0.0
  %110 = vst [vmem:[#allocation2 + $0x198] sm:$0xff] 0.0
  %111 = vst [vmem:[#allocation2 + $0x1b8] sm:$0xff] 0.0
  %112 = vst [vmem:[#allocation2 + $0x1d8] sm:$0xff] 0.0
  %113 = vst [vmem:[#allocation2 + $0x1f8] sm:$0xff] 0.0
  %114 = vst [vmem:[#allocation2 + $0x218] sm:$0xff] 0.0
  %115 = vst [vmem:[#allocation2 + $0x238] sm:$0xff] 0.0
  %116 = vst [vmem:[#allocation2 + $0x8] sm:$0xff] 0.0
  %117 = vst [vmem:[#allocation2 + $0x10] sm:$0xff] 0.0
  %s118 = scalar_lea.vmem [#allocation2], 544
  %119 = vst [vmem:[%s118 + $0x8] sm:$0xff] 0.0
  %120 = vst [vmem:[%s118 + $0x10] sm:$0xff] 0.0
  %s121 = scalar_lea.vmem [#allocation2], 32
  %122 = vst [vmem:[%s121 + $0x8] sm:$0xff] %v48
  %123 = vst [vmem:[%s121 + $0x10] sm:$0xff] %v49
  %124 = vst [vmem:[%s121 + $0x28] sm:$0xff] %v50
  %125 = vst [vmem:[%s121 + $0x30] sm:$0xff] %v51
  %126 = vst [vmem:[%s121 + $0x48] sm:$0xff] %v52
  %127 = vst [vmem:[%s121 + $0x50] sm:$0xff] %v53
  %128 = vst [vmem:[%s121 + $0x68] sm:$0xff] %v54
  %129 = vst [vmem:[%s121 + $0x70] sm:$0xff] %v55
  %130 = vst [vmem:[%s121 + $0x88] sm:$0xff] %v56
  %131 = vst [vmem:[%s121 + $0x90] sm:$0xff] %v57
  %132 = vst [vmem:[%s121 + $0xa8] sm:$0xff] %v58
  %133 = vst [vmem:[%s121 + $0xb0] sm:$0xff] %v59
  %134 = vst [vmem:[%s121 + $0xc8] sm:$0xff] %v60
  %135 = vst [vmem:[%s121 + $0xd0] sm:$0xff] %v61
  %136 = vst [vmem:[%s121 + $0xe8] sm:$0xff] %v62
  %137 = vst [vmem:[%s121 + $0xf0] sm:$0xff] %v63
  %138 = vst [vmem:[%s121 + $0x108] sm:$0xff] %v64
  %139 = vst [vmem:[%s121 + $0x110] sm:$0xff] %v65
  %140 = vst [vmem:[%s121 + $0x128] sm:$0xff] %v66
  %141 = vst [vmem:[%s121 + $0x130] sm:$0xff] %v67
  %142 = vst [vmem:[%s121 + $0x148] sm:$0xff] %v68
  %143 = vst [vmem:[%s121 + $0x150] sm:$0xff] %v69
  %144 = vst [vmem:[%s121 + $0x168] sm:$0xff] %v70
  %145 = vst [vmem:[%s121 + $0x170] sm:$0xff] %v71
  %146 = vst [vmem:[%s121 + $0x188] sm:$0xff] %v72
  %147 = vst [vmem:[%s121 + $0x190] sm:$0xff] %v73
  %148 = vst [vmem:[%s121 + $0x1a8] sm:$0xff] %v74
  %149 = vst [vmem:[%s121 + $0x1b0] sm:$0xff] %v75
  %150 = vst [vmem:[%s121 + $0x1c8] sm:$0xff] %v76
  %151 = vst [vmem:[%s121 + $0x1d0] sm:$0xff] %v77
  %152 = vst [vmem:[%s121 + $0x1e8] sm:$0xff] %v78
  %153 = vst [vmem:[%s121 + $0x1f0] sm:$0xff] %v79
  %v154 = vld [vmem:[%s1] sm:$0xff]
  %v155 = vld [vmem:[%s1 + $0x8] sm:$0x1]
  %v156 = vld [vmem:[#allocation2 + $0x7] sm:$0xff]
  %v157 = vld [vmem:[#allocation2 + $0xf] sm:$0xff]
  %v158 = vld [vmem:[#allocation2 + $0x27] sm:$0xff]
  %v159 = vld [vmem:[#allocation2 + $0x2f] sm:$0xff]
  %v160 = vld [vmem:[#allocation2 + $0x47] sm:$0xff]
  %v161 = vld [vmem:[#allocation2 + $0x4f] sm:$0xff]
  %v162 = vld [vmem:[#allocation2 + $0x67] sm:$0xff]
  %v163 = vld [vmem:[#allocation2 + $0x6f] sm:$0xff]
  %v164 = vld [vmem:[#allocation2 + $0x87] sm:$0xff]
  %v165 = vld [vmem:[#allocation2 + $0x8f] sm:$0xff]
  %v166 = vld [vmem:[#allocation2 + $0xa7] sm:$0xff]
  %v167 = vld [vmem:[#allocation2 + $0xaf] sm:$0xff]
  %v168 = vld [vmem:[#allocation2 + $0xc7] sm:$0xff]
  %v169 = vld [vmem:[#allocation2 + $0xcf] sm:$0xff]
  %v170 = vld [vmem:[#allocation2 + $0xe7] sm:$0xff]
  %v171 = vld [vmem:[#allocation2 + $0xef] sm:$0xff]
  %v172 = vld [vmem:[#allocation2 + $0x107] sm:$0xff]
  %v173 = vld [vmem:[#allocation2 + $0x10f] sm:$0xff]
  %v174 = vld [vmem:[#allocation2 + $0x127] sm:$0xff]
  %v175 = vld [vmem:[#allocation2 + $0x12f] sm:$0xff]
  %v176 = vld [vmem:[#allocation2 + $0x147] sm:$0xff]
  %v177 = vld [vmem:[#allocation2 + $0x14f] sm:$0xff]
  %v178 = vld [vmem:[#allocation2 + $0x167] sm:$0xff]
  %v179 = vld [vmem:[#allocation2 + $0x16f] sm:$0xff]
  %v180 = vld [vmem:[#allocation2 + $0x187] sm:$0xff]
  %v181 = vld [vmem:[#allocation2 + $0x18f] sm:$0xff]
  %v182 = vld [vmem:[#allocation2 + $0x1a7] sm:$0xff]
  %v183 = vld [vmem:[#allocation2 + $0x1af] sm:$0xff]
  %v184 = vld [vmem:[#allocation2 + $0x1c7] sm:$0xff]
  %v185 = vld [vmem:[#allocation2 + $0x1cf] sm:$0xff]
  %v186 = vld [vmem:[#allocation2 + $0x1e7] sm:$0xff]
  %v187 = vld [vmem:[#allocation2 + $0x1ef] sm:$0xff]
  %v188 = vlaneseq
  %v189 = vshrl.u32 %v188, 7
  %v190 = vsub.s32 0, %v189
  %v191 = vrot.slane %v154, %v190
  %v192 = vmul.f32 %v156, %v191
  %v193 = vmul.f32 %v157, %v191
  %v194 = vmul.f32 %v158, %v191
  %v195 = vmul.f32 %v159, %v191
  %v196 = vmul.f32 %v160, %v191
  %v197 = vmul.f32 %v161, %v191
  %v198 = vmul.f32 %v162, %v191
  %v199 = vmul.f32 %v163, %v191
  %v200 = vmul.f32 %v164, %v191
  %v201 = vmul.f32 %v165, %v191
  %v202 = vmul.f32 %v166, %v191
  %v203 = vmul.f32 %v167, %v191
  %v204 = vmul.f32 %v168, %v191
  %v205 = vmul.f32 %v169, %v191
  %v206 = vmul.f32 %v170, %v191
  %v207 = vmul.f32 %v171, %v191
  %v208 = vmul.f32 %v172, %v191
  %v209 = vmul.f32 %v173, %v191
  %v210 = vmul.f32 %v174, %v191
  %v211 = vmul.f32 %v175, %v191
  %v212 = vmul.f32 %v176, %v191
  %v213 = vmul.f32 %v177, %v191
  %v214 = vmul.f32 %v178, %v191
  %v215 = vmul.f32 %v179, %v191
  %v216 = vmul.f32 %v180, %v191
  %v217 = vmul.f32 %v181, %v191
  %v218 = vmul.f32 %v182, %v191
  %v219 = vmul.f32 %v183, %v191
  %v220 = vmul.f32 %v184, %v191
  %v221 = vmul.f32 %v185, %v191
  %v222 = vmul.f32 %v186, %v191
  %v223 = vmul.f32 %v187, %v191
  %v224 = vld [vmem:[#allocation2 + $0x8] sm:$0xff]
  %v225 = vld [vmem:[#allocation2 + $0x10] sm:$0xff]
  %v226 = vld [vmem:[#allocation2 + $0x28] sm:$0xff]
  %v227 = vld [vmem:[#allocation2 + $0x30] sm:$0xff]
  %v228 = vld [vmem:[#allocation2 + $0x48] sm:$0xff]
  %v229 = vld [vmem:[#allocation2 + $0x50] sm:$0xff]
  %v230 = vld [vmem:[#allocation2 + $0x68] sm:$0xff]
  %v231 = vld [vmem:[#allocation2 + $0x70] sm:$0xff]
  %v232 = vld [vmem:[#allocation2 + $0x88] sm:$0xff]
  %v233 = vld [vmem:[#allocation2 + $0x90] sm:$0xff]
  %v234 = vld [vmem:[#allocation2 + $0xa8] sm:$0xff]
  %v235 = vld [vmem:[#allocation2 + $0xb0] sm:$0xff]
  %v236 = vld [vmem:[#allocation2 + $0xc8] sm:$0xff]
  %v237 = vld [vmem:[#allocation2 + $0xd0] sm:$0xff]
  %v238 = vld [vmem:[#allocation2 + $0xe8] sm:$0xff]
  %v239 = vld [vmem:[#allocation2 + $0xf0] sm:$0xff]
  %v240 = vld [vmem:[#allocation2 + $0x108] sm:$0xff]
  %v241 = vld [vmem:[#allocation2 + $0x110] sm:$0xff]
  %v242 = vld [vmem:[#allocation2 + $0x128] sm:$0xff]
  %v243 = vld [vmem:[#allocation2 + $0x130] sm:$0xff]
  %v244 = vld [vmem:[#allocation2 + $0x148] sm:$0xff]
  %v245 = vld [vmem:[#allocation2 + $0x150] sm:$0xff]
  %v246 = vld [vmem:[#allocation2 + $0x168] sm:$0xff]
  %v247 = vld [vmem:[#allocation2 + $0x170] sm:$0xff]
  %v248 = vld [vmem:[#allocation2 + $0x188] sm:$0xff]
  %v249 = vld [vmem:[#allocation2 + $0x190] sm:$0xff]
  %v250 = vld [vmem:[#allocation2 + $0x1a8] sm:$0xff]
  %v251 = vld [vmem:[#allocation2 + $0x1b0] sm:$0xff]
  %v252 = vld [vmem:[#allocation2 + $0x1c8] sm:$0xff]
  %v253 = vld [vmem:[#allocation2 + $0x1d0] sm:$0xff]
  %v254 = vld [vmem:[#allocation2 + $0x1e8] sm:$0xff]
  %v255 = vld [vmem:[#allocation2 + $0x1f0] sm:$0xff]
  %v256 = vlaneseq
  %v257 = vshrl.u32 %v256, 7
  %v258 = vsub.s32 1, %v257
  %v259 = vrot.slane %v154, %v258
  %v260 = vmul.f32 %v224, %v259
  %v261 = vmul.f32 %v225, %v259
  %v262 = vmul.f32 %v226, %v259
  %v263 = vmul.f32 %v227, %v259
  %v264 = vmul.f32 %v228, %v259
  %v265 = vmul.f32 %v229, %v259
  %v266 = vmul.f32 %v230, %v259
  %v267 = vmul.f32 %v231, %v259
  %v268 = vmul.f32 %v232, %v259
  %v269 = vmul.f32 %v233, %v259
  %v270 = vmul.f32 %v234, %v259
  %v271 = vmul.f32 %v235, %v259
  %v272 = vmul.f32 %v236, %v259
  %v273 = vmul.f32 %v237, %v259
  %v274 = vmul.f32 %v238, %v259
  %v275 = vmul.f32 %v239, %v259
  %v276 = vmul.f32 %v240, %v259
  %v277 = vmul.f32 %v241, %v259
  %v278 = vmul.f32 %v242, %v259
  %v279 = vmul.f32 %v243, %v259
  %v280 = vmul.f32 %v244, %v259
  %v281 = vmul.f32 %v245, %v259
  %v282 = vmul.f32 %v246, %v259
  %v283 = vmul.f32 %v247, %v259
  %v284 = vmul.f32 %v248, %v259
  %v285 = vmul.f32 %v249, %v259
  %v286 = vmul.f32 %v250, %v259
  %v287 = vmul.f32 %v251, %v259
  %v288 = vmul.f32 %v252, %v259
  %v289 = vmul.f32 %v253, %v259
  %v290 = vmul.f32 %v254, %v259
  %v291 = vmul.f32 %v255, %v259
  %v292 = vadd.f32 %v192, %v260
  %v293 = vadd.f32 %v193, %v261
  %v294 = vadd.f32 %v194, %v262
  %v295 = vadd.f32 %v195, %v263
  %v296 = vadd.f32 %v196, %v264
  %v297 = vadd.f32 %v197, %v265
  %v298 = vadd.f32 %v198, %v266
  %v299 = vadd.f32 %v199, %v267
  %v300 = vadd.f32 %v200, %v268
  %v301 = vadd.f32 %v201, %v269
  %v302 = vadd.f32 %v202, %v270
  %v303 = vadd.f32 %v203, %v271
  %v304 = vadd.f32 %v204, %v272
  %v305 = vadd.f32 %v205, %v273
  %v306 = vadd.f32 %v206, %v274
  %v307 = vadd.f32 %v207, %v275
  %v308 = vadd.f32 %v208, %v276
  %v309 = vadd.f32 %v209, %v277
  %v310 = vadd.f32 %v210, %v278
  %v311 = vadd.f32 %v211, %v279
  %v312 = vadd.f32 %v212, %v280
  %v313 = vadd.f32 %v213, %v281
  %v314 = vadd.f32 %v214, %v282
  %v315 = vadd.f32 %v215, %v283
  %v316 = vadd.f32 %v216, %v284
  %v317 = vadd.f32 %v217, %v285
  %v318 = vadd.f32 %v218, %v286
  %v319 = vadd.f32 %v219, %v287
  %v320 = vadd.f32 %v220, %v288
  %v321 = vadd.f32 %v221, %v289
  %v322 = vadd.f32 %v222, %v290
  %v323 = vadd.f32 %v223, %v291
  %v324 = vld [vmem:[#allocation2 + $0x9] sm:$0xff]
  %v325 = vld [vmem:[#allocation2 + $0x11] sm:$0xff]
  %v326 = vld [vmem:[#allocation2 + $0x29] sm:$0xff]
  %v327 = vld [vmem:[#allocation2 + $0x31] sm:$0xff]
  %v328 = vld [vmem:[#allocation2 + $0x49] sm:$0xff]
  %v329 = vld [vmem:[#allocation2 + $0x51] sm:$0xff]
  %v330 = vld [vmem:[#allocation2 + $0x69] sm:$0xff]
  %v331 = vld [vmem:[#allocation2 + $0x71] sm:$0xff]
  %v332 = vld [vmem:[#allocation2 + $0x89] sm:$0xff]
  %v333 = vld [vmem:[#allocation2 + $0x91] sm:$0xff]
  %v334 = vld [vmem:[#allocation2 + $0xa9] sm:$0xff]
  %v335 = vld [vmem:[#allocation2 + $0xb1] sm:$0xff]
  %v336 = vld [vmem:[#allocation2 + $0xc9] sm:$0xff]
  %v337 = vld [vmem:[#allocation2 + $0xd1] sm:$0xff]
  %v338 = vld [vmem:[#allocation2 + $0xe9] sm:$0xff]
  %v339 = vld [vmem:[#allocation2 + $0xf1] sm:$0xff]
  %v340 = vld [vmem:[#allocation2 + $0x109] sm:$0xff]
  %v341 = vld [vmem:[#allocation2 + $0x111] sm:$0xff]
  %v342 = vld [vmem:[#allocation2 + $0x129] sm:$0xff]
  %v343 = vld [vmem:[#allocation2 + $0x131] sm:$0xff]
  %v344 = vld [vmem:[#allocation2 + $0x149] sm:$0xff]
  %v345 = vld [vmem:[#allocation2 + $0x151] sm:$0xff]
  %v346 = vld [vmem:[#allocation2 + $0x169] sm:$0xff]
  %v347 = vld [vmem:[#allocation2 + $0x171] sm:$0xff]
  %v348 = vld [vmem:[#allocation2 + $0x189] sm:$0xff]
  %v349 = vld [vmem:[#allocation2 + $0x191] sm:$0xff]
  %v350 = vld [vmem:[#allocation2 + $0x1a9] sm:$0xff]
  %v351 = vld [vmem:[#allocation2 + $0x1b1] sm:$0xff]
  %v352 = vld [vmem:[#allocation2 + $0x1c9] sm:$0xff]
  %v353 = vld [vmem:[#allocation2 + $0x1d1] sm:$0xff]
  %v354 = vld [vmem:[#allocation2 + $0x1e9] sm:$0xff]
  %v355 = vld [vmem:[#allocation2 + $0x1f1] sm:$0xff]
  %v356 = vlaneseq
  %v357 = vshrl.u32 %v356, 7
  %v358 = vsub.s32 2, %v357
  %v359 = vrot.slane %v154, %v358
  %v360 = vmul.f32 %v324, %v359
  %v361 = vmul.f32 %v325, %v359
  %v362 = vmul.f32 %v326, %v359
  %v363 = vmul.f32 %v327, %v359
  %v364 = vmul.f32 %v328, %v359
  %v365 = vmul.f32 %v329, %v359
  %v366 = vmul.f32 %v330, %v359
  %v367 = vmul.f32 %v331, %v359
  %v368 = vmul.f32 %v332, %v359
  %v369 = vmul.f32 %v333, %v359
  %v370 = vmul.f32 %v334, %v359
  %v371 = vmul.f32 %v335, %v359
  %v372 = vmul.f32 %v336, %v359
  %v373 = vmul.f32 %v337, %v359
  %v374 = vmul.f32 %v338, %v359
  %v375 = vmul.f32 %v339, %v359
  %v376 = vmul.f32 %v340, %v359
  %v377 = vmul.f32 %v341, %v359
  %v378 = vmul.f32 %v342, %v359
  %v379 = vmul.f32 %v343, %v359
  %v380 = vmul.f32 %v344, %v359
  %v381 = vmul.f32 %v345, %v359
  %v382 = vmul.f32 %v346, %v359
  %v383 = vmul.f32 %v347, %v359
  %v384 = vmul.f32 %v348, %v359
  %v385 = vmul.f32 %v349, %v359
  %v386 = vmul.f32 %v350, %v359
  %v387 = vmul.f32 %v351, %v359
  %v388 = vmul.f32 %v352, %v359
  %v389 = vmul.f32 %v353, %v359
  %v390 = vmul.f32 %v354, %v359
  %v391 = vmul.f32 %v355, %v359
  %v392 = vadd.f32 %v292, %v360
  %v393 = vadd.f32 %v293, %v361
  %v394 = vadd.f32 %v294, %v362
  %v395 = vadd.f32 %v295, %v363
  %v396 = vadd.f32 %v296, %v364
  %v397 = vadd.f32 %v297, %v365
  %v398 = vadd.f32 %v298, %v366
  %v399 = vadd.f32 %v299, %v367
  %v400 = vadd.f32 %v300, %v368
  %v401 = vadd.f32 %v301, %v369
  %v402 = vadd.f32 %v302, %v370
  %v403 = vadd.f32 %v303, %v371
  %v404 = vadd.f32 %v304, %v372
  %v405 = vadd.f32 %v305, %v373
  %v406 = vadd.f32 %v306, %v374
  %v407 = vadd.f32 %v307, %v375
  %v408 = vadd.f32 %v308, %v376
  %v409 = vadd.f32 %v309, %v377
  %v410 = vadd.f32 %v310, %v378
  %v411 = vadd.f32 %v311, %v379
  %v412 = vadd.f32 %v312, %v380
  %v413 = vadd.f32 %v313, %v381
  %v414 = vadd.f32 %v314, %v382
  %v415 = vadd.f32 %v315, %v383
  %v416 = vadd.f32 %v316, %v384
  %v417 = vadd.f32 %v317, %v385
  %v418 = vadd.f32 %v318, %v386
  %v419 = vadd.f32 %v319, %v387
  %v420 = vadd.f32 %v320, %v388
  %v421 = vadd.f32 %v321, %v389
  %v422 = vadd.f32 %v322, %v390
  %v423 = vadd.f32 %v323, %v391
  %v424 = vld [vmem:[%s121 + $0x7] sm:$0xff]
  %v425 = vld [vmem:[%s121 + $0xf] sm:$0xff]
  %v426 = vld [vmem:[%s121 + $0x27] sm:$0xff]
  %v427 = vld [vmem:[%s121 + $0x2f] sm:$0xff]
  %v428 = vld [vmem:[%s121 + $0x47] sm:$0xff]
  %v429 = vld [vmem:[%s121 + $0x4f] sm:$0xff]
  %v430 = vld [vmem:[%s121 + $0x67] sm:$0xff]
  %v431 = vld [vmem:[%s121 + $0x6f] sm:$0xff]
  %v432 = vld [vmem:[%s121 + $0x87] sm:$0xff]
  %v433 = vld [vmem:[%s121 + $0x8f] sm:$0xff]
  %v434 = vld [vmem:[%s121 + $0xa7] sm:$0xff]
  %v435 = vld [vmem:[%s121 + $0xaf] sm:$0xff]
  %v436 = vld [vmem:[%s121 + $0xc7] sm:$0xff]
  %v437 = vld [vmem:[%s121 + $0xcf] sm:$0xff]
  %v438 = vld [vmem:[%s121 + $0xe7] sm:$0xff]
  %v439 = vld [vmem:[%s121 + $0xef] sm:$0xff]
  %v440 = vld [vmem:[%s121 + $0x107] sm:$0xff]
  %v441 = vld [vmem:[%s121 + $0x10f] sm:$0xff]
  %v442 = vld [vmem:[%s121 + $0x127] sm:$0xff]
  %v443 = vld [vmem:[%s121 + $0x12f] sm:$0xff]
  %v444 = vld [vmem:[%s121 + $0x147] sm:$0xff]
  %v445 = vld [vmem:[%s121 + $0x14f] sm:$0xff]
  %v446 = vld [vmem:[%s121 + $0x167] sm:$0xff]
  %v447 = vld [vmem:[%s121 + $0x16f] sm:$0xff]
  %v448 = vld [vmem:[%s121 + $0x187] sm:$0xff]
  %v449 = vld [vmem:[%s121 + $0x18f] sm:$0xff]
  %v450 = vld [vmem:[%s121 + $0x1a7] sm:$0xff]
  %v451 = vld [vmem:[%s121 + $0x1af] sm:$0xff]
  %v452 = vld [vmem:[%s121 + $0x1c7] sm:$0xff]
  %v453 = vld [vmem:[%s121 + $0x1cf] sm:$0xff]
  %v454 = vld [vmem:[%s121 + $0x1e7] sm:$0xff]
  %v455 = vld [vmem:[%s121 + $0x1ef] sm:$0xff]
  %v456 = vlaneseq
  %v457 = vshrl.u32 %v456, 7
  %v458 = vsub.s32 3, %v457
  %v459 = vrot.slane %v154, %v458
  %v460 = vmul.f32 %v424, %v459
  %v461 = vmul.f32 %v425, %v459
  %v462 = vmul.f32 %v426, %v459
  %v463 = vmul.f32 %v427, %v459
  %v464 = vmul.f32 %v428, %v459
  %v465 = vmul.f32 %v429, %v459
  %v466 = vmul.f32 %v430, %v459
  %v467 = vmul.f32 %v431, %v459
  %v468 = vmul.f32 %v432, %v459
  %v469 = vmul.f32 %v433, %v459
  %v470 = vmul.f32 %v434, %v459
  %v471 = vmul.f32 %v435, %v459
  %v472 = vmul.f32 %v436, %v459
  %v473 = vmul.f32 %v437, %v459
  %v474 = vmul.f32 %v438, %v459
  %v475 = vmul.f32 %v439, %v459
  %v476 = vmul.f32 %v440, %v459
  %v477 = vmul.f32 %v441, %v459
  %v478 = vmul.f32 %v442, %v459
  %v479 = vmul.f32 %v443, %v459
  %v480 = vmul.f32 %v444, %v459
  %v481 = vmul.f32 %v445, %v459
  %v482 = vmul.f32 %v446, %v459
  %v483 = vmul.f32 %v447, %v459
  %v484 = vmul.f32 %v448, %v459
  %v485 = vmul.f32 %v449, %v459
  %v486 = vmul.f32 %v450, %v459
  %v487 = vmul.f32 %v451, %v459
  %v488 = vmul.f32 %v452, %v459
  %v489 = vmul.f32 %v453, %v459
  %v490 = vmul.f32 %v454, %v459
  %v491 = vmul.f32 %v455, %v459
  %v492 = vadd.f32 %v392, %v460
  %v493 = vadd.f32 %v393, %v461
  %v494 = vadd.f32 %v394, %v462
  %v495 = vadd.f32 %v395, %v463
  %v496 = vadd.f32 %v396, %v464
  %v497 = vadd.f32 %v397, %v465
  %v498 = vadd.f32 %v398, %v466
  %v499 = vadd.f32 %v399, %v467
  %v500 = vadd.f32 %v400, %v468
  %v501 = vadd.f32 %v401, %v469
  %v502 = vadd.f32 %v402, %v470
  %v503 = vadd.f32 %v403, %v471
  %v504 = vadd.f32 %v404, %v472
  %v505 = vadd.f32 %v405, %v473
  %v506 = vadd.f32 %v406, %v474
  %v507 = vadd.f32 %v407, %v475
  %v508 = vadd.f32 %v408, %v476
  %v509 = vadd.f32 %v409, %v477
  %v510 = vadd.f32 %v410, %v478
  %v511 = vadd.f32 %v411, %v479
  %v512 = vadd.f32 %v412, %v480
  %v513 = vadd.f32 %v413, %v481
  %v514 = vadd.f32 %v414, %v482
  %v515 = vadd.f32 %v415, %v483
  %v516 = vadd.f32 %v416, %v484
  %v517 = vadd.f32 %v417, %v485
  %v518 = vadd.f32 %v418, %v486
  %v519 = vadd.f32 %v419, %v487
  %v520 = vadd.f32 %v420, %v488
  %v521 = vadd.f32 %v421, %v489
  %v522 = vadd.f32 %v422, %v490
  %v523 = vadd.f32 %v423, %v491
  %v524 = vld [vmem:[%s121 + $0x8] sm:$0xff]
  %v525 = vld [vmem:[%s121 + $0x10] sm:$0xff]
  %v526 = vld [vmem:[%s121 + $0x28] sm:$0xff]
  %v527 = vld [vmem:[%s121 + $0x30] sm:$0xff]
  %v528 = vld [vmem:[%s121 + $0x48] sm:$0xff]
  %v529 = vld [vmem:[%s121 + $0x50] sm:$0xff]
  %v530 = vld [vmem:[%s121 + $0x68] sm:$0xff]
  %v531 = vld [vmem:[%s121 + $0x70] sm:$0xff]
  %v532 = vld [vmem:[%s121 + $0x88] sm:$0xff]
  %v533 = vld [vmem:[%s121 + $0x90] sm:$0xff]
  %v534 = vld [vmem:[%s121 + $0xa8] sm:$0xff]
  %v535 = vld [vmem:[%s121 + $0xb0] sm:$0xff]
  %v536 = vld [vmem:[%s121 + $0xc8] sm:$0xff]
  %v537 = vld [vmem:[%s121 + $0xd0] sm:$0xff]
  %v538 = vld [vmem:[%s121 + $0xe8] sm:$0xff]
  %v539 = vld [vmem:[%s121 + $0xf0] sm:$0xff]
  %v540 = vld [vmem:[%s121 + $0x108] sm:$0xff]
  %v541 = vld [vmem:[%s121 + $0x110] sm:$0xff]
  %v542 = vld [vmem:[%s121 + $0x128] sm:$0xff]
  %v543 = vld [vmem:[%s121 + $0x130] sm:$0xff]
  %v544 = vld [vmem:[%s121 + $0x148] sm:$0xff]
  %v545 = vld [vmem:[%s121 + $0x150] sm:$0xff]
  %v546 = vld [vmem:[%s121 + $0x168] sm:$0xff]
  %v547 = vld [vmem:[%s121 + $0x170] sm:$0xff]
  %v548 = vld [vmem:[%s121 + $0x188] sm:$0xff]
  %v549 = vld [vmem:[%s121 + $0x190] sm:$0xff]
  %v550 = vld [vmem:[%s121 + $0x1a8] sm:$0xff]
  %v551 = vld [vmem:[%s121 + $0x1b0] sm:$0xff]
  %v552 = vld [vmem:[%s121 + $0x1c8] sm:$0xff]
  %v553 = vld [vmem:[%s121 + $0x1d0] sm:$0xff]
  %v554 = vld [vmem:[%s121 + $0x1e8] sm:$0xff]
  %v555 = vld [vmem:[%s121 + $0x1f0] sm:$0xff]
  %v556 = vlaneseq
  %v557 = vshrl.u32 %v556, 7
  %v558 = vsub.s32 4, %v557
  %v559 = vrot.slane %v154, %v558
  %v560 = vmul.f32 %v524, %v559
  %v561 = vmul.f32 %v525, %v559
  %v562 = vmul.f32 %v526, %v559
  %v563 = vmul.f32 %v527, %v559
  %v564 = vmul.f32 %v528, %v559
  %v565 = vmul.f32 %v529, %v559
  %v566 = vmul.f32 %v530, %v559
  %v567 = vmul.f32 %v531, %v559
  %v568 = vmul.f32 %v532, %v559
  %v569 = vmul.f32 %v533, %v559
  %v570 = vmul.f32 %v534, %v559
  %v571 = vmul.f32 %v535, %v559
  %v572 = vmul.f32 %v536, %v559
  %v573 = vmul.f32 %v537, %v559
  %v574 = vmul.f32 %v538, %v559
  %v575 = vmul.f32 %v539, %v559
  %v576 = vmul.f32 %v540, %v559
  %v577 = vmul.f32 %v541, %v559
  %v578 = vmul.f32 %v542, %v559
  %v579 = vmul.f32 %v543, %v559
  %v580 = vmul.f32 %v544, %v559
  %v581 = vmul.f32 %v545, %v559
  %v582 = vmul.f32 %v546, %v559
  %v583 = vmul.f32 %v547, %v559
  %v584 = vmul.f32 %v548, %v559
  %v585 = vmul.f32 %v549, %v559
  %v586 = vmul.f32 %v550, %v559
  %v587 = vmul.f32 %v551, %v559
  %v588 = vmul.f32 %v552, %v559
  %v589 = vmul.f32 %v553, %v559
  %v590 = vmul.f32 %v554, %v559
  %v591 = vmul.f32 %v555, %v559
  %v592 = vadd.f32 %v492, %v560
  %v593 = vadd.f32 %v493, %v561
  %v594 = vadd.f32 %v494, %v562
  %v595 = vadd.f32 %v495, %v563
  %v596 = vadd.f32 %v496, %v564
  %v597 = vadd.f32 %v497, %v565
  %v598 = vadd.f32 %v498, %v566
  %v599 = vadd.f32 %v499, %v567
  %v600 = vadd.f32 %v500, %v568
  %v601 = vadd.f32 %v501, %v569
  %v602 = vadd.f32 %v502, %v570
  %v603 = vadd.f32 %v503, %v571
  %v604 = vadd.f32 %v504, %v572
  %v605 = vadd.f32 %v505, %v573
  %v606 = vadd.f32 %v506, %v574
  %v607 = vadd.f32 %v507, %v575
  %v608 = vadd.f32 %v508, %v576
  %v609 = vadd.f32 %v509, %v577
  %v610 = vadd.f32 %v510, %v578
  %v611 = vadd.f32 %v511, %v579
  %v612 = vadd.f32 %v512, %v580
  %v613 = vadd.f32 %v513, %v581
  %v614 = vadd.f32 %v514, %v582
  %v615 = vadd.f32 %v515, %v583
  %v616 = vadd.f32 %v516, %v584
  %v617 = vadd.f32 %v517, %v585
  %v618 = vadd.f32 %v518, %v586
  %v619 = vadd.f32 %v519, %v587
  %v620 = vadd.f32 %v520, %v588
  %v621 = vadd.f32 %v521, %v589
  %v622 = vadd.f32 %v522, %v590
  %v623 = vadd.f32 %v523, %v591
  %v624 = vld [vmem:[%s121 + $0x9] sm:$0xff]
  %v625 = vld [vmem:[%s121 + $0x11] sm:$0xff]
  %v626 = vld [vmem:[%s121 + $0x29] sm:$0xff]
  %v627 = vld [vmem:[%s121 + $0x31] sm:$0xff]
  %v628 = vld [vmem:[%s121 + $0x49] sm:$0xff]
  %v629 = vld [vmem:[%s121 + $0x51] sm:$0xff]
  %v630 = vld [vmem:[%s121 + $0x69] sm:$0xff]
  %v631 = vld [vmem:[%s121 + $0x71] sm:$0xff]
  %v632 = vld [vmem:[%s121 + $0x89] sm:$0xff]
  %v633 = vld [vmem:[%s121 + $0x91] sm:$0xff]
  %v634 = vld [vmem:[%s121 + $0xa9] sm:$0xff]
  %v635 = vld [vmem:[%s121 + $0xb1] sm:$0xff]
  %v636 = vld [vmem:[%s121 + $0xc9] sm:$0xff]
  %v637 = vld [vmem:[%s121 + $0xd1] sm:$0xff]
  %v638 = vld [vmem:[%s121 + $0xe9] sm:$0xff]
  %v639 = vld [vmem:[%s121 + $0xf1] sm:$0xff]
  %v640 = vld [vmem:[%s121 + $0x109] sm:$0xff]
  %v641 = vld [vmem:[%s121 + $0x111] sm:$0xff]
  %v642 = vld [vmem:[%s121 + $0x129] sm:$0xff]
  %v643 = vld [vmem:[%s121 + $0x131] sm:$0xff]
  %v644 = vld [vmem:[%s121 + $0x149] sm:$0xff]
  %v645 = vld [vmem:[%s121 + $0x151] sm:$0xff]
  %v646 = vld [vmem:[%s121 + $0x169] sm:$0xff]
  %v647 = vld [vmem:[%s121 + $0x171] sm:$0xff]
  %v648 = vld [vmem:[%s121 + $0x189] sm:$0xff]
  %v649 = vld [vmem:[%s121 + $0x191] sm:$0xff]
  %v650 = vld [vmem:[%s121 + $0x1a9] sm:$0xff]
  %v651 = vld [vmem:[%s121 + $0x1b1] sm:$0xff]
  %v652 = vld [vmem:[%s121 + $0x1c9] sm:$0xff]
  %v653 = vld [vmem:[%s121 + $0x1d1] sm:$0xff]
  %v654 = vld [vmem:[%s121 + $0x1e9] sm:$0xff]
  %v655 = vld [vmem:[%s121 + $0x1f1] sm:$0xff]
  %v656 = vlaneseq
  %v657 = vshrl.u32 %v656, 7
  %v658 = vsub.s32 5, %v657
  %v659 = vrot.slane %v154, %v658
  %v660 = vmul.f32 %v624, %v659
  %v661 = vmul.f32 %v625, %v659
  %v662 = vmul.f32 %v626, %v659
  %v663 = vmul.f32 %v627, %v659
  %v664 = vmul.f32 %v628, %v659
  %v665 = vmul.f32 %v629, %v659
  %v666 = vmul.f32 %v630, %v659
  %v667 = vmul.f32 %v631, %v659
  %v668 = vmul.f32 %v632, %v659
  %v669 = vmul.f32 %v633, %v659
  %v670 = vmul.f32 %v634, %v659
  %v671 = vmul.f32 %v635, %v659
  %v672 = vmul.f32 %v636, %v659
  %v673 = vmul.f32 %v637, %v659
  %v674 = vmul.f32 %v638, %v659
  %v675 = vmul.f32 %v639, %v659
  %v676 = vmul.f32 %v640, %v659
  %v677 = vmul.f32 %v641, %v659
  %v678 = vmul.f32 %v642, %v659
  %v679 = vmul.f32 %v643, %v659
  %v680 = vmul.f32 %v644, %v659
  %v681 = vmul.f32 %v645, %v659
  %v682 = vmul.f32 %v646, %v659
  %v683 = vmul.f32 %v647, %v659
  %v684 = vmul.f32 %v648, %v659
  %v685 = vmul.f32 %v649, %v659
  %v686 = vmul.f32 %v650, %v659
  %v687 = vmul.f32 %v651, %v659
  %v688 = vmul.f32 %v652, %v659
  %v689 = vmul.f32 %v653, %v659
  %v690 = vmul.f32 %v654, %v659
  %v691 = vmul.f32 %v655, %v659
  %v692 = vadd.f32 %v592, %v660
  %v693 = vadd.f32 %v593, %v661
  %v694 = vadd.f32 %v594, %v662
  %v695 = vadd.f32 %v595, %v663
  %v696 = vadd.f32 %v596, %v664
  %v697 = vadd.f32 %v597, %v665
  %v698 = vadd.f32 %v598, %v666
  %v699 = vadd.f32 %v599, %v667
  %v700 = vadd.f32 %v600, %v668
  %v701 = vadd.f32 %v601, %v669
  %v702 = vadd.f32 %v602, %v670
  %v703 = vadd.f32 %v603, %v671
  %v704 = vadd.f32 %v604, %v672
  %v705 = vadd.f32 %v605, %v673
  %v706 = vadd.f32 %v606, %v674
  %v707 = vadd.f32 %v607, %v675
  %v708 = vadd.f32 %v608, %v676
  %v709 = vadd.f32 %v609, %v677
  %v710 = vadd.f32 %v610, %v678
  %v711 = vadd.f32 %v611, %v679
  %v712 = vadd.f32 %v612, %v680
  %v713 = vadd.f32 %v613, %v681
  %v714 = vadd.f32 %v614, %v682
  %v715 = vadd.f32 %v615, %v683
  %v716 = vadd.f32 %v616, %v684
  %v717 = vadd.f32 %v617, %v685
  %v718 = vadd.f32 %v618, %v686
  %v719 = vadd.f32 %v619, %v687
  %v720 = vadd.f32 %v620, %v688
  %v721 = vadd.f32 %v621, %v689
  %v722 = vadd.f32 %v622, %v690
  %v723 = vadd.f32 %v623, %v691
  %s724 = scalar_lea.vmem [#allocation2], 64
  %v725 = vld [vmem:[%s724 + $0x7] sm:$0xff]
  %v726 = vld [vmem:[%s724 + $0xf] sm:$0xff]
  %v727 = vld [vmem:[%s724 + $0x27] sm:$0xff]
  %v728 = vld [vmem:[%s724 + $0x2f] sm:$0xff]
  %v729 = vld [vmem:[%s724 + $0x47] sm:$0xff]
  %v730 = vld [vmem:[%s724 + $0x4f] sm:$0xff]
  %v731 = vld [vmem:[%s724 + $0x67] sm:$0xff]
  %v732 = vld [vmem:[%s724 + $0x6f] sm:$0xff]
  %v733 = vld [vmem:[%s724 + $0x87] sm:$0xff]
  %v734 = vld [vmem:[%s724 + $0x8f] sm:$0xff]
  %v735 = vld [vmem:[%s724 + $0xa7] sm:$0xff]
  %v736 = vld [vmem:[%s724 + $0xaf] sm:$0xff]
  %v737 = vld [vmem:[%s724 + $0xc7] sm:$0xff]
  %v738 = vld [vmem:[%s724 + $0xcf] sm:$0xff]
  %v739 = vld [vmem:[%s724 + $0xe7] sm:$0xff]
  %v740 = vld [vmem:[%s724 + $0xef] sm:$0xff]
  %v741 = vld [vmem:[%s724 + $0x107] sm:$0xff]
  %v742 = vld [vmem:[%s724 + $0x10f] sm:$0xff]
  %v743 = vld [vmem:[%s724 + $0x127] sm:$0xff]
  %v744 = vld [vmem:[%s724 + $0x12f] sm:$0xff]
  %v745 = vld [vmem:[%s724 + $0x147] sm:$0xff]
  %v746 = vld [vmem:[%s724 + $0x14f] sm:$0xff]
  %v747 = vld [vmem:[%s724 + $0x167] sm:$0xff]
  %v748 = vld [vmem:[%s724 + $0x16f] sm:$0xff]
  %v749 = vld [vmem:[%s724 + $0x187] sm:$0xff]
  %v750 = vld [vmem:[%s724 + $0x18f] sm:$0xff]
  %v751 = vld [vmem:[%s724 + $0x1a7] sm:$0xff]
  %v752 = vld [vmem:[%s724 + $0x1af] sm:$0xff]
  %v753 = vld [vmem:[%s724 + $0x1c7] sm:$0xff]
  %v754 = vld [vmem:[%s724 + $0x1cf] sm:$0xff]
  %v755 = vld [vmem:[%s724 + $0x1e7] sm:$0xff]
  %v756 = vld [vmem:[%s724 + $0x1ef] sm:$0xff]
  %v757 = vlaneseq
  %v758 = vshrl.u32 %v757, 7
  %v759 = vsub.s32 6, %v758
  %v760 = vrot.slane %v154, %v759
  %v761 = vmul.f32 %v725, %v760
  %v762 = vmul.f32 %v726, %v760
  %v763 = vmul.f32 %v727, %v760
  %v764 = vmul.f32 %v728, %v760
  %v765 = vmul.f32 %v729, %v760
  %v766 = vmul.f32 %v730, %v760
  %v767 = vmul.f32 %v731, %v760
  %v768 = vmul.f32 %v732, %v760
  %v769 = vmul.f32 %v733, %v760
  %v770 = vmul.f32 %v734, %v760
  %v771 = vmul.f32 %v735, %v760
  %v772 = vmul.f32 %v736, %v760
  %v773 = vmul.f32 %v737, %v760
  %v774 = vmul.f32 %v738, %v760
  %v775 = vmul.f32 %v739, %v760
  %v776 = vmul.f32 %v740, %v760
  %v777 = vmul.f32 %v741, %v760
  %v778 = vmul.f32 %v742, %v760
  %v779 = vmul.f32 %v743, %v760
  %v780 = vmul.f32 %v744, %v760
  %v781 = vmul.f32 %v745, %v760
  %v782 = vmul.f32 %v746, %v760
  %v783 = vmul.f32 %v747, %v760
  %v784 = vmul.f32 %v748, %v760
  %v785 = vmul.f32 %v749, %v760
  %v786 = vmul.f32 %v750, %v760
  %v787 = vmul.f32 %v751, %v760
  %v788 = vmul.f32 %v752, %v760
  %v789 = vmul.f32 %v753, %v760
  %v790 = vmul.f32 %v754, %v760
  %v791 = vmul.f32 %v755, %v760
  %v792 = vmul.f32 %v756, %v760
  %v793 = vadd.f32 %v692, %v761
  %v794 = vadd.f32 %v693, %v762
  %v795 = vadd.f32 %v694, %v763
  %v796 = vadd.f32 %v695, %v764
  %v797 = vadd.f32 %v696, %v765
  %v798 = vadd.f32 %v697, %v766
  %v799 = vadd.f32 %v698, %v767
  %v800 = vadd.f32 %v699, %v768
  %v801 = vadd.f32 %v700, %v769
  %v802 = vadd.f32 %v701, %v770
  %v803 = vadd.f32 %v702, %v771
  %v804 = vadd.f32 %v703, %v772
  %v805 = vadd.f32 %v704, %v773
  %v806 = vadd.f32 %v705, %v774
  %v807 = vadd.f32 %v706, %v775
  %v808 = vadd.f32 %v707, %v776
  %v809 = vadd.f32 %v708, %v777
  %v810 = vadd.f32 %v709, %v778
  %v811 = vadd.f32 %v710, %v779
  %v812 = vadd.f32 %v711, %v780
  %v813 = vadd.f32 %v712, %v781
  %v814 = vadd.f32 %v713, %v782
  %v815 = vadd.f32 %v714, %v783
  %v816 = vadd.f32 %v715, %v784
  %v817 = vadd.f32 %v716, %v785
  %v818 = vadd.f32 %v717, %v786
  %v819 = vadd.f32 %v718, %v787
  %v820 = vadd.f32 %v719, %v788
  %v821 = vadd.f32 %v720, %v789
  %v822 = vadd.f32 %v721, %v790
  %v823 = vadd.f32 %v722, %v791
  %v824 = vadd.f32 %v723, %v792
  %v825 = vld [vmem:[%s724 + $0x8] sm:$0xff]
  %v826 = vld [vmem:[%s724 + $0x10] sm:$0xff]
  %v827 = vld [vmem:[%s724 + $0x28] sm:$0xff]
  %v828 = vld [vmem:[%s724 + $0x30] sm:$0xff]
  %v829 = vld [vmem:[%s724 + $0x48] sm:$0xff]
  %v830 = vld [vmem:[%s724 + $0x50] sm:$0xff]
  %v831 = vld [vmem:[%s724 + $0x68] sm:$0xff]
  %v832 = vld [vmem:[%s724 + $0x70] sm:$0xff]
  %v833 = vld [vmem:[%s724 + $0x88] sm:$0xff]
  %v834 = vld [vmem:[%s724 + $0x90] sm:$0xff]
  %v835 = vld [vmem:[%s724 + $0xa8] sm:$0xff]
  %v836 = vld [vmem:[%s724 + $0xb0] sm:$0xff]
  %v837 = vld [vmem:[%s724 + $0xc8] sm:$0xff]
  %v838 = vld [vmem:[%s724 + $0xd0] sm:$0xff]
  %v839 = vld [vmem:[%s724 + $0xe8] sm:$0xff]
  %v840 = vld [vmem:[%s724 + $0xf0] sm:$0xff]
  %v841 = vld [vmem:[%s724 + $0x108] sm:$0xff]
  %v842 = vld [vmem:[%s724 + $0x110] sm:$0xff]
  %v843 = vld [vmem:[%s724 + $0x128] sm:$0xff]
  %v844 = vld [vmem:[%s724 + $0x130] sm:$0xff]
  %v845 = vld [vmem:[%s724 + $0x148] sm:$0xff]
  %v846 = vld [vmem:[%s724 + $0x150] sm:$0xff]
  %v847 = vld [vmem:[%s724 + $0x168] sm:$0xff]
  %v848 = vld [vmem:[%s724 + $0x170] sm:$0xff]
  %v849 = vld [vmem:[%s724 + $0x188] sm:$0xff]
  %v850 = vld [vmem:[%s724 + $0x190] sm:$0xff]
  %v851 = vld [vmem:[%s724 + $0x1a8] sm:$0xff]
  %v852 = vld [vmem:[%s724 + $0x1b0] sm:$0xff]
  %v853 = vld [vmem:[%s724 + $0x1c8] sm:$0xff]
  %v854 = vld [vmem:[%s724 + $0x1d0] sm:$0xff]
  %v855 = vld [vmem:[%s724 + $0x1e8] sm:$0xff]
  %v856 = vld [vmem:[%s724 + $0x1f0] sm:$0xff]
  %v857 = vlaneseq
  %v858 = vshrl.u32 %v857, 7
  %v859 = vsub.s32 7, %v858
  %v860 = vrot.slane %v154, %v859
  %v861 = vmul.f32 %v825, %v860
  %v862 = vmul.f32 %v826, %v860
  %v863 = vmul.f32 %v827, %v860
  %v864 = vmul.f32 %v828, %v860
  %v865 = vmul.f32 %v829, %v860
  %v866 = vmul.f32 %v830, %v860
  %v867 = vmul.f32 %v831, %v860
  %v868 = vmul.f32 %v832, %v860
  %v869 = vmul.f32 %v833, %v860
  %v870 = vmul.f32 %v834, %v860
  %v871 = vmul.f32 %v835, %v860
  %v872 = vmul.f32 %v836, %v860
  %v873 = vmul.f32 %v837, %v860
  %v874 = vmul.f32 %v838, %v860
  %v875 = vmul.f32 %v839, %v860
  %v876 = vmul.f32 %v840, %v860
  %v877 = vmul.f32 %v841, %v860
  %v878 = vmul.f32 %v842, %v860
  %v879 = vmul.f32 %v843, %v860
  %v880 = vmul.f32 %v844, %v860
  %v881 = vmul.f32 %v845, %v860
  %v882 = vmul.f32 %v846, %v860
  %v883 = vmul.f32 %v847, %v860
  %v884 = vmul.f32 %v848, %v860
  %v885 = vmul.f32 %v849, %v860
  %v886 = vmul.f32 %v850, %v860
  %v887 = vmul.f32 %v851, %v860
  %v888 = vmul.f32 %v852, %v860
  %v889 = vmul.f32 %v853, %v860
  %v890 = vmul.f32 %v854, %v860
  %v891 = vmul.f32 %v855, %v860
  %v892 = vmul.f32 %v856, %v860
  %v893 = vadd.f32 %v793, %v861
  %v894 = vadd.f32 %v794, %v862
  %v895 = vadd.f32 %v795, %v863
  %v896 = vadd.f32 %v796, %v864
  %v897 = vadd.f32 %v797, %v865
  %v898 = vadd.f32 %v798, %v866
  %v899 = vadd.f32 %v799, %v867
  %v900 = vadd.f32 %v800, %v868
  %v901 = vadd.f32 %v801, %v869
  %v902 = vadd.f32 %v802, %v870
  %v903 = vadd.f32 %v803, %v871
  %v904 = vadd.f32 %v804, %v872
  %v905 = vadd.f32 %v805, %v873
  %v906 = vadd.f32 %v806, %v874
  %v907 = vadd.f32 %v807, %v875
  %v908 = vadd.f32 %v808, %v876
  %v909 = vadd.f32 %v809, %v877
  %v910 = vadd.f32 %v810, %v878
  %v911 = vadd.f32 %v811, %v879
  %v912 = vadd.f32 %v812, %v880
  %v913 = vadd.f32 %v813, %v881
  %v914 = vadd.f32 %v814, %v882
  %v915 = vadd.f32 %v815, %v883
  %v916 = vadd.f32 %v816, %v884
  %v917 = vadd.f32 %v817, %v885
  %v918 = vadd.f32 %v818, %v886
  %v919 = vadd.f32 %v819, %v887
  %v920 = vadd.f32 %v820, %v888
  %v921 = vadd.f32 %v821, %v889
  %v922 = vadd.f32 %v822, %v890
  %v923 = vadd.f32 %v823, %v891
  %v924 = vadd.f32 %v824, %v892
  %v925 = vld [vmem:[%s724 + $0x9] sm:$0xff]
  %v926 = vld [vmem:[%s724 + $0x11] sm:$0xff]
  %v927 = vld [vmem:[%s724 + $0x29] sm:$0xff]
  %v928 = vld [vmem:[%s724 + $0x31] sm:$0xff]
  %v929 = vld [vmem:[%s724 + $0x49] sm:$0xff]
  %v930 = vld [vmem:[%s724 + $0x51] sm:$0xff]
  %v931 = vld [vmem:[%s724 + $0x69] sm:$0xff]
  %v932 = vld [vmem:[%s724 + $0x71] sm:$0xff]
  %v933 = vld [vmem:[%s724 + $0x89] sm:$0xff]
  %v934 = vld [vmem:[%s724 + $0x91] sm:$0xff]
  %v935 = vld [vmem:[%s724 + $0xa9] sm:$0xff]
  %v936 = vld [vmem:[%s724 + $0xb1] sm:$0xff]
  %v937 = vld [vmem:[%s724 + $0xc9] sm:$0xff]
  %v938 = vld [vmem:[%s724 + $0xd1] sm:$0xff]
  %v939 = vld [vmem:[%s724 + $0xe9] sm:$0xff]
  %v940 = vld [vmem:[%s724 + $0xf1] sm:$0xff]
  %v941 = vld [vmem:[%s724 + $0x109] sm:$0xff]
  %v942 = vld [vmem:[%s724 + $0x111] sm:$0xff]
  %v943 = vld [vmem:[%s724 + $0x129] sm:$0xff]
  %v944 = vld [vmem:[%s724 + $0x131] sm:$0xff]
  %v945 = vld [vmem:[%s724 + $0x149] sm:$0xff]
  %v946 = vld [vmem:[%s724 + $0x151] sm:$0xff]
  %v947 = vld [vmem:[%s724 + $0x169] sm:$0xff]
  %v948 = vld [vmem:[%s724 + $0x171] sm:$0xff]
  %v949 = vld [vmem:[%s724 + $0x189] sm:$0xff]
  %v950 = vld [vmem:[%s724 + $0x191] sm:$0xff]
  %v951 = vld [vmem:[%s724 + $0x1a9] sm:$0xff]
  %v952 = vld [vmem:[%s724 + $0x1b1] sm:$0xff]
  %v953 = vld [vmem:[%s724 + $0x1c9] sm:$0xff]
  %v954 = vld [vmem:[%s724 + $0x1d1] sm:$0xff]
  %v955 = vld [vmem:[%s724 + $0x1e9] sm:$0xff]
  %v956 = vld [vmem:[%s724 + $0x1f1] sm:$0xff]
  %v957 = vlaneseq
  %v958 = vshrl.u32 %v957, 7
  %v959 = vsub.s32 0, %v958
  %v960 = vrot.slane %v155, %v959
  %v961 = vmul.f32 %v925, %v960
  %v962 = vmul.f32 %v926, %v960
  %v963 = vmul.f32 %v927, %v960
  %v964 = vmul.f32 %v928, %v960
  %v965 = vmul.f32 %v929, %v960
  %v966 = vmul.f32 %v930, %v960
  %v967 = vmul.f32 %v931, %v960
  %v968 = vmul.f32 %v932, %v960
  %v969 = vmul.f32 %v933, %v960
  %v970 = vmul.f32 %v934, %v960
  %v971 = vmul.f32 %v935, %v960
  %v972 = vmul.f32 %v936, %v960
  %v973 = vmul.f32 %v937, %v960
  %v974 = vmul.f32 %v938, %v960
  %v975 = vmul.f32 %v939, %v960
  %v976 = vmul.f32 %v940, %v960
  %v977 = vmul.f32 %v941, %v960
  %v978 = vmul.f32 %v942, %v960
  %v979 = vmul.f32 %v943, %v960
  %v980 = vmul.f32 %v944, %v960
  %v981 = vmul.f32 %v945, %v960
  %v982 = vmul.f32 %v946, %v960
  %v983 = vmul.f32 %v947, %v960
  %v984 = vmul.f32 %v948, %v960
  %v985 = vmul.f32 %v949, %v960
  %v986 = vmul.f32 %v950, %v960
  %v987 = vmul.f32 %v951, %v960
  %v988 = vmul.f32 %v952, %v960
  %v989 = vmul.f32 %v953, %v960
  %v990 = vmul.f32 %v954, %v960
  %v991 = vmul.f32 %v955, %v960
  %v992 = vmul.f32 %v956, %v960
  %v993 = vadd.f32 %v893, %v961
  %v994 = vadd.f32 %v894, %v962
  %v995 = vadd.f32 %v895, %v963
  %v996 = vadd.f32 %v896, %v964
  %v997 = vadd.f32 %v897, %v965
  %v998 = vadd.f32 %v898, %v966
  %v999 = vadd.f32 %v899, %v967
  %v1000 = vadd.f32 %v900, %v968
  %v1001 = vadd.f32 %v901, %v969
  %v1002 = vadd.f32 %v902, %v970
  %v1003 = vadd.f32 %v903, %v971
  %v1004 = vadd.f32 %v904, %v972
  %v1005 = vadd.f32 %v905, %v973
  %v1006 = vadd.f32 %v906, %v974
  %v1007 = vadd.f32 %v907, %v975
  %v1008 = vadd.f32 %v908, %v976
  %v1009 = vadd.f32 %v909, %v977
  %v1010 = vadd.f32 %v910, %v978
  %v1011 = vadd.f32 %v911, %v979
  %v1012 = vadd.f32 %v912, %v980
  %v1013 = vadd.f32 %v913, %v981
  %v1014 = vadd.f32 %v914, %v982
  %v1015 = vadd.f32 %v915, %v983
  %v1016 = vadd.f32 %v916, %v984
  %v1017 = vadd.f32 %v917, %v985
  %v1018 = vadd.f32 %v918, %v986
  %v1019 = vadd.f32 %v919, %v987
  %v1020 = vadd.f32 %v920, %v988
  %v1021 = vadd.f32 %v921, %v989
  %v1022 = vadd.f32 %v922, %v990
  %v1023 = vadd.f32 %v923, %v991
  %v1024 = vadd.f32 %v924, %v992
  %v1025 = vld [vmem:[%s2] sm:$0x1]
  %v1027 = vlaneseq
  %v1028 = vshrl.u32 %v1027, 7
  %v1029 = vsub.s32 0, %v1028
  %v1030 = vrot.slane %v1025, %v1029
  %v1032 = vadd.f32 %v993, %v1030
  %v1033 = vadd.f32 %v994, %v1030
  %v1034 = vadd.f32 %v995, %v1030
  %v1035 = vadd.f32 %v996, %v1030
  %v1036 = vadd.f32 %v997, %v1030
  %v1037 = vadd.f32 %v998, %v1030
  %v1038 = vadd.f32 %v999, %v1030
  %v1039 = vadd.f32 %v1000, %v1030
  %v1040 = vadd.f32 %v1001, %v1030
  %v1041 = vadd.f32 %v1002, %v1030
  %v1042 = vadd.f32 %v1003, %v1030
  %v1043 = vadd.f32 %v1004, %v1030
  %v1044 = vadd.f32 %v1005, %v1030
  %v1045 = vadd.f32 %v1006, %v1030
  %v1046 = vadd.f32 %v1007, %v1030
  %v1047 = vadd.f32 %v1008, %v1030
  %v1048 = vadd.f32 %v1009, %v1030
  %v1049 = vadd.f32 %v1010, %v1030
  %v1050 = vadd.f32 %v1011, %v1030
  %v1051 = vadd.f32 %v1012, %v1030
  %v1052 = vadd.f32 %v1013, %v1030
  %v1053 = vadd.f32 %v1014, %v1030
  %v1054 = vadd.f32 %v1015, %v1030
  %v1055 = vadd.f32 %v1016, %v1030
  %v1056 = vadd.f32 %v1017, %v1030
  %v1057 = vadd.f32 %v1018, %v1030
  %v1058 = vadd.f32 %v1019, %v1030
  %v1059 = vadd.f32 %v1020, %v1030
  %v1060 = vadd.f32 %v1021, %v1030
  %v1061 = vadd.f32 %v1022, %v1030
  %v1062 = vadd.f32 %v1023, %v1030
  %v1063 = vadd.f32 %v1024, %v1030
  %1064 = vst [vmem:[#allocation3] sm:$0xff] 0.0
  %1065 = vst [vmem:[#allocation3 + $0x20] sm:$0xff] 0.0
  %1066 = vst [vmem:[#allocation3 + $0x40] sm:$0xff] 0.0
  %1067 = vst [vmem:[#allocation3 + $0x60] sm:$0xff] 0.0
  %1068 = vst [vmem:[#allocation3 + $0x80] sm:$0xff] 0.0
  %1069 = vst [vmem:[#allocation3 + $0xa0] sm:$0xff] 0.0
  %1070 = vst [vmem:[#allocation3 + $0xc0] sm:$0xff] 0.0
  %1071 = vst [vmem:[#allocation3 + $0xe0] sm:$0xff] 0.0
  %1072 = vst [vmem:[#allocation3 + $0x100] sm:$0xff] 0.0
  %1073 = vst [vmem:[#allocation3 + $0x120] sm:$0xff] 0.0
  %1074 = vst [vmem:[#allocation3 + $0x140] sm:$0xff] 0.0
  %1075 = vst [vmem:[#allocation3 + $0x160] sm:$0xff] 0.0
  %1076 = vst [vmem:[#allocation3 + $0x180] sm:$0xff] 0.0
  %1077 = vst [vmem:[#allocation3 + $0x1a0] sm:$0xff] 0.0
  %1078 = vst [vmem:[#allocation3 + $0x1c0] sm:$0xff] 0.0
  %1079 = vst [vmem:[#allocation3 + $0x1e0] sm:$0xff] 0.0
  %1080 = vst [vmem:[#allocation3 + $0x200] sm:$0xff] 0.0
  %1081 = vst [vmem:[#allocation3 + $0x220] sm:$0xff] 0.0
  %1082 = vst [vmem:[#allocation3 + $0x240] sm:$0xff] 0.0
  %1083 = vst [vmem:[#allocation3 + $0x260] sm:$0xff] 0.0
  %1084 = vst [vmem:[#allocation3 + $0x280] sm:$0xff] 0.0
  %1085 = vst [vmem:[#allocation3 + $0x2a0] sm:$0xff] 0.0
  %1086 = vst [vmem:[#allocation3 + $0x2c0] sm:$0xff] 0.0
  %1087 = vst [vmem:[#allocation3 + $0x2e0] sm:$0xff] 0.0
  %1088 = vst [vmem:[#allocation3 + $0x18] sm:$0xff] 0.0
  %1089 = vst [vmem:[#allocation3 + $0x38] sm:$0xff] 0.0
  %1090 = vst [vmem:[#allocation3 + $0x58] sm:$0xff] 0.0
  %1091 = vst [vmem:[#allocation3 + $0x78] sm:$0xff] 0.0
  %1092 = vst [vmem:[#allocation3 + $0x98] sm:$0xff] 0.0
  %1093 = vst [vmem:[#allocation3 + $0xb8] sm:$0xff] 0.0
  %1094 = vst [vmem:[#allocation3 + $0xd8] sm:$0xff] 0.0
  %1095 = vst [vmem:[#allocation3 + $0xf8] sm:$0xff] 0.0
  %1096 = vst [vmem:[#allocation3 + $0x118] sm:$0xff] 0.0
  %1097 = vst [vmem:[#allocation3 + $0x138] sm:$0xff] 0.0
  %1098 = vst [vmem:[#allocation3 + $0x158] sm:$0xff] 0.0
  %1099 = vst [vmem:[#allocation3 + $0x178] sm:$0xff] 0.0
  %1100 = vst [vmem:[#allocation3 + $0x198] sm:$0xff] 0.0
  %1101 = vst [vmem:[#allocation3 + $0x1b8] sm:$0xff] 0.0
  %1102 = vst [vmem:[#allocation3 + $0x1d8] sm:$0xff] 0.0
  %1103 = vst [vmem:[#allocation3 + $0x1f8] sm:$0xff] 0.0
  %1104 = vst [vmem:[#allocation3 + $0x218] sm:$0xff] 0.0
  %1105 = vst [vmem:[#allocation3 + $0x238] sm:$0xff] 0.0
  %1106 = vst [vmem:[#allocation3 + $0x258] sm:$0xff] 0.0
  %1107 = vst [vmem:[#allocation3 + $0x278] sm:$0xff] 0.0
  %1108 = vst [vmem:[#allocation3 + $0x298] sm:$0xff] 0.0
  %1109 = vst [vmem:[#allocation3 + $0x2b8] sm:$0xff] 0.0
  %1110 = vst [vmem:[#allocation3 + $0x2d8] sm:$0xff] 0.0
  %1111 = vst [vmem:[#allocation3 + $0x2f8] sm:$0xff] 0.0
  %1112 = vst [vmem:[#allocation3 + $0x8] sm:$0xff] 0.0
  %1113 = vst [vmem:[#allocation3 + $0x10] sm:$0xff] 0.0
  %1114 = vst [vmem:[#allocation3 + $0x28] sm:$0xff] 0.0
  %1115 = vst [vmem:[#allocation3 + $0x30] sm:$0xff] 0.0
  %1116 = vst [vmem:[#allocation3 + $0x48] sm:$0xff] 0.0
  %1117 = vst [vmem:[#allocation3 + $0x50] sm:$0xff] 0.0
  %1118 = vst [vmem:[#allocation3 + $0x68] sm:$0xff] 0.0
  %1119 = vst [vmem:[#allocation3 + $0x70] sm:$0xff] 0.0
  %s1120 = scalar_lea.vmem [#allocation3], 640
  %1121 = vst [vmem:[%s1120 + $0x8] sm:$0xff] 0.0
  %1122 = vst [vmem:[%s1120 + $0x10] sm:$0xff] 0.0
  %1123 = vst [vmem:[%s1120 + $0x28] sm:$0xff] 0.0
  %1124 = vst [vmem:[%s1120 + $0x30] sm:$0xff] 0.0
  %1125 = vst [vmem:[%s1120 + $0x48] sm:$0xff] 0.0
  %1126 = vst [vmem:[%s1120 + $0x50] sm:$0xff] 0.0
  %1127 = vst [vmem:[%s1120 + $0x68] sm:$0xff] 0.0
  %1128 = vst [vmem:[%s1120 + $0x70] sm:$0xff] 0.0
  %s1129 = scalar_lea.vmem [#allocation3], 128
  %1130 = vst [vmem:[%s1129 + $0x8] sm:$0xff] %v1032
  %1131 = vst [vmem:[%s1129 + $0x10] sm:$0xff] %v1033
  %1132 = vst [vmem:[%s1129 + $0x28] sm:$0xff] %v1034
  %1133 = vst [vmem:[%s1129 + $0x30] sm:$0xff] %v1035
  %1134 = vst [vmem:[%s1129 + $0x48] sm:$0xff] %v1036
  %1135 = vst [vmem:[%s1129 + $0x50] sm:$0xff] %v1037
  %1136 = vst [vmem:[%s1129 + $0x68] sm:$0xff] %v1038
  %1137 = vst [vmem:[%s1129 + $0x70] sm:$0xff] %v1039
  %1138 = vst [vmem:[%s1129 + $0x88] sm:$0xff] %v1040
  %1139 = vst [vmem:[%s1129 + $0x90] sm:$0xff] %v1041
  %1140 = vst [vmem:[%s1129 + $0xa8] sm:$0xff] %v1042
  %1141 = vst [vmem:[%s1129 + $0xb0] sm:$0xff] %v1043
  %1142 = vst [vmem:[%s1129 + $0xc8] sm:$0xff] %v1044
  %1143 = vst [vmem:[%s1129 + $0xd0] sm:$0xff] %v1045
  %1144 = vst [vmem:[%s1129 + $0xe8] sm:$0xff] %v1046
  %1145 = vst [vmem:[%s1129 + $0xf0] sm:$0xff] %v1047
  %1146 = vst [vmem:[%s1129 + $0x108] sm:$0xff] %v1048
  %1147 = vst [vmem:[%s1129 + $0x110] sm:$0xff] %v1049
  %1148 = vst [vmem:[%s1129 + $0x128] sm:$0xff] %v1050
  %1149 = vst [vmem:[%s1129 + $0x130] sm:$0xff] %v1051
  %1150 = vst [vmem:[%s1129 + $0x148] sm:$0xff] %v1052
  %1151 = vst [vmem:[%s1129 + $0x150] sm:$0xff] %v1053
  %1152 = vst [vmem:[%s1129 + $0x168] sm:$0xff] %v1054
  %1153 = vst [vmem:[%s1129 + $0x170] sm:$0xff] %v1055
  %1154 = vst [vmem:[%s1129 + $0x188] sm:$0xff] %v1056
  %1155 = vst [vmem:[%s1129 + $0x190] sm:$0xff] %v1057
  %1156 = vst [vmem:[%s1129 + $0x1a8] sm:$0xff] %v1058
  %1157 = vst [vmem:[%s1129 + $0x1b0] sm:$0xff] %v1059
  %1158 = vst [vmem:[%s1129 + $0x1c8] sm:$0xff] %v1060
  %1159 = vst [vmem:[%s1129 + $0x1d0] sm:$0xff] %v1061
  %1160 = vst [vmem:[%s1129 + $0x1e8] sm:$0xff] %v1062
  %1161 = vst [vmem:[%s1129 + $0x1f0] sm:$0xff] %v1063
  %v1162 = vld [vmem:[%s3] sm:$0xff]
  %v1163 = vld [vmem:[%s3 + $0x8] sm:$0xff]
  %v1164 = vld [vmem:[%s3 + $0x10] sm:$0xff]
  %v1165 = vld [vmem:[%s3 + $0x18] sm:$0x1]
  %v1166 = vld [vmem:[#allocation3 + $0x4] sm:$0xff]
  %v1167 = vld [vmem:[#allocation3 + $0xc] sm:$0xff]
  %v1168 = vld [vmem:[#allocation3 + $0x24] sm:$0xff]
  %v1169 = vld [vmem:[#allocation3 + $0x2c] sm:$0xff]
  %v1170 = vld [vmem:[#allocation3 + $0x44] sm:$0xff]
  %v1171 = vld [vmem:[#allocation3 + $0x4c] sm:$0xff]
  %v1172 = vld [vmem:[#allocation3 + $0x64] sm:$0xff]
  %v1173 = vld [vmem:[#allocation3 + $0x6c] sm:$0xff]
  %v1174 = vld [vmem:[#allocation3 + $0x84] sm:$0xff]
  %v1175 = vld [vmem:[#allocation3 + $0x8c] sm:$0xff]
  %v1176 = vld [vmem:[#allocation3 + $0xa4] sm:$0xff]
  %v1177 = vld [vmem:[#allocation3 + $0xac] sm:$0xff]
  %v1178 = vld [vmem:[#allocation3 + $0xc4] sm:$0xff]
  %v1179 = vld [vmem:[#allocation3 + $0xcc] sm:$0xff]
  %v1180 = vld [vmem:[#allocation3 + $0xe4] sm:$0xff]
  %v1181 = vld [vmem:[#allocation3 + $0xec] sm:$0xff]
  %v1182 = vld [vmem:[#allocation3 + $0x104] sm:$0xff]
  %v1183 = vld [vmem:[#allocation3 + $0x10c] sm:$0xff]
  %v1184 = vld [vmem:[#allocation3 + $0x124] sm:$0xff]
  %v1185 = vld [vmem:[#allocation3 + $0x12c] sm:$0xff]
  %v1186 = vld [vmem:[#allocation3 + $0x144] sm:$0xff]
  %v1187 = vld [vmem:[#allocation3 + $0x14c] sm:$0xff]
  %v1188 = vld [vmem:[#allocation3 + $0x164] sm:$0xff]
  %v1189 = vld [vmem:[#allocation3 + $0x16c] sm:$0xff]
  %v1190 = vld [vmem:[#allocation3 + $0x184] sm:$0xff]
  %v1191 = vld [vmem:[#allocation3 + $0x18c] sm:$0xff]
  %v1192 = vld [vmem:[#allocation3 + $0x1a4] sm:$0xff]
  %v1193 = vld [vmem:[#allocation3 + $0x1ac] sm:$0xff]
  %v1194 = vld [vmem:[#allocation3 + $0x1c4] sm:$0xff]
  %v1195 = vld [vmem:[#allocation3 + $0x1cc] sm:$0xff]
  %v1196 = vld [vmem:[#allocation3 + $0x1e4] sm:$0xff]
  %v1197 = vld [vmem:[#allocation3 + $0x1ec] sm:$0xff]
  %v1198 = vlaneseq
  %v1199 = vshrl.u32 %v1198, 7
  %v1200 = vsub.s32 0, %v1199
  %v1201 = vrot.slane %v1162, %v1200
  %v1202 = vmul.f32 %v1166, %v1201
  %v1203 = vmul.f32 %v1167, %v1201
  %v1204 = vmul.f32 %v1168, %v1201
  %v1205 = vmul.f32 %v1169, %v1201
  %v1206 = vmul.f32 %v1170, %v1201
  %v1207 = vmul.f32 %v1171, %v1201
  %v1208 = vmul.f32 %v1172, %v1201
  %v1209 = vmul.f32 %v1173, %v1201
  %v1210 = vmul.f32 %v1174, %v1201
  %v1211 = vmul.f32 %v1175, %v1201
  %v1212 = vmul.f32 %v1176, %v1201
  %v1213 = vmul.f32 %v1177, %v1201
  %v1214 = vmul.f32 %v1178, %v1201
  %v1215 = vmul.f32 %v1179, %v1201
  %v1216 = vmul.f32 %v1180, %v1201
  %v1217 = vmul.f32 %v1181, %v1201
  %v1218 = vmul.f32 %v1182, %v1201
  %v1219 = vmul.f32 %v1183, %v1201
  %v1220 = vmul.f32 %v1184, %v1201
  %v1221 = vmul.f32 %v1185, %v1201
  %v1222 = vmul.f32 %v1186, %v1201
  %v1223 = vmul.f32 %v1187, %v1201
  %v1224 = vmul.f32 %v1188, %v1201
  %v1225 = vmul.f32 %v1189, %v1201
  %v1226 = vmul.f32 %v1190, %v1201
  %v1227 = vmul.f32 %v1191, %v1201
  %v1228 = vmul.f32 %v1192, %v1201
  %v1229 = vmul.f32 %v1193, %v1201
  %v1230 = vmul.f32 %v1194, %v1201
  %v1231 = vmul.f32 %v1195, %v1201
  %v1232 = vmul.f32 %v1196, %v1201
  %v1233 = vmul.f32 %v1197, %v1201
  %v1234 = vld [vmem:[#allocation3 + $0x6] sm:$0xff]
  %v1235 = vld [vmem:[#allocation3 + $0xe] sm:$0xff]
  %v1236 = vld [vmem:[#allocation3 + $0x26] sm:$0xff]
  %v1237 = vld [vmem:[#allocation3 + $0x2e] sm:$0xff]
  %v1238 = vld [vmem:[#allocation3 + $0x46] sm:$0xff]
  %v1239 = vld [vmem:[#allocation3 + $0x4e] sm:$0xff]
  %v1240 = vld [vmem:[#allocation3 + $0x66] sm:$0xff]
  %v1241 = vld [vmem:[#allocation3 + $0x6e] sm:$0xff]
  %v1242 = vld [vmem:[#allocation3 + $0x86] sm:$0xff]
  %v1243 = vld [vmem:[#allocation3 + $0x8e] sm:$0xff]
  %v1244 = vld [vmem:[#allocation3 + $0xa6] sm:$0xff]
  %v1245 = vld [vmem:[#allocation3 + $0xae] sm:$0xff]
  %v1246 = vld [vmem:[#allocation3 + $0xc6] sm:$0xff]
  %v1247 = vld [vmem:[#allocation3 + $0xce] sm:$0xff]
  %v1248 = vld [vmem:[#allocation3 + $0xe6] sm:$0xff]
  %v1249 = vld [vmem:[#allocation3 + $0xee] sm:$0xff]
  %v1250 = vld [vmem:[#allocation3 + $0x106] sm:$0xff]
  %v1251 = vld [vmem:[#allocation3 + $0x10e] sm:$0xff]
  %v1252 = vld [vmem:[#allocation3 + $0x126] sm:$0xff]
  %v1253 = vld [vmem:[#allocation3 + $0x12e] sm:$0xff]
  %v1254 = vld [vmem:[#allocation3 + $0x146] sm:$0xff]
  %v1255 = vld [vmem:[#allocation3 + $0x14e] sm:$0xff]
  %v1256 = vld [vmem:[#allocation3 + $0x166] sm:$0xff]
  %v1257 = vld [vmem:[#allocation3 + $0x16e] sm:$0xff]
  %v1258 = vld [vmem:[#allocation3 + $0x186] sm:$0xff]
  %v1259 = vld [vmem:[#allocation3 + $0x18e] sm:$0xff]
  %v1260 = vld [vmem:[#allocation3 + $0x1a6] sm:$0xff]
  %v1261 = vld [vmem:[#allocation3 + $0x1ae] sm:$0xff]
  %v1262 = vld [vmem:[#allocation3 + $0x1c6] sm:$0xff]
  %v1263 = vld [vmem:[#allocation3 + $0x1ce] sm:$0xff]
  %v1264 = vld [vmem:[#allocation3 + $0x1e6] sm:$0xff]
  %v1265 = vld [vmem:[#allocation3 + $0x1ee] sm:$0xff]
  %v1266 = vlaneseq
  %v1267 = vshrl.u32 %v1266, 7
  %v1268 = vsub.s32 1, %v1267
  %v1269 = vrot.slane %v1162, %v1268
  %v1270 = vmul.f32 %v1234, %v1269
  %v1271 = vmul.f32 %v1235, %v1269
  %v1272 = vmul.f32 %v1236, %v1269
  %v1273 = vmul.f32 %v1237, %v1269
  %v1274 = vmul.f32 %v1238, %v1269
  %v1275 = vmul.f32 %v1239, %v1269
  %v1276 = vmul.f32 %v1240, %v1269
  %v1277 = vmul.f32 %v1241, %v1269
  %v1278 = vmul.f32 %v1242, %v1269
  %v1279 = vmul.f32 %v1243, %v1269
  %v1280 = vmul.f32 %v1244, %v1269
  %v1281 = vmul.f32 %v1245, %v1269
  %v1282 = vmul.f32 %v1246, %v1269
  %v1283 = vmul.f32 %v1247, %v1269
  %v1284 = vmul.f32 %v1248, %v1269
  %v1285 = vmul.f32 %v1249, %v1269
  %v1286 = vmul.f32 %v1250, %v1269
  %v1287 = vmul.f32 %v1251, %v1269
  %v1288 = vmul.f32 %v1252, %v1269
  %v1289 = vmul.f32 %v1253, %v1269
  %v1290 = vmul.f32 %v1254, %v1269
  %v1291 = vmul.f32 %v1255, %v1269
  %v1292 = vmul.f32 %v1256, %v1269
  %v1293 = vmul.f32 %v1257, %v1269
  %v1294 = vmul.f32 %v1258, %v1269
  %v1295 = vmul.f32 %v1259, %v1269
  %v1296 = vmul.f32 %v1260, %v1269
  %v1297 = vmul.f32 %v1261, %v1269
  %v1298 = vmul.f32 %v1262, %v1269
  %v1299 = vmul.f32 %v1263, %v1269
  %v1300 = vmul.f32 %v1264, %v1269
  %v1301 = vmul.f32 %v1265, %v1269
  %v1302 = vadd.f32 %v1202, %v1270
  %v1303 = vadd.f32 %v1203, %v1271
  %v1304 = vadd.f32 %v1204, %v1272
  %v1305 = vadd.f32 %v1205, %v1273
  %v1306 = vadd.f32 %v1206, %v1274
  %v1307 = vadd.f32 %v1207, %v1275
  %v1308 = vadd.f32 %v1208, %v1276
  %v1309 = vadd.f32 %v1209, %v1277
  %v1310 = vadd.f32 %v1210, %v1278
  %v1311 = vadd.f32 %v1211, %v1279
  %v1312 = vadd.f32 %v1212, %v1280
  %v1313 = vadd.f32 %v1213, %v1281
  %v1314 = vadd.f32 %v1214, %v1282
  %v1315 = vadd.f32 %v1215, %v1283
  %v1316 = vadd.f32 %v1216, %v1284
  %v1317 = vadd.f32 %v1217, %v1285
  %v1318 = vadd.f32 %v1218, %v1286
  %v1319 = vadd.f32 %v1219, %v1287
  %v1320 = vadd.f32 %v1220, %v1288
  %v1321 = vadd.f32 %v1221, %v1289
  %v1322 = vadd.f32 %v1222, %v1290
  %v1323 = vadd.f32 %v1223, %v1291
  %v1324 = vadd.f32 %v1224, %v1292
  %v1325 = vadd.f32 %v1225, %v1293
  %v1326 = vadd.f32 %v1226, %v1294
  %v1327 = vadd.f32 %v1227, %v1295
  %v1328 = vadd.f32 %v1228, %v1296
  %v1329 = vadd.f32 %v1229, %v1297
  %v1330 = vadd.f32 %v1230, %v1298
  %v1331 = vadd.f32 %v1231, %v1299
  %v1332 = vadd.f32 %v1232, %v1300
  %v1333 = vadd.f32 %v1233, %v1301
  %v1334 = vld [vmem:[#allocation3 + $0x8] sm:$0xff]
  %v1335 = vld [vmem:[#allocation3 + $0x10] sm:$0xff]
  %v1336 = vld [vmem:[#allocation3 + $0x28] sm:$0xff]
  %v1337 = vld [vmem:[#allocation3 + $0x30] sm:$0xff]
  %v1338 = vld [vmem:[#allocation3 + $0x48] sm:$0xff]
  %v1339 = vld [vmem:[#allocation3 + $0x50] sm:$0xff]
  %v1340 = vld [vmem:[#allocation3 + $0x68] sm:$0xff]
  %v1341 = vld [vmem:[#allocation3 + $0x70] sm:$0xff]
  %v1342 = vld [vmem:[#allocation3 + $0x88] sm:$0xff]
  %v1343 = vld [vmem:[#allocation3 + $0x90] sm:$0xff]
  %v1344 = vld [vmem:[#allocation3 + $0xa8] sm:$0xff]
  %v1345 = vld [vmem:[#allocation3 + $0xb0] sm:$0xff]
  %v1346 = vld [vmem:[#allocation3 + $0xc8] sm:$0xff]
  %v1347 = vld [vmem:[#allocation3 + $0xd0] sm:$0xff]
  %v1348 = vld [vmem:[#allocation3 + $0xe8] sm:$0xff]
  %v1349 = vld [vmem:[#allocation3 + $0xf0] sm:$0xff]
  %v1350 = vld [vmem:[#allocation3 + $0x108] sm:$0xff]
  %v1351 = vld [vmem:[#allocation3 + $0x110] sm:$0xff]
  %v1352 = vld [vmem:[#allocation3 + $0x128] sm:$0xff]
  %v1353 = vld [vmem:[#allocation3 + $0x130] sm:$0xff]
  %v1354 = vld [vmem:[#allocation3 + $0x148] sm:$0xff]
  %v1355 = vld [vmem:[#allocation3 + $0x150] sm:$0xff]
  %v1356 = vld [vmem:[#allocation3 + $0x168] sm:$0xff]
  %v1357 = vld [vmem:[#allocation3 + $0x170] sm:$0xff]
  %v1358 = vld [vmem:[#allocation3 + $0x188] sm:$0xff]
  %v1359 = vld [vmem:[#allocation3 + $0x190] sm:$0xff]
  %v1360 = vld [vmem:[#allocation3 + $0x1a8] sm:$0xff]
  %v1361 = vld [vmem:[#allocation3 + $0x1b0] sm:$0xff]
  %v1362 = vld [vmem:[#allocation3 + $0x1c8] sm:$0xff]
  %v1363 = vld [vmem:[#allocation3 + $0x1d0] sm:$0xff]
  %v1364 = vld [vmem:[#allocation3 + $0x1e8] sm:$0xff]
  %v1365 = vld [vmem:[#allocation3 + $0x1f0] sm:$0xff]
  %v1366 = vlaneseq
  %v1367 = vshrl.u32 %v1366, 7
  %v1368 = vsub.s32 2, %v1367
  %v1369 = vrot.slane %v1162, %v1368
  %v1370 = vmul.f32 %v1334, %v1369
  %v1371 = vmul.f32 %v1335, %v1369
  %v1372 = vmul.f32 %v1336, %v1369
  %v1373 = vmul.f32 %v1337, %v1369
  %v1374 = vmul.f32 %v1338, %v1369
  %v1375 = vmul.f32 %v1339, %v1369
  %v1376 = vmul.f32 %v1340, %v1369
  %v1377 = vmul.f32 %v1341, %v1369
  %v1378 = vmul.f32 %v1342, %v1369
  %v1379 = vmul.f32 %v1343, %v1369
  %v1380 = vmul.f32 %v1344, %v1369
  %v1381 = vmul.f32 %v1345, %v1369
  %v1382 = vmul.f32 %v1346, %v1369
  %v1383 = vmul.f32 %v1347, %v1369
  %v1384 = vmul.f32 %v1348, %v1369
  %v1385 = vmul.f32 %v1349, %v1369
  %v1386 = vmul.f32 %v1350, %v1369
  %v1387 = vmul.f32 %v1351, %v1369
  %v1388 = vmul.f32 %v1352, %v1369
  %v1389 = vmul.f32 %v1353, %v1369
  %v1390 = vmul.f32 %v1354, %v1369
  %v1391 = vmul.f32 %v1355, %v1369
  %v1392 = vmul.f32 %v1356, %v1369
  %v1393 = vmul.f32 %v1357, %v1369
  %v1394 = vmul.f32 %v1358, %v1369
  %v1395 = vmul.f32 %v1359, %v1369
  %v1396 = vmul.f32 %v1360, %v1369
  %v1397 = vmul.f32 %v1361, %v1369
  %v1398 = vmul.f32 %v1362, %v1369
  %v1399 = vmul.f32 %v1363, %v1369
  %v1400 = vmul.f32 %v1364, %v1369
  %v1401 = vmul.f32 %v1365, %v1369
  %v1402 = vadd.f32 %v1302, %v1370
  %v1403 = vadd.f32 %v1303, %v1371
  %v1404 = vadd.f32 %v1304, %v1372
  %v1405 = vadd.f32 %v1305, %v1373
  %v1406 = vadd.f32 %v1306, %v1374
  %v1407 = vadd.f32 %v1307, %v1375
  %v1408 = vadd.f32 %v1308, %v1376
  %v1409 = vadd.f32 %v1309, %v1377
  %v1410 = vadd.f32 %v1310, %v1378
  %v1411 = vadd.f32 %v1311, %v1379
  %v1412 = vadd.f32 %v1312, %v1380
  %v1413 = vadd.f32 %v1313, %v1381
  %v1414 = vadd.f32 %v1314, %v1382
  %v1415 = vadd.f32 %v1315, %v1383
  %v1416 = vadd.f32 %v1316, %v1384
  %v1417 = vadd.f32 %v1317, %v1385
  %v1418 = vadd.f32 %v1318, %v1386
  %v1419 = vadd.f32 %v1319, %v1387
  %v1420 = vadd.f32 %v1320, %v1388
  %v1421 = vadd.f32 %v1321, %v1389
  %v1422 = vadd.f32 %v1322, %v1390
  %v1423 = vadd.f32 %v1323, %v1391
  %v1424 = vadd.f32 %v1324, %v1392
  %v1425 = vadd.f32 %v1325, %v1393
  %v1426 = vadd.f32 %v1326, %v1394
  %v1427 = vadd.f32 %v1327, %v1395
  %v1428 = vadd.f32 %v1328, %v1396
  %v1429 = vadd.f32 %v1329, %v1397
  %v1430 = vadd.f32 %v1330, %v1398
  %v1431 = vadd.f32 %v1331, %v1399
  %v1432 = vadd.f32 %v1332, %v1400
  %v1433 = vadd.f32 %v1333, %v1401
  %v1434 = vld [vmem:[#allocation3 + $0xa] sm:$0xff]
  %v1435 = vld [vmem:[#allocation3 + $0x12] sm:$0xff]
  %v1436 = vld [vmem:[#allocation3 + $0x2a] sm:$0xff]
  %v1437 = vld [vmem:[#allocation3 + $0x32] sm:$0xff]
  %v1438 = vld [vmem:[#allocation3 + $0x4a] sm:$0xff]
  %v1439 = vld [vmem:[#allocation3 + $0x52] sm:$0xff]
  %v1440 = vld [vmem:[#allocation3 + $0x6a] sm:$0xff]
  %v1441 = vld [vmem:[#allocation3 + $0x72] sm:$0xff]
  %v1442 = vld [vmem:[#allocation3 + $0x8a] sm:$0xff]
  %v1443 = vld [vmem:[#allocation3 + $0x92] sm:$0xff]
  %v1444 = vld [vmem:[#allocation3 + $0xaa] sm:$0xff]
  %v1445 = vld [vmem:[#allocation3 + $0xb2] sm:$0xff]
  %v1446 = vld [vmem:[#allocation3 + $0xca] sm:$0xff]
  %v1447 = vld [vmem:[#allocation3 + $0xd2] sm:$0xff]
  %v1448 = vld [vmem:[#allocation3 + $0xea] sm:$0xff]
  %v1449 = vld [vmem:[#allocation3 + $0xf2] sm:$0xff]
  %v1450 = vld [vmem:[#allocation3 + $0x10a] sm:$0xff]
  %v1451 = vld [vmem:[#allocation3 + $0x112] sm:$0xff]
  %v1452 = vld [vmem:[#allocation3 + $0x12a] sm:$0xff]
  %v1453 = vld [vmem:[#allocation3 + $0x132] sm:$0xff]
  %v1454 = vld [vmem:[#allocation3 + $0x14a] sm:$0xff]
  %v1455 = vld [vmem:[#allocation3 + $0x152] sm:$0xff]
  %v1456 = vld [vmem:[#allocation3 + $0x16a] sm:$0xff]
  %v1457 = vld [vmem:[#allocation3 + $0x172] sm:$0xff]
  %v1458 = vld [vmem:[#allocation3 + $0x18a] sm:$0xff]
  %v1459 = vld [vmem:[#allocation3 + $0x192] sm:$0xff]
  %v1460 = vld [vmem:[#allocation3 + $0x1aa] sm:$0xff]
  %v1461 = vld [vmem:[#allocation3 + $0x1b2] sm:$0xff]
  %v1462 = vld [vmem:[#allocation3 + $0x1ca] sm:$0xff]
  %v1463 = vld [vmem:[#allocation3 + $0x1d2] sm:$0xff]
  %v1464 = vld [vmem:[#allocation3 + $0x1ea] sm:$0xff]
  %v1465 = vld [vmem:[#allocation3 + $0x1f2] sm:$0xff]
  %v1466 = vlaneseq
  %v1467 = vshrl.u32 %v1466, 7
  %v1468 = vsub.s32 3, %v1467
  %v1469 = vrot.slane %v1162, %v1468
  %v1470 = vmul.f32 %v1434, %v1469
  %v1471 = vmul.f32 %v1435, %v1469
  %v1472 = vmul.f32 %v1436, %v1469
  %v1473 = vmul.f32 %v1437, %v1469
  %v1474 = vmul.f32 %v1438, %v1469
  %v1475 = vmul.f32 %v1439, %v1469
  %v1476 = vmul.f32 %v1440, %v1469
  %v1477 = vmul.f32 %v1441, %v1469
  %v1478 = vmul.f32 %v1442, %v1469
  %v1479 = vmul.f32 %v1443, %v1469
  %v1480 = vmul.f32 %v1444, %v1469
  %v1481 = vmul.f32 %v1445, %v1469
  %v1482 = vmul.f32 %v1446, %v1469
  %v1483 = vmul.f32 %v1447, %v1469
  %v1484 = vmul.f32 %v1448, %v1469
  %v1485 = vmul.f32 %v1449, %v1469
  %v1486 = vmul.f32 %v1450, %v1469
  %v1487 = vmul.f32 %v1451, %v1469
  %v1488 = vmul.f32 %v1452, %v1469
  %v1489 = vmul.f32 %v1453, %v1469
  %v1490 = vmul.f32 %v1454, %v1469
  %v1491 = vmul.f32 %v1455, %v1469
  %v1492 = vmul.f32 %v1456, %v1469
  %v1493 = vmul.f32 %v1457, %v1469
  %v1494 = vmul.f32 %v1458, %v1469
  %v1495 = vmul.f32 %v1459, %v1469
  %v1496 = vmul.f32 %v1460, %v1469
  %v1497 = vmul.f32 %v1461, %v1469
  %v1498 = vmul.f32 %v1462, %v1469
  %v1499 = vmul.f32 %v1463, %v1469
  %v1500 = vmul.f32 %v1464, %v1469
  %v1501 = vmul.f32 %v1465, %v1469
  %v1502 = vadd.f32 %v1402, %v1470
  %v1503 = vadd.f32 %v1403, %v1471
  %v1504 = vadd.f32 %v1404, %v1472
  %v1505 = vadd.f32 %v1405, %v1473
  %v1506 = vadd.f32 %v1406, %v1474
  %v1507 = vadd.f32 %v1407, %v1475
  %v1508 = vadd.f32 %v1408, %v1476
  %v1509 = vadd.f32 %v1409, %v1477
  %v1510 = vadd.f32 %v1410, %v1478
  %v1511 = vadd.f32 %v1411, %v1479
  %v1512 = vadd.f32 %v1412, %v1480
  %v1513 = vadd.f32 %v1413, %v1481
  %v1514 = vadd.f32 %v1414, %v1482
  %v1515 = vadd.f32 %v1415, %v1483
  %v1516 = vadd.f32 %v1416, %v1484
  %v1517 = vadd.f32 %v1417, %v1485
  %v1518 = vadd.f32 %v1418, %v1486
  %v1519 = vadd.f32 %v1419, %v1487
  %v1520 = vadd.f32 %v1420, %v1488
  %v1521 = vadd.f32 %v1421, %v1489
  %v1522 = vadd.f32 %v1422, %v1490
  %v1523 = vadd.f32 %v1423, %v1491
  %v1524 = vadd.f32 %v1424, %v1492
  %v1525 = vadd.f32 %v1425, %v1493
  %v1526 = vadd.f32 %v1426, %v1494
  %v1527 = vadd.f32 %v1427, %v1495
  %v1528 = vadd.f32 %v1428, %v1496
  %v1529 = vadd.f32 %v1429, %v1497
  %v1530 = vadd.f32 %v1430, %v1498
  %v1531 = vadd.f32 %v1431, %v1499
  %v1532 = vadd.f32 %v1432, %v1500
  %v1533 = vadd.f32 %v1433, %v1501
  %v1534 = vld [vmem:[#allocation3 + $0x14] sm:$0xff]
  %v1535 = vld [vmem:[#allocation3 + $0x34] sm:$0xff]
  %v1536 = vld [vmem:[#allocation3 + $0x54] sm:$0xff]
  %v1537 = vld [vmem:[#allocation3 + $0x74] sm:$0xff]
  %v1538 = vld [vmem:[#allocation3 + $0x94] sm:$0xff]
  %v1539 = vld [vmem:[#allocation3 + $0xb4] sm:$0xff]
  %v1540 = vld [vmem:[#allocation3 + $0xd4] sm:$0xff]
  %v1541 = vld [vmem:[#allocation3 + $0xf4] sm:$0xff]
  %v1542 = vld [vmem:[#allocation3 + $0x114] sm:$0xff]
  %v1543 = vld [vmem:[#allocation3 + $0x134] sm:$0xff]
  %v1544 = vld [vmem:[#allocation3 + $0x154] sm:$0xff]
  %v1545 = vld [vmem:[#allocation3 + $0x174] sm:$0xff]
  %v1546 = vld [vmem:[#allocation3 + $0x194] sm:$0xff]
  %v1547 = vld [vmem:[#allocation3 + $0x1b4] sm:$0xff]
  %v1548 = vld [vmem:[#allocation3 + $0x1d4] sm:$0xff]
  %v1549 = vld [vmem:[#allocation3 + $0x1f4] sm:$0xff]
  %v1550 = vlaneseq
  %v1551 = vshrl.u32 %v1550, 7
  %v1552 = vsub.s32 4, %v1551
  %v1553 = vrot.slane %v1162, %v1552
  %v1554 = vmul.f32 %v1167, %v1553
  %v1555 = vmul.f32 %v1534, %v1553
  %v1556 = vmul.f32 %v1169, %v1553
  %v1557 = vmul.f32 %v1535, %v1553
  %v1558 = vmul.f32 %v1171, %v1553
  %v1559 = vmul.f32 %v1536, %v1553
  %v1560 = vmul.f32 %v1173, %v1553
  %v1561 = vmul.f32 %v1537, %v1553
  %v1562 = vmul.f32 %v1175, %v1553
  %v1563 = vmul.f32 %v1538, %v1553
  %v1564 = vmul.f32 %v1177, %v1553
  %v1565 = vmul.f32 %v1539, %v1553
  %v1566 = vmul.f32 %v1179, %v1553
  %v1567 = vmul.f32 %v1540, %v1553
  %v1568 = vmul.f32 %v1181, %v1553
  %v1569 = vmul.f32 %v1541, %v1553
  %v1570 = vmul.f32 %v1183, %v1553
  %v1571 = vmul.f32 %v1542, %v1553
  %v1572 = vmul.f32 %v1185, %v1553
  %v1573 = vmul.f32 %v1543, %v1553
  %v1574 = vmul.f32 %v1187, %v1553
  %v1575 = vmul.f32 %v1544, %v1553
  %v1576 = vmul.f32 %v1189, %v1553
  %v1577 = vmul.f32 %v1545, %v1553
  %v1578 = vmul.f32 %v1191, %v1553
  %v1579 = vmul.f32 %v1546, %v1553
  %v1580 = vmul.f32 %v1193, %v1553
  %v1581 = vmul.f32 %v1547, %v1553
  %v1582 = vmul.f32 %v1195, %v1553
  %v1583 = vmul.f32 %v1548, %v1553
  %v1584 = vmul.f32 %v1197, %v1553
  %v1585 = vmul.f32 %v1549, %v1553
  %v1586 = vadd.f32 %v1502, %v1554
  %v1587 = vadd.f32 %v1503, %v1555
  %v1588 = vadd.f32 %v1504, %v1556
  %v1589 = vadd.f32 %v1505, %v1557
  %v1590 = vadd.f32 %v1506, %v1558
  %v1591 = vadd.f32 %v1507, %v1559
  %v1592 = vadd.f32 %v1508, %v1560
  %v1593 = vadd.f32 %v1509, %v1561
  %v1594 = vadd.f32 %v1510, %v1562
  %v1595 = vadd.f32 %v1511, %v1563
  %v1596 = vadd.f32 %v1512, %v1564
  %v1597 = vadd.f32 %v1513, %v1565
  %v1598 = vadd.f32 %v1514, %v1566
  %v1599 = vadd.f32 %v1515, %v1567
  %v1600 = vadd.f32 %v1516, %v1568
  %v1601 = vadd.f32 %v1517, %v1569
  %v1602 = vadd.f32 %v1518, %v1570
  %v1603 = vadd.f32 %v1519, %v1571
  %v1604 = vadd.f32 %v1520, %v1572
  %v1605 = vadd.f32 %v1521, %v1573
  %v1606 = vadd.f32 %v1522, %v1574
  %v1607 = vadd.f32 %v1523, %v1575
  %v1608 = vadd.f32 %v1524, %v1576
  %v1609 = vadd.f32 %v1525, %v1577
  %v1610 = vadd.f32 %v1526, %v1578
  %v1611 = vadd.f32 %v1527, %v1579
  %v1612 = vadd.f32 %v1528, %v1580
  %v1613 = vadd.f32 %v1529, %v1581
  %v1614 = vadd.f32 %v1530, %v1582
  %v1615 = vadd.f32 %v1531, %v1583
  %v1616 = vadd.f32 %v1532, %v1584
  %v1617 = vadd.f32 %v1533, %v1585
  %s1618 = scalar_lea.vmem [#allocation3], 64
  %v1619 = vld [vmem:[%s1618 + $0x4] sm:$0xff]
  %v1620 = vld [vmem:[%s1618 + $0xc] sm:$0xff]
  %v1621 = vld [vmem:[%s1618 + $0x24] sm:$0xff]
  %v1622 = vld [vmem:[%s1618 + $0x2c] sm:$0xff]
  %v1623 = vld [vmem:[%s1618 + $0x44] sm:$0xff]
  %v1624 = vld [vmem:[%s1618 + $0x4c] sm:$0xff]
  %v1625 = vld [vmem:[%s1618 + $0x64] sm:$0xff]
  %v1626 = vld [vmem:[%s1618 + $0x6c] sm:$0xff]
  %v1627 = vld [vmem:[%s1618 + $0x84] sm:$0xff]
  %v1628 = vld [vmem:[%s1618 + $0x8c] sm:$0xff]
  %v1629 = vld [vmem:[%s1618 + $0xa4] sm:$0xff]
  %v1630 = vld [vmem:[%s1618 + $0xac] sm:$0xff]
  %v1631 = vld [vmem:[%s1618 + $0xc4] sm:$0xff]
  %v1632 = vld [vmem:[%s1618 + $0xcc] sm:$0xff]
  %v1633 = vld [vmem:[%s1618 + $0xe4] sm:$0xff]
  %v1634 = vld [vmem:[%s1618 + $0xec] sm:$0xff]
  %v1635 = vld [vmem:[%s1618 + $0x104] sm:$0xff]
  %v1636 = vld [vmem:[%s1618 + $0x10c] sm:$0xff]
  %v1637 = vld [vmem:[%s1618 + $0x124] sm:$0xff]
  %v1638 = vld [vmem:[%s1618 + $0x12c] sm:$0xff]
  %v1639 = vld [vmem:[%s1618 + $0x144] sm:$0xff]
  %v1640 = vld [vmem:[%s1618 + $0x14c] sm:$0xff]
  %v1641 = vld [vmem:[%s1618 + $0x164] sm:$0xff]
  %v1642 = vld [vmem:[%s1618 + $0x16c] sm:$0xff]
  %v1643 = vld [vmem:[%s1618 + $0x184] sm:$0xff]
  %v1644 = vld [vmem:[%s1618 + $0x18c] sm:$0xff]
  %v1645 = vld [vmem:[%s1618 + $0x1a4] sm:$0xff]
  %v1646 = vld [vmem:[%s1618 + $0x1ac] sm:$0xff]
  %v1647 = vld [vmem:[%s1618 + $0x1c4] sm:$0xff]
  %v1648 = vld [vmem:[%s1618 + $0x1cc] sm:$0xff]
  %v1649 = vld [vmem:[%s1618 + $0x1e4] sm:$0xff]
  %v1650 = vld [vmem:[%s1618 + $0x1ec] sm:$0xff]
  %v1651 = vlaneseq
  %v1652 = vshrl.u32 %v1651, 7
  %v1653 = vsub.s32 5, %v1652
  %v1654 = vrot.slane %v1162, %v1653
  %v1655 = vmul.f32 %v1619, %v1654
  %v1656 = vmul.f32 %v1620, %v1654
  %v1657 = vmul.f32 %v1621, %v1654
  %v1658 = vmul.f32 %v1622, %v1654
  %v1659 = vmul.f32 %v1623, %v1654
  %v1660 = vmul.f32 %v1624, %v1654
  %v1661 = vmul.f32 %v1625, %v1654
  %v1662 = vmul.f32 %v1626, %v1654
  %v1663 = vmul.f32 %v1627, %v1654
  %v1664 = vmul.f32 %v1628, %v1654
  %v1665 = vmul.f32 %v1629, %v1654
  %v1666 = vmul.f32 %v1630, %v1654
  %v1667 = vmul.f32 %v1631, %v1654
  %v1668 = vmul.f32 %v1632, %v1654
  %v1669 = vmul.f32 %v1633, %v1654
  %v1670 = vmul.f32 %v1634, %v1654
  %v1671 = vmul.f32 %v1635, %v1654
  %v1672 = vmul.f32 %v1636, %v1654
  %v1673 = vmul.f32 %v1637, %v1654
  %v1674 = vmul.f32 %v1638, %v1654
  %v1675 = vmul.f32 %v1639, %v1654
  %v1676 = vmul.f32 %v1640, %v1654
  %v1677 = vmul.f32 %v1641, %v1654
  %v1678 = vmul.f32 %v1642, %v1654
  %v1679 = vmul.f32 %v1643, %v1654
  %v1680 = vmul.f32 %v1644, %v1654
  %v1681 = vmul.f32 %v1645, %v1654
  %v1682 = vmul.f32 %v1646, %v1654
  %v1683 = vmul.f32 %v1647, %v1654
  %v1684 = vmul.f32 %v1648, %v1654
  %v1685 = vmul.f32 %v1649, %v1654
  %v1686 = vmul.f32 %v1650, %v1654
  %v1687 = vadd.f32 %v1586, %v1655
  %v1688 = vadd.f32 %v1587, %v1656
  %v1689 = vadd.f32 %v1588, %v1657
  %v1690 = vadd.f32 %v1589, %v1658
  %v1691 = vadd.f32 %v1590, %v1659
  %v1692 = vadd.f32 %v1591, %v1660
  %v1693 = vadd.f32 %v1592, %v1661
  %v1694 = vadd.f32 %v1593, %v1662
  %v1695 = vadd.f32 %v1594, %v1663
  %v1696 = vadd.f32 %v1595, %v1664
  %v1697 = vadd.f32 %v1596, %v1665
  %v1698 = vadd.f32 %v1597, %v1666
  %v1699 = vadd.f32 %v1598, %v1667
  %v1700 = vadd.f32 %v1599, %v1668
  %v1701 = vadd.f32 %v1600, %v1669
  %v1702 = vadd.f32 %v1601, %v1670
  %v1703 = vadd.f32 %v1602, %v1671
  %v1704 = vadd.f32 %v1603, %v1672
  %v1705 = vadd.f32 %v1604, %v1673
  %v1706 = vadd.f32 %v1605, %v1674
  %v1707 = vadd.f32 %v1606, %v1675
  %v1708 = vadd.f32 %v1607, %v1676
  %v1709 = vadd.f32 %v1608, %v1677
  %v1710 = vadd.f32 %v1609, %v1678
  %v1711 = vadd.f32 %v1610, %v1679
  %v1712 = vadd.f32 %v1611, %v1680
  %v1713 = vadd.f32 %v1612, %v1681
  %v1714 = vadd.f32 %v1613, %v1682
  %v1715 = vadd.f32 %v1614, %v1683
  %v1716 = vadd.f32 %v1615, %v1684
  %v1717 = vadd.f32 %v1616, %v1685
  %v1718 = vadd.f32 %v1617, %v1686
  %v1719 = vld [vmem:[%s1618 + $0x6] sm:$0xff]
  %v1720 = vld [vmem:[%s1618 + $0xe] sm:$0xff]
  %v1721 = vld [vmem:[%s1618 + $0x26] sm:$0xff]
  %v1722 = vld [vmem:[%s1618 + $0x2e] sm:$0xff]
  %v1723 = vld [vmem:[%s1618 + $0x46] sm:$0xff]
  %v1724 = vld [vmem:[%s1618 + $0x4e] sm:$0xff]
  %v1725 = vld [vmem:[%s1618 + $0x66] sm:$0xff]
  %v1726 = vld [vmem:[%s1618 + $0x6e] sm:$0xff]
  %v1727 = vld [vmem:[%s1618 + $0x86] sm:$0xff]
  %v1728 = vld [vmem:[%s1618 + $0x8e] sm:$0xff]
  %v1729 = vld [vmem:[%s1618 + $0xa6] sm:$0xff]
  %v1730 = vld [vmem:[%s1618 + $0xae] sm:$0xff]
  %v1731 = vld [vmem:[%s1618 + $0xc6] sm:$0xff]
  %v1732 = vld [vmem:[%s1618 + $0xce] sm:$0xff]
  %v1733 = vld [vmem:[%s1618 + $0xe6] sm:$0xff]
  %v1734 = vld [vmem:[%s1618 + $0xee] sm:$0xff]
  %v1735 = vld [vmem:[%s1618 + $0x106] sm:$0xff]
  %v1736 = vld [vmem:[%s1618 + $0x10e] sm:$0xff]
  %v1737 = vld [vmem:[%s1618 + $0x126] sm:$0xff]
  %v1738 = vld [vmem:[%s1618 + $0x12e] sm:$0xff]
  %v1739 = vld [vmem:[%s1618 + $0x146] sm:$0xff]
  %v1740 = vld [vmem:[%s1618 + $0x14e] sm:$0xff]
  %v1741 = vld [vmem:[%s1618 + $0x166] sm:$0xff]
  %v1742 = vld [vmem:[%s1618 + $0x16e] sm:$0xff]
  %v1743 = vld [vmem:[%s1618 + $0x186] sm:$0xff]
  %v1744 = vld [vmem:[%s1618 + $0x18e] sm:$0xff]
  %v1745 = vld [vmem:[%s1618 + $0x1a6] sm:$0xff]
  %v1746 = vld [vmem:[%s1618 + $0x1ae] sm:$0xff]
  %v1747 = vld [vmem:[%s1618 + $0x1c6] sm:$0xff]
  %v1748 = vld [vmem:[%s1618 + $0x1ce] sm:$0xff]
  %v1749 = vld [vmem:[%s1618 + $0x1e6] sm:$0xff]
  %v1750 = vld [vmem:[%s1618 + $0x1ee] sm:$0xff]
  %v1751 = vlaneseq
  %v1752 = vshrl.u32 %v1751, 7
  %v1753 = vsub.s32 6, %v1752
  %v1754 = vrot.slane %v1162, %v1753
  %v1755 = vmul.f32 %v1719, %v1754
  %v1756 = vmul.f32 %v1720, %v1754
  %v1757 = vmul.f32 %v1721, %v1754
  %v1758 = vmul.f32 %v1722, %v1754
  %v1759 = vmul.f32 %v1723, %v1754
  %v1760 = vmul.f32 %v1724, %v1754
  %v1761 = vmul.f32 %v1725, %v1754
  %v1762 = vmul.f32 %v1726, %v1754
  %v1763 = vmul.f32 %v1727, %v1754
  %v1764 = vmul.f32 %v1728, %v1754
  %v1765 = vmul.f32 %v1729, %v1754
  %v1766 = vmul.f32 %v1730, %v1754
  %v1767 = vmul.f32 %v1731, %v1754
  %v1768 = vmul.f32 %v1732, %v1754
  %v1769 = vmul.f32 %v1733, %v1754
  %v1770 = vmul.f32 %v1734, %v1754
  %v1771 = vmul.f32 %v1735, %v1754
  %v1772 = vmul.f32 %v1736, %v1754
  %v1773 = vmul.f32 %v1737, %v1754
  %v1774 = vmul.f32 %v1738, %v1754
  %v1775 = vmul.f32 %v1739, %v1754
  %v1776 = vmul.f32 %v1740, %v1754
  %v1777 = vmul.f32 %v1741, %v1754
  %v1778 = vmul.f32 %v1742, %v1754
  %v1779 = vmul.f32 %v1743, %v1754
  %v1780 = vmul.f32 %v1744, %v1754
  %v1781 = vmul.f32 %v1745, %v1754
  %v1782 = vmul.f32 %v1746, %v1754
  %v1783 = vmul.f32 %v1747, %v1754
  %v1784 = vmul.f32 %v1748, %v1754
  %v1785 = vmul.f32 %v1749, %v1754
  %v1786 = vmul.f32 %v1750, %v1754
  %v1787 = vadd.f32 %v1687, %v1755
  %v1788 = vadd.f32 %v1688, %v1756
  %v1789 = vadd.f32 %v1689, %v1757
  %v1790 = vadd.f32 %v1690, %v1758
  %v1791 = vadd.f32 %v1691, %v1759
  %v1792 = vadd.f32 %v1692, %v1760
  %v1793 = vadd.f32 %v1693, %v1761
  %v1794 = vadd.f32 %v1694, %v1762
  %v1795 = vadd.f32 %v1695, %v1763
  %v1796 = vadd.f32 %v1696, %v1764
  %v1797 = vadd.f32 %v1697, %v1765
  %v1798 = vadd.f32 %v1698, %v1766
  %v1799 = vadd.f32 %v1699, %v1767
  %v1800 = vadd.f32 %v1700, %v1768
  %v1801 = vadd.f32 %v1701, %v1769
  %v1802 = vadd.f32 %v1702, %v1770
  %v1803 = vadd.f32 %v1703, %v1771
  %v1804 = vadd.f32 %v1704, %v1772
  %v1805 = vadd.f32 %v1705, %v1773
  %v1806 = vadd.f32 %v1706, %v1774
  %v1807 = vadd.f32 %v1707, %v1775
  %v1808 = vadd.f32 %v1708, %v1776
  %v1809 = vadd.f32 %v1709, %v1777
  %v1810 = vadd.f32 %v1710, %v1778
  %v1811 = vadd.f32 %v1711, %v1779
  %v1812 = vadd.f32 %v1712, %v1780
  %v1813 = vadd.f32 %v1713, %v1781
  %v1814 = vadd.f32 %v1714, %v1782
  %v1815 = vadd.f32 %v1715, %v1783
  %v1816 = vadd.f32 %v1716, %v1784
  %v1817 = vadd.f32 %v1717, %v1785
  %v1818 = vadd.f32 %v1718, %v1786
  %v1819 = vld [vmem:[%s1618 + $0x8] sm:$0xff]
  %v1820 = vld [vmem:[%s1618 + $0x10] sm:$0xff]
  %v1821 = vld [vmem:[%s1618 + $0x28] sm:$0xff]
  %v1822 = vld [vmem:[%s1618 + $0x30] sm:$0xff]
  %v1823 = vld [vmem:[%s1618 + $0x48] sm:$0xff]
  %v1824 = vld [vmem:[%s1618 + $0x50] sm:$0xff]
  %v1825 = vld [vmem:[%s1618 + $0x68] sm:$0xff]
  %v1826 = vld [vmem:[%s1618 + $0x70] sm:$0xff]
  %v1827 = vld [vmem:[%s1618 + $0x88] sm:$0xff]
  %v1828 = vld [vmem:[%s1618 + $0x90] sm:$0xff]
  %v1829 = vld [vmem:[%s1618 + $0xa8] sm:$0xff]
  %v1830 = vld [vmem:[%s1618 + $0xb0] sm:$0xff]
  %v1831 = vld [vmem:[%s1618 + $0xc8] sm:$0xff]
  %v1832 = vld [vmem:[%s1618 + $0xd0] sm:$0xff]
  %v1833 = vld [vmem:[%s1618 + $0xe8] sm:$0xff]
  %v1834 = vld [vmem:[%s1618 + $0xf0] sm:$0xff]
  %v1835 = vld [vmem:[%s1618 + $0x108] sm:$0xff]
  %v1836 = vld [vmem:[%s1618 + $0x110] sm:$0xff]
  %v1837 = vld [vmem:[%s1618 + $0x128] sm:$0xff]
  %v1838 = vld [vmem:[%s1618 + $0x130] sm:$0xff]
  %v1839 = vld [vmem:[%s1618 + $0x148] sm:$0xff]
  %v1840 = vld [vmem:[%s1618 + $0x150] sm:$0xff]
  %v1841 = vld [vmem:[%s1618 + $0x168] sm:$0xff]
  %v1842 = vld [vmem:[%s1618 + $0x170] sm:$0xff]
  %v1843 = vld [vmem:[%s1618 + $0x188] sm:$0xff]
  %v1844 = vld [vmem:[%s1618 + $0x190] sm:$0xff]
  %v1845 = vld [vmem:[%s1618 + $0x1a8] sm:$0xff]
  %v1846 = vld [vmem:[%s1618 + $0x1b0] sm:$0xff]
  %v1847 = vld [vmem:[%s1618 + $0x1c8] sm:$0xff]
  %v1848 = vld [vmem:[%s1618 + $0x1d0] sm:$0xff]
  %v1849 = vld [vmem:[%s1618 + $0x1e8] sm:$0xff]
  %v1850 = vld [vmem:[%s1618 + $0x1f0] sm:$0xff]
  %v1851 = vlaneseq
  %v1852 = vshrl.u32 %v1851, 7
  %v1853 = vsub.s32 7, %v1852
  %v1854 = vrot.slane %v1162, %v1853
  %v1855 = vmul.f32 %v1819, %v1854
  %v1856 = vmul.f32 %v1820, %v1854
  %v1857 = vmul.f32 %v1821, %v1854
  %v1858 = vmul.f32 %v1822, %v1854
  %v1859 = vmul.f32 %v1823, %v1854
  %v1860 = vmul.f32 %v1824, %v1854
  %v1861 = vmul.f32 %v1825, %v1854
  %v1862 = vmul.f32 %v1826, %v1854
  %v1863 = vmul.f32 %v1827, %v1854
  %v1864 = vmul.f32 %v1828, %v1854
  %v1865 = vmul.f32 %v1829, %v1854
  %v1866 = vmul.f32 %v1830, %v1854
  %v1867 = vmul.f32 %v1831, %v1854
  %v1868 = vmul.f32 %v1832, %v1854
  %v1869 = vmul.f32 %v1833, %v1854
  %v1870 = vmul.f32 %v1834, %v1854
  %v1871 = vmul.f32 %v1835, %v1854
  %v1872 = vmul.f32 %v1836, %v1854
  %v1873 = vmul.f32 %v1837, %v1854
  %v1874 = vmul.f32 %v1838, %v1854
  %v1875 = vmul.f32 %v1839, %v1854
  %v1876 = vmul.f32 %v1840, %v1854
  %v1877 = vmul.f32 %v1841, %v1854
  %v1878 = vmul.f32 %v1842, %v1854
  %v1879 = vmul.f32 %v1843, %v1854
  %v1880 = vmul.f32 %v1844, %v1854
  %v1881 = vmul.f32 %v1845, %v1854
  %v1882 = vmul.f32 %v1846, %v1854
  %v1883 = vmul.f32 %v1847, %v1854
  %v1884 = vmul.f32 %v1848, %v1854
  %v1885 = vmul.f32 %v1849, %v1854
  %v1886 = vmul.f32 %v1850, %v1854
  %v1887 = vadd.f32 %v1787, %v1855
  %v1888 = vadd.f32 %v1788, %v1856
  %v1889 = vadd.f32 %v1789, %v1857
  %v1890 = vadd.f32 %v1790, %v1858
  %v1891 = vadd.f32 %v1791, %v1859
  %v1892 = vadd.f32 %v1792, %v1860
  %v1893 = vadd.f32 %v1793, %v1861
  %v1894 = vadd.f32 %v1794, %v1862
  %v1895 = vadd.f32 %v1795, %v1863
  %v1896 = vadd.f32 %v1796, %v1864
  %v1897 = vadd.f32 %v1797, %v1865
  %v1898 = vadd.f32 %v1798, %v1866
  %v1899 = vadd.f32 %v1799, %v1867
  %v1900 = vadd.f32 %v1800, %v1868
  %v1901 = vadd.f32 %v1801, %v1869
  %v1902 = vadd.f32 %v1802, %v1870
  %v1903 = vadd.f32 %v1803, %v1871
  %v1904 = vadd.f32 %v1804, %v1872
  %v1905 = vadd.f32 %v1805, %v1873
  %v1906 = vadd.f32 %v1806, %v1874
  %v1907 = vadd.f32 %v1807, %v1875
  %v1908 = vadd.f32 %v1808, %v1876
  %v1909 = vadd.f32 %v1809, %v1877
  %v1910 = vadd.f32 %v1810, %v1878
  %v1911 = vadd.f32 %v1811, %v1879
  %v1912 = vadd.f32 %v1812, %v1880
  %v1913 = vadd.f32 %v1813, %v1881
  %v1914 = vadd.f32 %v1814, %v1882
  %v1915 = vadd.f32 %v1815, %v1883
  %v1916 = vadd.f32 %v1816, %v1884
  %v1917 = vadd.f32 %v1817, %v1885
  %v1918 = vadd.f32 %v1818, %v1886
  %v1919 = vld [vmem:[%s1618 + $0xa] sm:$0xff]
  %v1920 = vld [vmem:[%s1618 + $0x12] sm:$0xff]
  %v1921 = vld [vmem:[%s1618 + $0x2a] sm:$0xff]
  %v1922 = vld [vmem:[%s1618 + $0x32] sm:$0xff]
  %v1923 = vld [vmem:[%s1618 + $0x4a] sm:$0xff]
  %v1924 = vld [vmem:[%s1618 + $0x52] sm:$0xff]
  %v1925 = vld [vmem:[%s1618 + $0x6a] sm:$0xff]
  %v1926 = vld [vmem:[%s1618 + $0x72] sm:$0xff]
  %v1927 = vld [vmem:[%s1618 + $0x8a] sm:$0xff]
  %v1928 = vld [vmem:[%s1618 + $0x92] sm:$0xff]
  %v1929 = vld [vmem:[%s1618 + $0xaa] sm:$0xff]
  %v1930 = vld [vmem:[%s1618 + $0xb2] sm:$0xff]
  %v1931 = vld [vmem:[%s1618 + $0xca] sm:$0xff]
  %v1932 = vld [vmem:[%s1618 + $0xd2] sm:$0xff]
  %v1933 = vld [vmem:[%s1618 + $0xea] sm:$0xff]
  %v1934 = vld [vmem:[%s1618 + $0xf2] sm:$0xff]
  %v1935 = vld [vmem:[%s1618 + $0x10a] sm:$0xff]
  %v1936 = vld [vmem:[%s1618 + $0x112] sm:$0xff]
  %v1937 = vld [vmem:[%s1618 + $0x12a] sm:$0xff]
  %v1938 = vld [vmem:[%s1618 + $0x132] sm:$0xff]
  %v1939 = vld [vmem:[%s1618 + $0x14a] sm:$0xff]
  %v1940 = vld [vmem:[%s1618 + $0x152] sm:$0xff]
  %v1941 = vld [vmem:[%s1618 + $0x16a] sm:$0xff]
  %v1942 = vld [vmem:[%s1618 + $0x172] sm:$0xff]
  %v1943 = vld [vmem:[%s1618 + $0x18a] sm:$0xff]
  %v1944 = vld [vmem:[%s1618 + $0x192] sm:$0xff]
  %v1945 = vld [vmem:[%s1618 + $0x1aa] sm:$0xff]
  %v1946 = vld [vmem:[%s1618 + $0x1b2] sm:$0xff]
  %v1947 = vld [vmem:[%s1618 + $0x1ca] sm:$0xff]
  %v1948 = vld [vmem:[%s1618 + $0x1d2] sm:$0xff]
  %v1949 = vld [vmem:[%s1618 + $0x1ea] sm:$0xff]
  %v1950 = vld [vmem:[%s1618 + $0x1f2] sm:$0xff]
  %v1951 = vlaneseq
  %v1952 = vshrl.u32 %v1951, 7
  %v1953 = vsub.s32 0, %v1952
  %v1954 = vrot.slane %v1163, %v1953
  %v1955 = vmul.f32 %v1919, %v1954
  %v1956 = vmul.f32 %v1920, %v1954
  %v1957 = vmul.f32 %v1921, %v1954
  %v1958 = vmul.f32 %v1922, %v1954
  %v1959 = vmul.f32 %v1923, %v1954
  %v1960 = vmul.f32 %v1924, %v1954
  %v1961 = vmul.f32 %v1925, %v1954
  %v1962 = vmul.f32 %v1926, %v1954
  %v1963 = vmul.f32 %v1927, %v1954
  %v1964 = vmul.f32 %v1928, %v1954
  %v1965 = vmul.f32 %v1929, %v1954
  %v1966 = vmul.f32 %v1930, %v1954
  %v1967 = vmul.f32 %v1931, %v1954
  %v1968 = vmul.f32 %v1932, %v1954
  %v1969 = vmul.f32 %v1933, %v1954
  %v1970 = vmul.f32 %v1934, %v1954
  %v1971 = vmul.f32 %v1935, %v1954
  %v1972 = vmul.f32 %v1936, %v1954
  %v1973 = vmul.f32 %v1937, %v1954
  %v1974 = vmul.f32 %v1938, %v1954
  %v1975 = vmul.f32 %v1939, %v1954
  %v1976 = vmul.f32 %v1940, %v1954
  %v1977 = vmul.f32 %v1941, %v1954
  %v1978 = vmul.f32 %v1942, %v1954
  %v1979 = vmul.f32 %v1943, %v1954
  %v1980 = vmul.f32 %v1944, %v1954
  %v1981 = vmul.f32 %v1945, %v1954
  %v1982 = vmul.f32 %v1946, %v1954
  %v1983 = vmul.f32 %v1947, %v1954
  %v1984 = vmul.f32 %v1948, %v1954
  %v1985 = vmul.f32 %v1949, %v1954
  %v1986 = vmul.f32 %v1950, %v1954
  %v1987 = vadd.f32 %v1887, %v1955
  %v1988 = vadd.f32 %v1888, %v1956
  %v1989 = vadd.f32 %v1889, %v1957
  %v1990 = vadd.f32 %v1890, %v1958
  %v1991 = vadd.f32 %v1891, %v1959
  %v1992 = vadd.f32 %v1892, %v1960
  %v1993 = vadd.f32 %v1893, %v1961
  %v1994 = vadd.f32 %v1894, %v1962
  %v1995 = vadd.f32 %v1895, %v1963
  %v1996 = vadd.f32 %v1896, %v1964
  %v1997 = vadd.f32 %v1897, %v1965
  %v1998 = vadd.f32 %v1898, %v1966
  %v1999 = vadd.f32 %v1899, %v1967
  %v2000 = vadd.f32 %v1900, %v1968
  %v2001 = vadd.f32 %v1901, %v1969
  %v2002 = vadd.f32 %v1902, %v1970
  %v2003 = vadd.f32 %v1903, %v1971
  %v2004 = vadd.f32 %v1904, %v1972
  %v2005 = vadd.f32 %v1905, %v1973
  %v2006 = vadd.f32 %v1906, %v1974
  %v2007 = vadd.f32 %v1907, %v1975
  %v2008 = vadd.f32 %v1908, %v1976
  %v2009 = vadd.f32 %v1909, %v1977
  %v2010 = vadd.f32 %v1910, %v1978
  %v2011 = vadd.f32 %v1911, %v1979
  %v2012 = vadd.f32 %v1912, %v1980
  %v2013 = vadd.f32 %v1913, %v1981
  %v2014 = vadd.f32 %v1914, %v1982
  %v2015 = vadd.f32 %v1915, %v1983
  %v2016 = vadd.f32 %v1916, %v1984
  %v2017 = vadd.f32 %v1917, %v1985
  %v2018 = vadd.f32 %v1918, %v1986
  %v2019 = vld [vmem:[%s1618 + $0x14] sm:$0xff]
  %v2020 = vld [vmem:[%s1618 + $0x34] sm:$0xff]
  %v2021 = vld [vmem:[%s1618 + $0x54] sm:$0xff]
  %v2022 = vld [vmem:[%s1618 + $0x74] sm:$0xff]
  %v2023 = vld [vmem:[%s1618 + $0x94] sm:$0xff]
  %v2024 = vld [vmem:[%s1618 + $0xb4] sm:$0xff]
  %v2025 = vld [vmem:[%s1618 + $0xd4] sm:$0xff]
  %v2026 = vld [vmem:[%s1618 + $0xf4] sm:$0xff]
  %v2027 = vld [vmem:[%s1618 + $0x114] sm:$0xff]
  %v2028 = vld [vmem:[%s1618 + $0x134] sm:$0xff]
  %v2029 = vld [vmem:[%s1618 + $0x154] sm:$0xff]
  %v2030 = vld [vmem:[%s1618 + $0x174] sm:$0xff]
  %v2031 = vld [vmem:[%s1618 + $0x194] sm:$0xff]
  %v2032 = vld [vmem:[%s1618 + $0x1b4] sm:$0xff]
  %v2033 = vld [vmem:[%s1618 + $0x1d4] sm:$0xff]
  %v2034 = vld [vmem:[%s1618 + $0x1f4] sm:$0xff]
  %v2035 = vlaneseq
  %v2036 = vshrl.u32 %v2035, 7
  %v2037 = vsub.s32 1, %v2036
  %v2038 = vrot.slane %v1163, %v2037
  %v2039 = vmul.f32 %v1620, %v2038
  %v2040 = vmul.f32 %v2019, %v2038
  %v2041 = vmul.f32 %v1622, %v2038
  %v2042 = vmul.f32 %v2020, %v2038
  %v2043 = vmul.f32 %v1624, %v2038
  %v2044 = vmul.f32 %v2021, %v2038
  %v2045 = vmul.f32 %v1626, %v2038
  %v2046 = vmul.f32 %v2022, %v2038
  %v2047 = vmul.f32 %v1628, %v2038
  %v2048 = vmul.f32 %v2023, %v2038
  %v2049 = vmul.f32 %v1630, %v2038
  %v2050 = vmul.f32 %v2024, %v2038
  %v2051 = vmul.f32 %v1632, %v2038
  %v2052 = vmul.f32 %v2025, %v2038
  %v2053 = vmul.f32 %v1634, %v2038
  %v2054 = vmul.f32 %v2026, %v2038
  %v2055 = vmul.f32 %v1636, %v2038
  %v2056 = vmul.f32 %v2027, %v2038
  %v2057 = vmul.f32 %v1638, %v2038
  %v2058 = vmul.f32 %v2028, %v2038
  %v2059 = vmul.f32 %v1640, %v2038
  %v2060 = vmul.f32 %v2029, %v2038
  %v2061 = vmul.f32 %v1642, %v2038
  %v2062 = vmul.f32 %v2030, %v2038
  %v2063 = vmul.f32 %v1644, %v2038
  %v2064 = vmul.f32 %v2031, %v2038
  %v2065 = vmul.f32 %v1646, %v2038
  %v2066 = vmul.f32 %v2032, %v2038
  %v2067 = vmul.f32 %v1648, %v2038
  %v2068 = vmul.f32 %v2033, %v2038
  %v2069 = vmul.f32 %v1650, %v2038
  %v2070 = vmul.f32 %v2034, %v2038
  %v2071 = vadd.f32 %v1987, %v2039
  %v2072 = vadd.f32 %v1988, %v2040
  %v2073 = vadd.f32 %v1989, %v2041
  %v2074 = vadd.f32 %v1990, %v2042
  %v2075 = vadd.f32 %v1991, %v2043
  %v2076 = vadd.f32 %v1992, %v2044
  %v2077 = vadd.f32 %v1993, %v2045
  %v2078 = vadd.f32 %v1994, %v2046
  %v2079 = vadd.f32 %v1995, %v2047
  %v2080 = vadd.f32 %v1996, %v2048
  %v2081 = vadd.f32 %v1997, %v2049
  %v2082 = vadd.f32 %v1998, %v2050
  %v2083 = vadd.f32 %v1999, %v2051
  %v2084 = vadd.f32 %v2000, %v2052
  %v2085 = vadd.f32 %v2001, %v2053
  %v2086 = vadd.f32 %v2002, %v2054
  %v2087 = vadd.f32 %v2003, %v2055
  %v2088 = vadd.f32 %v2004, %v2056
  %v2089 = vadd.f32 %v2005, %v2057
  %v2090 = vadd.f32 %v2006, %v2058
  %v2091 = vadd.f32 %v2007, %v2059
  %v2092 = vadd.f32 %v2008, %v2060
  %v2093 = vadd.f32 %v2009, %v2061
  %v2094 = vadd.f32 %v2010, %v2062
  %v2095 = vadd.f32 %v2011, %v2063
  %v2096 = vadd.f32 %v2012, %v2064
  %v2097 = vadd.f32 %v2013, %v2065
  %v2098 = vadd.f32 %v2014, %v2066
  %v2099 = vadd.f32 %v2015, %v2067
  %v2100 = vadd.f32 %v2016, %v2068
  %v2101 = vadd.f32 %v2017, %v2069
  %v2102 = vadd.f32 %v2018, %v2070
  %v2103 = vld [vmem:[%s1129 + $0x4] sm:$0xff]
  %v2104 = vld [vmem:[%s1129 + $0xc] sm:$0xff]
  %v2105 = vld [vmem:[%s1129 + $0x24] sm:$0xff]
  %v2106 = vld [vmem:[%s1129 + $0x2c] sm:$0xff]
  %v2107 = vld [vmem:[%s1129 + $0x44] sm:$0xff]
  %v2108 = vld [vmem:[%s1129 + $0x4c] sm:$0xff]
  %v2109 = vld [vmem:[%s1129 + $0x64] sm:$0xff]
  %v2110 = vld [vmem:[%s1129 + $0x6c] sm:$0xff]
  %v2111 = vld [vmem:[%s1129 + $0x84] sm:$0xff]
  %v2112 = vld [vmem:[%s1129 + $0x8c] sm:$0xff]
  %v2113 = vld [vmem:[%s1129 + $0xa4] sm:$0xff]
  %v2114 = vld [vmem:[%s1129 + $0xac] sm:$0xff]
  %v2115 = vld [vmem:[%s1129 + $0xc4] sm:$0xff]
  %v2116 = vld [vmem:[%s1129 + $0xcc] sm:$0xff]
  %v2117 = vld [vmem:[%s1129 + $0xe4] sm:$0xff]
  %v2118 = vld [vmem:[%s1129 + $0xec] sm:$0xff]
  %v2119 = vld [vmem:[%s1129 + $0x104] sm:$0xff]
  %v2120 = vld [vmem:[%s1129 + $0x10c] sm:$0xff]
  %v2121 = vld [vmem:[%s1129 + $0x124] sm:$0xff]
  %v2122 = vld [vmem:[%s1129 + $0x12c] sm:$0xff]
  %v2123 = vld [vmem:[%s1129 + $0x144] sm:$0xff]
  %v2124 = vld [vmem:[%s1129 + $0x14c] sm:$0xff]
  %v2125 = vld [vmem:[%s1129 + $0x164] sm:$0xff]
  %v2126 = vld [vmem:[%s1129 + $0x16c] sm:$0xff]
  %v2127 = vld [vmem:[%s1129 + $0x184] sm:$0xff]
  %v2128 = vld [vmem:[%s1129 + $0x18c] sm:$0xff]
  %v2129 = vld [vmem:[%s1129 + $0x1a4] sm:$0xff]
  %v2130 = vld [vmem:[%s1129 + $0x1ac] sm:$0xff]
  %v2131 = vld [vmem:[%s1129 + $0x1c4] sm:$0xff]
  %v2132 = vld [vmem:[%s1129 + $0x1cc] sm:$0xff]
  %v2133 = vld [vmem:[%s1129 + $0x1e4] sm:$0xff]
  %v2134 = vld [vmem:[%s1129 + $0x1ec] sm:$0xff]
  %v2135 = vlaneseq
  %v2136 = vshrl.u32 %v2135, 7
  %v2137 = vsub.s32 2, %v2136
  %v2138 = vrot.slane %v1163, %v2137
  %v2139 = vmul.f32 %v2103, %v2138
  %v2140 = vmul.f32 %v2104, %v2138
  %v2141 = vmul.f32 %v2105, %v2138
  %v2142 = vmul.f32 %v2106, %v2138
  %v2143 = vmul.f32 %v2107, %v2138
  %v2144 = vmul.f32 %v2108, %v2138
  %v2145 = vmul.f32 %v2109, %v2138
  %v2146 = vmul.f32 %v2110, %v2138
  %v2147 = vmul.f32 %v2111, %v2138
  %v2148 = vmul.f32 %v2112, %v2138
  %v2149 = vmul.f32 %v2113, %v2138
  %v2150 = vmul.f32 %v2114, %v2138
  %v2151 = vmul.f32 %v2115, %v2138
  %v2152 = vmul.f32 %v2116, %v2138
  %v2153 = vmul.f32 %v2117, %v2138
  %v2154 = vmul.f32 %v2118, %v2138
  %v2155 = vmul.f32 %v2119, %v2138
  %v2156 = vmul.f32 %v2120, %v2138
  %v2157 = vmul.f32 %v2121, %v2138
  %v2158 = vmul.f32 %v2122, %v2138
  %v2159 = vmul.f32 %v2123, %v2138
  %v2160 = vmul.f32 %v2124, %v2138
  %v2161 = vmul.f32 %v2125, %v2138
  %v2162 = vmul.f32 %v2126, %v2138
  %v2163 = vmul.f32 %v2127, %v2138
  %v2164 = vmul.f32 %v2128, %v2138
  %v2165 = vmul.f32 %v2129, %v2138
  %v2166 = vmul.f32 %v2130, %v2138
  %v2167 = vmul.f32 %v2131, %v2138
  %v2168 = vmul.f32 %v2132, %v2138
  %v2169 = vmul.f32 %v2133, %v2138
  %v2170 = vmul.f32 %v2134, %v2138
  %v2171 = vadd.f32 %v2071, %v2139
  %v2172 = vadd.f32 %v2072, %v2140
  %v2173 = vadd.f32 %v2073, %v2141
  %v2174 = vadd.f32 %v2074, %v2142
  %v2175 = vadd.f32 %v2075, %v2143
  %v2176 = vadd.f32 %v2076, %v2144
  %v2177 = vadd.f32 %v2077, %v2145
  %v2178 = vadd.f32 %v2078, %v2146
  %v2179 = vadd.f32 %v2079, %v2147
  %v2180 = vadd.f32 %v2080, %v2148
  %v2181 = vadd.f32 %v2081, %v2149
  %v2182 = vadd.f32 %v2082, %v2150
  %v2183 = vadd.f32 %v2083, %v2151
  %v2184 = vadd.f32 %v2084, %v2152
  %v2185 = vadd.f32 %v2085, %v2153
  %v2186 = vadd.f32 %v2086, %v2154
  %v2187 = vadd.f32 %v2087, %v2155
  %v2188 = vadd.f32 %v2088, %v2156
  %v2189 = vadd.f32 %v2089, %v2157
  %v2190 = vadd.f32 %v2090, %v2158
  %v2191 = vadd.f32 %v2091, %v2159
  %v2192 = vadd.f32 %v2092, %v2160
  %v2193 = vadd.f32 %v2093, %v2161
  %v2194 = vadd.f32 %v2094, %v2162
  %v2195 = vadd.f32 %v2095, %v2163
  %v2196 = vadd.f32 %v2096, %v2164
  %v2197 = vadd.f32 %v2097, %v2165
  %v2198 = vadd.f32 %v2098, %v2166
  %v2199 = vadd.f32 %v2099, %v2167
  %v2200 = vadd.f32 %v2100, %v2168
  %v2201 = vadd.f32 %v2101, %v2169
  %v2202 = vadd.f32 %v2102, %v2170
  %v2203 = vld [vmem:[%s1129 + $0x6] sm:$0xff]
  %v2204 = vld [vmem:[%s1129 + $0xe] sm:$0xff]
  %v2205 = vld [vmem:[%s1129 + $0x26] sm:$0xff]
  %v2206 = vld [vmem:[%s1129 + $0x2e] sm:$0xff]
  %v2207 = vld [vmem:[%s1129 + $0x46] sm:$0xff]
  %v2208 = vld [vmem:[%s1129 + $0x4e] sm:$0xff]
  %v2209 = vld [vmem:[%s1129 + $0x66] sm:$0xff]
  %v2210 = vld [vmem:[%s1129 + $0x6e] sm:$0xff]
  %v2211 = vld [vmem:[%s1129 + $0x86] sm:$0xff]
  %v2212 = vld [vmem:[%s1129 + $0x8e] sm:$0xff]
  %v2213 = vld [vmem:[%s1129 + $0xa6] sm:$0xff]
  %v2214 = vld [vmem:[%s1129 + $0xae] sm:$0xff]
  %v2215 = vld [vmem:[%s1129 + $0xc6] sm:$0xff]
  %v2216 = vld [vmem:[%s1129 + $0xce] sm:$0xff]
  %v2217 = vld [vmem:[%s1129 + $0xe6] sm:$0xff]
  %v2218 = vld [vmem:[%s1129 + $0xee] sm:$0xff]
  %v2219 = vld [vmem:[%s1129 + $0x106] sm:$0xff]
  %v2220 = vld [vmem:[%s1129 + $0x10e] sm:$0xff]
  %v2221 = vld [vmem:[%s1129 + $0x126] sm:$0xff]
  %v2222 = vld [vmem:[%s1129 + $0x12e] sm:$0xff]
  %v2223 = vld [vmem:[%s1129 + $0x146] sm:$0xff]
  %v2224 = vld [vmem:[%s1129 + $0x14e] sm:$0xff]
  %v2225 = vld [vmem:[%s1129 + $0x166] sm:$0xff]
  %v2226 = vld [vmem:[%s1129 + $0x16e] sm:$0xff]
  %v2227 = vld [vmem:[%s1129 + $0x186] sm:$0xff]
  %v2228 = vld [vmem:[%s1129 + $0x18e] sm:$0xff]
  %v2229 = vld [vmem:[%s1129 + $0x1a6] sm:$0xff]
  %v2230 = vld [vmem:[%s1129 + $0x1ae] sm:$0xff]
  %v2231 = vld [vmem:[%s1129 + $0x1c6] sm:$0xff]
  %v2232 = vld [vmem:[%s1129 + $0x1ce] sm:$0xff]
  %v2233 = vld [vmem:[%s1129 + $0x1e6] sm:$0xff]
  %v2234 = vld [vmem:[%s1129 + $0x1ee] sm:$0xff]
  %v2235 = vlaneseq
  %v2236 = vshrl.u32 %v2235, 7
  %v2237 = vsub.s32 3, %v2236
  %v2238 = vrot.slane %v1163, %v2237
  %v2239 = vmul.f32 %v2203, %v2238
  %v2240 = vmul.f32 %v2204, %v2238
  %v2241 = vmul.f32 %v2205, %v2238
  %v2242 = vmul.f32 %v2206, %v2238
  %v2243 = vmul.f32 %v2207, %v2238
  %v2244 = vmul.f32 %v2208, %v2238
  %v2245 = vmul.f32 %v2209, %v2238
  %v2246 = vmul.f32 %v2210, %v2238
  %v2247 = vmul.f32 %v2211, %v2238
  %v2248 = vmul.f32 %v2212, %v2238
  %v2249 = vmul.f32 %v2213, %v2238
  %v2250 = vmul.f32 %v2214, %v2238
  %v2251 = vmul.f32 %v2215, %v2238
  %v2252 = vmul.f32 %v2216, %v2238
  %v2253 = vmul.f32 %v2217, %v2238
  %v2254 = vmul.f32 %v2218, %v2238
  %v2255 = vmul.f32 %v2219, %v2238
  %v2256 = vmul.f32 %v2220, %v2238
  %v2257 = vmul.f32 %v2221, %v2238
  %v2258 = vmul.f32 %v2222, %v2238
  %v2259 = vmul.f32 %v2223, %v2238
  %v2260 = vmul.f32 %v2224, %v2238
  %v2261 = vmul.f32 %v2225, %v2238
  %v2262 = vmul.f32 %v2226, %v2238
  %v2263 = vmul.f32 %v2227, %v2238
  %v2264 = vmul.f32 %v2228, %v2238
  %v2265 = vmul.f32 %v2229, %v2238
  %v2266 = vmul.f32 %v2230, %v2238
  %v2267 = vmul.f32 %v2231, %v2238
  %v2268 = vmul.f32 %v2232, %v2238
  %v2269 = vmul.f32 %v2233, %v2238
  %v2270 = vmul.f32 %v2234, %v2238
  %v2271 = vadd.f32 %v2171, %v2239
  %v2272 = vadd.f32 %v2172, %v2240
  %v2273 = vadd.f32 %v2173, %v2241
  %v2274 = vadd.f32 %v2174, %v2242
  %v2275 = vadd.f32 %v2175, %v2243
  %v2276 = vadd.f32 %v2176, %v2244
  %v2277 = vadd.f32 %v2177, %v2245
  %v2278 = vadd.f32 %v2178, %v2246
  %v2279 = vadd.f32 %v2179, %v2247
  %v2280 = vadd.f32 %v2180, %v2248
  %v2281 = vadd.f32 %v2181, %v2249
  %v2282 = vadd.f32 %v2182, %v2250
  %v2283 = vadd.f32 %v2183, %v2251
  %v2284 = vadd.f32 %v2184, %v2252
  %v2285 = vadd.f32 %v2185, %v2253
  %v2286 = vadd.f32 %v2186, %v2254
  %v2287 = vadd.f32 %v2187, %v2255
  %v2288 = vadd.f32 %v2188, %v2256
  %v2289 = vadd.f32 %v2189, %v2257
  %v2290 = vadd.f32 %v2190, %v2258
  %v2291 = vadd.f32 %v2191, %v2259
  %v2292 = vadd.f32 %v2192, %v2260
  %v2293 = vadd.f32 %v2193, %v2261
  %v2294 = vadd.f32 %v2194, %v2262
  %v2295 = vadd.f32 %v2195, %v2263
  %v2296 = vadd.f32 %v2196, %v2264
  %v2297 = vadd.f32 %v2197, %v2265
  %v2298 = vadd.f32 %v2198, %v2266
  %v2299 = vadd.f32 %v2199, %v2267
  %v2300 = vadd.f32 %v2200, %v2268
  %v2301 = vadd.f32 %v2201, %v2269
  %v2302 = vadd.f32 %v2202, %v2270
  %v2303 = vld [vmem:[%s1129 + $0x8] sm:$0xff]
  %v2304 = vld [vmem:[%s1129 + $0x10] sm:$0xff]
  %v2305 = vld [vmem:[%s1129 + $0x28] sm:$0xff]
  %v2306 = vld [vmem:[%s1129 + $0x30] sm:$0xff]
  %v2307 = vld [vmem:[%s1129 + $0x48] sm:$0xff]
  %v2308 = vld [vmem:[%s1129 + $0x50] sm:$0xff]
  %v2309 = vld [vmem:[%s1129 + $0x68] sm:$0xff]
  %v2310 = vld [vmem:[%s1129 + $0x70] sm:$0xff]
  %v2311 = vld [vmem:[%s1129 + $0x88] sm:$0xff]
  %v2312 = vld [vmem:[%s1129 + $0x90] sm:$0xff]
  %v2313 = vld [vmem:[%s1129 + $0xa8] sm:$0xff]
  %v2314 = vld [vmem:[%s1129 + $0xb0] sm:$0xff]
  %v2315 = vld [vmem:[%s1129 + $0xc8] sm:$0xff]
  %v2316 = vld [vmem:[%s1129 + $0xd0] sm:$0xff]
  %v2317 = vld [vmem:[%s1129 + $0xe8] sm:$0xff]
  %v2318 = vld [vmem:[%s1129 + $0xf0] sm:$0xff]
  %v2319 = vld [vmem:[%s1129 + $0x108] sm:$0xff]
  %v2320 = vld [vmem:[%s1129 + $0x110] sm:$0xff]
  %v2321 = vld [vmem:[%s1129 + $0x128] sm:$0xff]
  %v2322 = vld [vmem:[%s1129 + $0x130] sm:$0xff]
  %v2323 = vld [vmem:[%s1129 + $0x148] sm:$0xff]
  %v2324 = vld [vmem:[%s1129 + $0x150] sm:$0xff]
  %v2325 = vld [vmem:[%s1129 + $0x168] sm:$0xff]
  %v2326 = vld [vmem:[%s1129 + $0x170] sm:$0xff]
  %v2327 = vld [vmem:[%s1129 + $0x188] sm:$0xff]
  %v2328 = vld [vmem:[%s1129 + $0x190] sm:$0xff]
  %v2329 = vld [vmem:[%s1129 + $0x1a8] sm:$0xff]
  %v2330 = vld [vmem:[%s1129 + $0x1b0] sm:$0xff]
  %v2331 = vld [vmem:[%s1129 + $0x1c8] sm:$0xff]
  %v2332 = vld [vmem:[%s1129 + $0x1d0] sm:$0xff]
  %v2333 = vld [vmem:[%s1129 + $0x1e8] sm:$0xff]
  %v2334 = vld [vmem:[%s1129 + $0x1f0] sm:$0xff]
  %v2335 = vlaneseq
  %v2336 = vshrl.u32 %v2335, 7
  %v2337 = vsub.s32 4, %v2336
  %v2338 = vrot.slane %v1163, %v2337
  %v2339 = vmul.f32 %v2303, %v2338
  %v2340 = vmul.f32 %v2304, %v2338
  %v2341 = vmul.f32 %v2305, %v2338
  %v2342 = vmul.f32 %v2306, %v2338
  %v2343 = vmul.f32 %v2307, %v2338
  %v2344 = vmul.f32 %v2308, %v2338
  %v2345 = vmul.f32 %v2309, %v2338
  %v2346 = vmul.f32 %v2310, %v2338
  %v2347 = vmul.f32 %v2311, %v2338
  %v2348 = vmul.f32 %v2312, %v2338
  %v2349 = vmul.f32 %v2313, %v2338
  %v2350 = vmul.f32 %v2314, %v2338
  %v2351 = vmul.f32 %v2315, %v2338
  %v2352 = vmul.f32 %v2316, %v2338
  %v2353 = vmul.f32 %v2317, %v2338
  %v2354 = vmul.f32 %v2318, %v2338
  %v2355 = vmul.f32 %v2319, %v2338
  %v2356 = vmul.f32 %v2320, %v2338
  %v2357 = vmul.f32 %v2321, %v2338
  %v2358 = vmul.f32 %v2322, %v2338
  %v2359 = vmul.f32 %v2323, %v2338
  %v2360 = vmul.f32 %v2324, %v2338
  %v2361 = vmul.f32 %v2325, %v2338
  %v2362 = vmul.f32 %v2326, %v2338
  %v2363 = vmul.f32 %v2327, %v2338
  %v2364 = vmul.f32 %v2328, %v2338
  %v2365 = vmul.f32 %v2329, %v2338
  %v2366 = vmul.f32 %v2330, %v2338
  %v2367 = vmul.f32 %v2331, %v2338
  %v2368 = vmul.f32 %v2332, %v2338
  %v2369 = vmul.f32 %v2333, %v2338
  %v2370 = vmul.f32 %v2334, %v2338
  %v2371 = vadd.f32 %v2271, %v2339
  %v2372 = vadd.f32 %v2272, %v2340
  %v2373 = vadd.f32 %v2273, %v2341
  %v2374 = vadd.f32 %v2274, %v2342
  %v2375 = vadd.f32 %v2275, %v2343
  %v2376 = vadd.f32 %v2276, %v2344
  %v2377 = vadd.f32 %v2277, %v2345
  %v2378 = vadd.f32 %v2278, %v2346
  %v2379 = vadd.f32 %v2279, %v2347
  %v2380 = vadd.f32 %v2280, %v2348
  %v2381 = vadd.f32 %v2281, %v2349
  %v2382 = vadd.f32 %v2282, %v2350
  %v2383 = vadd.f32 %v2283, %v2351
  %v2384 = vadd.f32 %v2284, %v2352
  %v2385 = vadd.f32 %v2285, %v2353
  %v2386 = vadd.f32 %v2286, %v2354
  %v2387 = vadd.f32 %v2287, %v2355
  %v2388 = vadd.f32 %v2288, %v2356
  %v2389 = vadd.f32 %v2289, %v2357
  %v2390 = vadd.f32 %v2290, %v2358
  %v2391 = vadd.f32 %v2291, %v2359
  %v2392 = vadd.f32 %v2292, %v2360
  %v2393 = vadd.f32 %v2293, %v2361
  %v2394 = vadd.f32 %v2294, %v2362
  %v2395 = vadd.f32 %v2295, %v2363
  %v2396 = vadd.f32 %v2296, %v2364
  %v2397 = vadd.f32 %v2297, %v2365
  %v2398 = vadd.f32 %v2298, %v2366
  %v2399 = vadd.f32 %v2299, %v2367
  %v2400 = vadd.f32 %v2300, %v2368
  %v2401 = vadd.f32 %v2301, %v2369
  %v2402 = vadd.f32 %v2302, %v2370
  %v2403 = vld [vmem:[%s1129 + $0xa] sm:$0xff]
  %v2404 = vld [vmem:[%s1129 + $0x12] sm:$0xff]
  %v2405 = vld [vmem:[%s1129 + $0x2a] sm:$0xff]
  %v2406 = vld [vmem:[%s1129 + $0x32] sm:$0xff]
  %v2407 = vld [vmem:[%s1129 + $0x4a] sm:$0xff]
  %v2408 = vld [vmem:[%s1129 + $0x52] sm:$0xff]
  %v2409 = vld [vmem:[%s1129 + $0x6a] sm:$0xff]
  %v2410 = vld [vmem:[%s1129 + $0x72] sm:$0xff]
  %v2411 = vld [vmem:[%s1129 + $0x8a] sm:$0xff]
  %v2412 = vld [vmem:[%s1129 + $0x92] sm:$0xff]
  %v2413 = vld [vmem:[%s1129 + $0xaa] sm:$0xff]
  %v2414 = vld [vmem:[%s1129 + $0xb2] sm:$0xff]
  %v2415 = vld [vmem:[%s1129 + $0xca] sm:$0xff]
  %v2416 = vld [vmem:[%s1129 + $0xd2] sm:$0xff]
  %v2417 = vld [vmem:[%s1129 + $0xea] sm:$0xff]
  %v2418 = vld [vmem:[%s1129 + $0xf2] sm:$0xff]
  %v2419 = vld [vmem:[%s1129 + $0x10a] sm:$0xff]
  %v2420 = vld [vmem:[%s1129 + $0x112] sm:$0xff]
  %v2421 = vld [vmem:[%s1129 + $0x12a] sm:$0xff]
  %v2422 = vld [vmem:[%s1129 + $0x132] sm:$0xff]
  %v2423 = vld [vmem:[%s1129 + $0x14a] sm:$0xff]
  %v2424 = vld [vmem:[%s1129 + $0x152] sm:$0xff]
  %v2425 = vld [vmem:[%s1129 + $0x16a] sm:$0xff]
  %v2426 = vld [vmem:[%s1129 + $0x172] sm:$0xff]
  %v2427 = vld [vmem:[%s1129 + $0x18a] sm:$0xff]
  %v2428 = vld [vmem:[%s1129 + $0x192] sm:$0xff]
  %v2429 = vld [vmem:[%s1129 + $0x1aa] sm:$0xff]
  %v2430 = vld [vmem:[%s1129 + $0x1b2] sm:$0xff]
  %v2431 = vld [vmem:[%s1129 + $0x1ca] sm:$0xff]
  %v2432 = vld [vmem:[%s1129 + $0x1d2] sm:$0xff]
  %v2433 = vld [vmem:[%s1129 + $0x1ea] sm:$0xff]
  %v2434 = vld [vmem:[%s1129 + $0x1f2] sm:$0xff]
  %v2435 = vlaneseq
  %v2436 = vshrl.u32 %v2435, 7
  %v2437 = vsub.s32 5, %v2436
  %v2438 = vrot.slane %v1163, %v2437
  %v2439 = vmul.f32 %v2403, %v2438
  %v2440 = vmul.f32 %v2404, %v2438
  %v2441 = vmul.f32 %v2405, %v2438
  %v2442 = vmul.f32 %v2406, %v2438
  %v2443 = vmul.f32 %v2407, %v2438
  %v2444 = vmul.f32 %v2408, %v2438
  %v2445 = vmul.f32 %v2409, %v2438
  %v2446 = vmul.f32 %v2410, %v2438
  %v2447 = vmul.f32 %v2411, %v2438
  %v2448 = vmul.f32 %v2412, %v2438
  %v2449 = vmul.f32 %v2413, %v2438
  %v2450 = vmul.f32 %v2414, %v2438
  %v2451 = vmul.f32 %v2415, %v2438
  %v2452 = vmul.f32 %v2416, %v2438
  %v2453 = vmul.f32 %v2417, %v2438
  %v2454 = vmul.f32 %v2418, %v2438
  %v2455 = vmul.f32 %v2419, %v2438
  %v2456 = vmul.f32 %v2420, %v2438
  %v2457 = vmul.f32 %v2421, %v2438
  %v2458 = vmul.f32 %v2422, %v2438
  %v2459 = vmul.f32 %v2423, %v2438
  %v2460 = vmul.f32 %v2424, %v2438
  %v2461 = vmul.f32 %v2425, %v2438
  %v2462 = vmul.f32 %v2426, %v2438
  %v2463 = vmul.f32 %v2427, %v2438
  %v2464 = vmul.f32 %v2428, %v2438
  %v2465 = vmul.f32 %v2429, %v2438
  %v2466 = vmul.f32 %v2430, %v2438
  %v2467 = vmul.f32 %v2431, %v2438
  %v2468 = vmul.f32 %v2432, %v2438
  %v2469 = vmul.f32 %v2433, %v2438
  %v2470 = vmul.f32 %v2434, %v2438
  %v2471 = vadd.f32 %v2371, %v2439
  %v2472 = vadd.f32 %v2372, %v2440
  %v2473 = vadd.f32 %v2373, %v2441
  %v2474 = vadd.f32 %v2374, %v2442
  %v2475 = vadd.f32 %v2375, %v2443
  %v2476 = vadd.f32 %v2376, %v2444
  %v2477 = vadd.f32 %v2377, %v2445
  %v2478 = vadd.f32 %v2378, %v2446
  %v2479 = vadd.f32 %v2379, %v2447
  %v2480 = vadd.f32 %v2380, %v2448
  %v2481 = vadd.f32 %v2381, %v2449
  %v2482 = vadd.f32 %v2382, %v2450
  %v2483 = vadd.f32 %v2383, %v2451
  %v2484 = vadd.f32 %v2384, %v2452
  %v2485 = vadd.f32 %v2385, %v2453
  %v2486 = vadd.f32 %v2386, %v2454
  %v2487 = vadd.f32 %v2387, %v2455
  %v2488 = vadd.f32 %v2388, %v2456
  %v2489 = vadd.f32 %v2389, %v2457
  %v2490 = vadd.f32 %v2390, %v2458
  %v2491 = vadd.f32 %v2391, %v2459
  %v2492 = vadd.f32 %v2392, %v2460
  %v2493 = vadd.f32 %v2393, %v2461
  %v2494 = vadd.f32 %v2394, %v2462
  %v2495 = vadd.f32 %v2395, %v2463
  %v2496 = vadd.f32 %v2396, %v2464
  %v2497 = vadd.f32 %v2397, %v2465
  %v2498 = vadd.f32 %v2398, %v2466
  %v2499 = vadd.f32 %v2399, %v2467
  %v2500 = vadd.f32 %v2400, %v2468
  %v2501 = vadd.f32 %v2401, %v2469
  %v2502 = vadd.f32 %v2402, %v2470
  %v2503 = vld [vmem:[%s1129 + $0x14] sm:$0xff]
  %v2504 = vld [vmem:[%s1129 + $0x34] sm:$0xff]
  %v2505 = vld [vmem:[%s1129 + $0x54] sm:$0xff]
  %v2506 = vld [vmem:[%s1129 + $0x74] sm:$0xff]
  %v2507 = vld [vmem:[%s1129 + $0x94] sm:$0xff]
  %v2508 = vld [vmem:[%s1129 + $0xb4] sm:$0xff]
  %v2509 = vld [vmem:[%s1129 + $0xd4] sm:$0xff]
  %v2510 = vld [vmem:[%s1129 + $0xf4] sm:$0xff]
  %v2511 = vld [vmem:[%s1129 + $0x114] sm:$0xff]
  %v2512 = vld [vmem:[%s1129 + $0x134] sm:$0xff]
  %v2513 = vld [vmem:[%s1129 + $0x154] sm:$0xff]
  %v2514 = vld [vmem:[%s1129 + $0x174] sm:$0xff]
  %v2515 = vld [vmem:[%s1129 + $0x194] sm:$0xff]
  %v2516 = vld [vmem:[%s1129 + $0x1b4] sm:$0xff]
  %v2517 = vld [vmem:[%s1129 + $0x1d4] sm:$0xff]
  %v2518 = vld [vmem:[%s1129 + $0x1f4] sm:$0xff]
  %v2519 = vlaneseq
  %v2520 = vshrl.u32 %v2519, 7
  %v2521 = vsub.s32 6, %v2520
  %v2522 = vrot.slane %v1163, %v2521
  %v2523 = vmul.f32 %v2104, %v2522
  %v2524 = vmul.f32 %v2503, %v2522
  %v2525 = vmul.f32 %v2106, %v2522
  %v2526 = vmul.f32 %v2504, %v2522
  %v2527 = vmul.f32 %v2108, %v2522
  %v2528 = vmul.f32 %v2505, %v2522
  %v2529 = vmul.f32 %v2110, %v2522
  %v2530 = vmul.f32 %v2506, %v2522
  %v2531 = vmul.f32 %v2112, %v2522
  %v2532 = vmul.f32 %v2507, %v2522
  %v2533 = vmul.f32 %v2114, %v2522
  %v2534 = vmul.f32 %v2508, %v2522
  %v2535 = vmul.f32 %v2116, %v2522
  %v2536 = vmul.f32 %v2509, %v2522
  %v2537 = vmul.f32 %v2118, %v2522
  %v2538 = vmul.f32 %v2510, %v2522
  %v2539 = vmul.f32 %v2120, %v2522
  %v2540 = vmul.f32 %v2511, %v2522
  %v2541 = vmul.f32 %v2122, %v2522
  %v2542 = vmul.f32 %v2512, %v2522
  %v2543 = vmul.f32 %v2124, %v2522
  %v2544 = vmul.f32 %v2513, %v2522
  %v2545 = vmul.f32 %v2126, %v2522
  %v2546 = vmul.f32 %v2514, %v2522
  %v2547 = vmul.f32 %v2128, %v2522
  %v2548 = vmul.f32 %v2515, %v2522
  %v2549 = vmul.f32 %v2130, %v2522
  %v2550 = vmul.f32 %v2516, %v2522
  %v2551 = vmul.f32 %v2132, %v2522
  %v2552 = vmul.f32 %v2517, %v2522
  %v2553 = vmul.f32 %v2134, %v2522
  %v2554 = vmul.f32 %v2518, %v2522
  %v2555 = vadd.f32 %v2471, %v2523
  %v2556 = vadd.f32 %v2472, %v2524
  %v2557 = vadd.f32 %v2473, %v2525
  %v2558 = vadd.f32 %v2474, %v2526
  %v2559 = vadd.f32 %v2475, %v2527
  %v2560 = vadd.f32 %v2476, %v2528
  %v2561 = vadd.f32 %v2477, %v2529
  %v2562 = vadd.f32 %v2478, %v2530
  %v2563 = vadd.f32 %v2479, %v2531
  %v2564 = vadd.f32 %v2480, %v2532
  %v2565 = vadd.f32 %v2481, %v2533
  %v2566 = vadd.f32 %v2482, %v2534
  %v2567 = vadd.f32 %v2483, %v2535
  %v2568 = vadd.f32 %v2484, %v2536
  %v2569 = vadd.f32 %v2485, %v2537
  %v2570 = vadd.f32 %v2486, %v2538
  %v2571 = vadd.f32 %v2487, %v2539
  %v2572 = vadd.f32 %v2488, %v2540
  %v2573 = vadd.f32 %v2489, %v2541
  %v2574 = vadd.f32 %v2490, %v2542
  %v2575 = vadd.f32 %v2491, %v2543
  %v2576 = vadd.f32 %v2492, %v2544
  %v2577 = vadd.f32 %v2493, %v2545
  %v2578 = vadd.f32 %v2494, %v2546
  %v2579 = vadd.f32 %v2495, %v2547
  %v2580 = vadd.f32 %v2496, %v2548
  %v2581 = vadd.f32 %v2497, %v2549
  %v2582 = vadd.f32 %v2498, %v2550
  %v2583 = vadd.f32 %v2499, %v2551
  %v2584 = vadd.f32 %v2500, %v2552
  %v2585 = vadd.f32 %v2501, %v2553
  %v2586 = vadd.f32 %v2502, %v2554
  %s2587 = scalar_lea.vmem [#allocation3], 192
  %v2588 = vld [vmem:[%s2587 + $0x4] sm:$0xff]
  %v2589 = vld [vmem:[%s2587 + $0xc] sm:$0xff]
  %v2590 = vld [vmem:[%s2587 + $0x24] sm:$0xff]
  %v2591 = vld [vmem:[%s2587 + $0x2c] sm:$0xff]
  %v2592 = vld [vmem:[%s2587 + $0x44] sm:$0xff]
  %v2593 = vld [vmem:[%s2587 + $0x4c] sm:$0xff]
  %v2594 = vld [vmem:[%s2587 + $0x64] sm:$0xff]
  %v2595 = vld [vmem:[%s2587 + $0x6c] sm:$0xff]
  %v2596 = vld [vmem:[%s2587 + $0x84] sm:$0xff]
  %v2597 = vld [vmem:[%s2587 + $0x8c] sm:$0xff]
  %v2598 = vld [vmem:[%s2587 + $0xa4] sm:$0xff]
  %v2599 = vld [vmem:[%s2587 + $0xac] sm:$0xff]
  %v2600 = vld [vmem:[%s2587 + $0xc4] sm:$0xff]
  %v2601 = vld [vmem:[%s2587 + $0xcc] sm:$0xff]
  %v2602 = vld [vmem:[%s2587 + $0xe4] sm:$0xff]
  %v2603 = vld [vmem:[%s2587 + $0xec] sm:$0xff]
  %v2604 = vld [vmem:[%s2587 + $0x104] sm:$0xff]
  %v2605 = vld [vmem:[%s2587 + $0x10c] sm:$0xff]
  %v2606 = vld [vmem:[%s2587 + $0x124] sm:$0xff]
  %v2607 = vld [vmem:[%s2587 + $0x12c] sm:$0xff]
  %v2608 = vld [vmem:[%s2587 + $0x144] sm:$0xff]
  %v2609 = vld [vmem:[%s2587 + $0x14c] sm:$0xff]
  %v2610 = vld [vmem:[%s2587 + $0x164] sm:$0xff]
  %v2611 = vld [vmem:[%s2587 + $0x16c] sm:$0xff]
  %v2612 = vld [vmem:[%s2587 + $0x184] sm:$0xff]
  %v2613 = vld [vmem:[%s2587 + $0x18c] sm:$0xff]
  %v2614 = vld [vmem:[%s2587 + $0x1a4] sm:$0xff]
  %v2615 = vld [vmem:[%s2587 + $0x1ac] sm:$0xff]
  %v2616 = vld [vmem:[%s2587 + $0x1c4] sm:$0xff]
  %v2617 = vld [vmem:[%s2587 + $0x1cc] sm:$0xff]
  %v2618 = vld [vmem:[%s2587 + $0x1e4] sm:$0xff]
  %v2619 = vld [vmem:[%s2587 + $0x1ec] sm:$0xff]
  %v2620 = vlaneseq
  %v2621 = vshrl.u32 %v2620, 7
  %v2622 = vsub.s32 7, %v2621
  %v2623 = vrot.slane %v1163, %v2622
  %v2624 = vmul.f32 %v2588, %v2623
  %v2625 = vmul.f32 %v2589, %v2623
  %v2626 = vmul.f32 %v2590, %v2623
  %v2627 = vmul.f32 %v2591, %v2623
  %v2628 = vmul.f32 %v2592, %v2623
  %v2629 = vmul.f32 %v2593, %v2623
  %v2630 = vmul.f32 %v2594, %v2623
  %v2631 = vmul.f32 %v2595, %v2623
  %v2632 = vmul.f32 %v2596, %v2623
  %v2633 = vmul.f32 %v2597, %v2623
  %v2634 = vmul.f32 %v2598, %v2623
  %v2635 = vmul.f32 %v2599, %v2623
  %v2636 = vmul.f32 %v2600, %v2623
  %v2637 = vmul.f32 %v2601, %v2623
  %v2638 = vmul.f32 %v2602, %v2623
  %v2639 = vmul.f32 %v2603, %v2623
  %v2640 = vmul.f32 %v2604, %v2623
  %v2641 = vmul.f32 %v2605, %v2623
  %v2642 = vmul.f32 %v2606, %v2623
  %v2643 = vmul.f32 %v2607, %v2623
  %v2644 = vmul.f32 %v2608, %v2623
  %v2645 = vmul.f32 %v2609, %v2623
  %v2646 = vmul.f32 %v2610, %v2623
  %v2647 = vmul.f32 %v2611, %v2623
  %v2648 = vmul.f32 %v2612, %v2623
  %v2649 = vmul.f32 %v2613, %v2623
  %v2650 = vmul.f32 %v2614, %v2623
  %v2651 = vmul.f32 %v2615, %v2623
  %v2652 = vmul.f32 %v2616, %v2623
  %v2653 = vmul.f32 %v2617, %v2623
  %v2654 = vmul.f32 %v2618, %v2623
  %v2655 = vmul.f32 %v2619, %v2623
  %v2656 = vadd.f32 %v2555, %v2624
  %v2657 = vadd.f32 %v2556, %v2625
  %v2658 = vadd.f32 %v2557, %v2626
  %v2659 = vadd.f32 %v2558, %v2627
  %v2660 = vadd.f32 %v2559, %v2628
  %v2661 = vadd.f32 %v2560, %v2629
  %v2662 = vadd.f32 %v2561, %v2630
  %v2663 = vadd.f32 %v2562, %v2631
  %v2664 = vadd.f32 %v2563, %v2632
  %v2665 = vadd.f32 %v2564, %v2633
  %v2666 = vadd.f32 %v2565, %v2634
  %v2667 = vadd.f32 %v2566, %v2635
  %v2668 = vadd.f32 %v2567, %v2636
  %v2669 = vadd.f32 %v2568, %v2637
  %v2670 = vadd.f32 %v2569, %v2638
  %v2671 = vadd.f32 %v2570, %v2639
  %v2672 = vadd.f32 %v2571, %v2640
  %v2673 = vadd.f32 %v2572, %v2641
  %v2674 = vadd.f32 %v2573, %v2642
  %v2675 = vadd.f32 %v2574, %v2643
  %v2676 = vadd.f32 %v2575, %v2644
  %v2677 = vadd.f32 %v2576, %v2645
  %v2678 = vadd.f32 %v2577, %v2646
  %v2679 = vadd.f32 %v2578, %v2647
  %v2680 = vadd.f32 %v2579, %v2648
  %v2681 = vadd.f32 %v2580, %v2649
  %v2682 = vadd.f32 %v2581, %v2650
  %v2683 = vadd.f32 %v2582, %v2651
  %v2684 = vadd.f32 %v2583, %v2652
  %v2685 = vadd.f32 %v2584, %v2653
  %v2686 = vadd.f32 %v2585, %v2654
  %v2687 = vadd.f32 %v2586, %v2655
  %v2688 = vld [vmem:[%s2587 + $0x6] sm:$0xff]
  %v2689 = vld [vmem:[%s2587 + $0xe] sm:$0xff]
  %v2690 = vld [vmem:[%s2587 + $0x26] sm:$0xff]
  %v2691 = vld [vmem:[%s2587 + $0x2e] sm:$0xff]
  %v2692 = vld [vmem:[%s2587 + $0x46] sm:$0xff]
  %v2693 = vld [vmem:[%s2587 + $0x4e] sm:$0xff]
  %v2694 = vld [vmem:[%s2587 + $0x66] sm:$0xff]
  %v2695 = vld [vmem:[%s2587 + $0x6e] sm:$0xff]
  %v2696 = vld [vmem:[%s2587 + $0x86] sm:$0xff]
  %v2697 = vld [vmem:[%s2587 + $0x8e] sm:$0xff]
  %v2698 = vld [vmem:[%s2587 + $0xa6] sm:$0xff]
  %v2699 = vld [vmem:[%s2587 + $0xae] sm:$0xff]
  %v2700 = vld [vmem:[%s2587 + $0xc6] sm:$0xff]
  %v2701 = vld [vmem:[%s2587 + $0xce] sm:$0xff]
  %v2702 = vld [vmem:[%s2587 + $0xe6] sm:$0xff]
  %v2703 = vld [vmem:[%s2587 + $0xee] sm:$0xff]
  %v2704 = vld [vmem:[%s2587 + $0x106] sm:$0xff]
  %v2705 = vld [vmem:[%s2587 + $0x10e] sm:$0xff]
  %v2706 = vld [vmem:[%s2587 + $0x126] sm:$0xff]
  %v2707 = vld [vmem:[%s2587 + $0x12e] sm:$0xff]
  %v2708 = vld [vmem:[%s2587 + $0x146] sm:$0xff]
  %v2709 = vld [vmem:[%s2587 + $0x14e] sm:$0xff]
  %v2710 = vld [vmem:[%s2587 + $0x166] sm:$0xff]
  %v2711 = vld [vmem:[%s2587 + $0x16e] sm:$0xff]
  %v2712 = vld [vmem:[%s2587 + $0x186] sm:$0xff]
  %v2713 = vld [vmem:[%s2587 + $0x18e] sm:$0xff]
  %v2714 = vld [vmem:[%s2587 + $0x1a6] sm:$0xff]
  %v2715 = vld [vmem:[%s2587 + $0x1ae] sm:$0xff]
  %v2716 = vld [vmem:[%s2587 + $0x1c6] sm:$0xff]
  %v2717 = vld [vmem:[%s2587 + $0x1ce] sm:$0xff]
  %v2718 = vld [vmem:[%s2587 + $0x1e6] sm:$0xff]
  %v2719 = vld [vmem:[%s2587 + $0x1ee] sm:$0xff]
  %v2720 = vlaneseq
  %v2721 = vshrl.u32 %v2720, 7
  %v2722 = vsub.s32 0, %v2721
  %v2723 = vrot.slane %v1164, %v2722
  %v2724 = vmul.f32 %v2688, %v2723
  %v2725 = vmul.f32 %v2689, %v2723
  %v2726 = vmul.f32 %v2690, %v2723
  %v2727 = vmul.f32 %v2691, %v2723
  %v2728 = vmul.f32 %v2692, %v2723
  %v2729 = vmul.f32 %v2693, %v2723
  %v2730 = vmul.f32 %v2694, %v2723
  %v2731 = vmul.f32 %v2695, %v2723
  %v2732 = vmul.f32 %v2696, %v2723
  %v2733 = vmul.f32 %v2697, %v2723
  %v2734 = vmul.f32 %v2698, %v2723
  %v2735 = vmul.f32 %v2699, %v2723
  %v2736 = vmul.f32 %v2700, %v2723
  %v2737 = vmul.f32 %v2701, %v2723
  %v2738 = vmul.f32 %v2702, %v2723
  %v2739 = vmul.f32 %v2703, %v2723
  %v2740 = vmul.f32 %v2704, %v2723
  %v2741 = vmul.f32 %v2705, %v2723
  %v2742 = vmul.f32 %v2706, %v2723
  %v2743 = vmul.f32 %v2707, %v2723
  %v2744 = vmul.f32 %v2708, %v2723
  %v2745 = vmul.f32 %v2709, %v2723
  %v2746 = vmul.f32 %v2710, %v2723
  %v2747 = vmul.f32 %v2711, %v2723
  %v2748 = vmul.f32 %v2712, %v2723
  %v2749 = vmul.f32 %v2713, %v2723
  %v2750 = vmul.f32 %v2714, %v2723
  %v2751 = vmul.f32 %v2715, %v2723
  %v2752 = vmul.f32 %v2716, %v2723
  %v2753 = vmul.f32 %v2717, %v2723
  %v2754 = vmul.f32 %v2718, %v2723
  %v2755 = vmul.f32 %v2719, %v2723
  %v2756 = vadd.f32 %v2656, %v2724
  %v2757 = vadd.f32 %v2657, %v2725
  %v2758 = vadd.f32 %v2658, %v2726
  %v2759 = vadd.f32 %v2659, %v2727
  %v2760 = vadd.f32 %v2660, %v2728
  %v2761 = vadd.f32 %v2661, %v2729
  %v2762 = vadd.f32 %v2662, %v2730
  %v2763 = vadd.f32 %v2663, %v2731
  %v2764 = vadd.f32 %v2664, %v2732
  %v2765 = vadd.f32 %v2665, %v2733
  %v2766 = vadd.f32 %v2666, %v2734
  %v2767 = vadd.f32 %v2667, %v2735
  %v2768 = vadd.f32 %v2668, %v2736
  %v2769 = vadd.f32 %v2669, %v2737
  %v2770 = vadd.f32 %v2670, %v2738
  %v2771 = vadd.f32 %v2671, %v2739
  %v2772 = vadd.f32 %v2672, %v2740
  %v2773 = vadd.f32 %v2673, %v2741
  %v2774 = vadd.f32 %v2674, %v2742
  %v2775 = vadd.f32 %v2675, %v2743
  %v2776 = vadd.f32 %v2676, %v2744
  %v2777 = vadd.f32 %v2677, %v2745
  %v2778 = vadd.f32 %v2678, %v2746
  %v2779 = vadd.f32 %v2679, %v2747
  %v2780 = vadd.f32 %v2680, %v2748
  %v2781 = vadd.f32 %v2681, %v2749
  %v2782 = vadd.f32 %v2682, %v2750
  %v2783 = vadd.f32 %v2683, %v2751
  %v2784 = vadd.f32 %v2684, %v2752
  %v2785 = vadd.f32 %v2685, %v2753
  %v2786 = vadd.f32 %v2686, %v2754
  %v2787 = vadd.f32 %v2687, %v2755
  %v2788 = vld [vmem:[%s2587 + $0x8] sm:$0xff]
  %v2789 = vld [vmem:[%s2587 + $0x10] sm:$0xff]
  %v2790 = vld [vmem:[%s2587 + $0x28] sm:$0xff]
  %v2791 = vld [vmem:[%s2587 + $0x30] sm:$0xff]
  %v2792 = vld [vmem:[%s2587 + $0x48] sm:$0xff]
  %v2793 = vld [vmem:[%s2587 + $0x50] sm:$0xff]
  %v2794 = vld [vmem:[%s2587 + $0x68] sm:$0xff]
  %v2795 = vld [vmem:[%s2587 + $0x70] sm:$0xff]
  %v2796 = vld [vmem:[%s2587 + $0x88] sm:$0xff]
  %v2797 = vld [vmem:[%s2587 + $0x90] sm:$0xff]
  %v2798 = vld [vmem:[%s2587 + $0xa8] sm:$0xff]
  %v2799 = vld [vmem:[%s2587 + $0xb0] sm:$0xff]
  %v2800 = vld [vmem:[%s2587 + $0xc8] sm:$0xff]
  %v2801 = vld [vmem:[%s2587 + $0xd0] sm:$0xff]
  %v2802 = vld [vmem:[%s2587 + $0xe8] sm:$0xff]
  %v2803 = vld [vmem:[%s2587 + $0xf0] sm:$0xff]
  %v2804 = vld [vmem:[%s2587 + $0x108] sm:$0xff]
  %v2805 = vld [vmem:[%s2587 + $0x110] sm:$0xff]
  %v2806 = vld [vmem:[%s2587 + $0x128] sm:$0xff]
  %v2807 = vld [vmem:[%s2587 + $0x130] sm:$0xff]
  %v2808 = vld [vmem:[%s2587 + $0x148] sm:$0xff]
  %v2809 = vld [vmem:[%s2587 + $0x150] sm:$0xff]
  %v2810 = vld [vmem:[%s2587 + $0x168] sm:$0xff]
  %v2811 = vld [vmem:[%s2587 + $0x170] sm:$0xff]
  %v2812 = vld [vmem:[%s2587 + $0x188] sm:$0xff]
  %v2813 = vld [vmem:[%s2587 + $0x190] sm:$0xff]
  %v2814 = vld [vmem:[%s2587 + $0x1a8] sm:$0xff]
  %v2815 = vld [vmem:[%s2587 + $0x1b0] sm:$0xff]
  %v2816 = vld [vmem:[%s2587 + $0x1c8] sm:$0xff]
  %v2817 = vld [vmem:[%s2587 + $0x1d0] sm:$0xff]
  %v2818 = vld [vmem:[%s2587 + $0x1e8] sm:$0xff]
  %v2819 = vld [vmem:[%s2587 + $0x1f0] sm:$0xff]
  %v2820 = vlaneseq
  %v2821 = vshrl.u32 %v2820, 7
  %v2822 = vsub.s32 1, %v2821
  %v2823 = vrot.slane %v1164, %v2822
  %v2824 = vmul.f32 %v2788, %v2823
  %v2825 = vmul.f32 %v2789, %v2823
  %v2826 = vmul.f32 %v2790, %v2823
  %v2827 = vmul.f32 %v2791, %v2823
  %v2828 = vmul.f32 %v2792, %v2823
  %v2829 = vmul.f32 %v2793, %v2823
  %v2830 = vmul.f32 %v2794, %v2823
  %v2831 = vmul.f32 %v2795, %v2823
  %v2832 = vmul.f32 %v2796, %v2823
  %v2833 = vmul.f32 %v2797, %v2823
  %v2834 = vmul.f32 %v2798, %v2823
  %v2835 = vmul.f32 %v2799, %v2823
  %v2836 = vmul.f32 %v2800, %v2823
  %v2837 = vmul.f32 %v2801, %v2823
  %v2838 = vmul.f32 %v2802, %v2823
  %v2839 = vmul.f32 %v2803, %v2823
  %v2840 = vmul.f32 %v2804, %v2823
  %v2841 = vmul.f32 %v2805, %v2823
  %v2842 = vmul.f32 %v2806, %v2823
  %v2843 = vmul.f32 %v2807, %v2823
  %v2844 = vmul.f32 %v2808, %v2823
  %v2845 = vmul.f32 %v2809, %v2823
  %v2846 = vmul.f32 %v2810, %v2823
  %v2847 = vmul.f32 %v2811, %v2823
  %v2848 = vmul.f32 %v2812, %v2823
  %v2849 = vmul.f32 %v2813, %v2823
  %v2850 = vmul.f32 %v2814, %v2823
  %v2851 = vmul.f32 %v2815, %v2823
  %v2852 = vmul.f32 %v2816, %v2823
  %v2853 = vmul.f32 %v2817, %v2823
  %v2854 = vmul.f32 %v2818, %v2823
  %v2855 = vmul.f32 %v2819, %v2823
  %v2856 = vadd.f32 %v2756, %v2824
  %v2857 = vadd.f32 %v2757, %v2825
  %v2858 = vadd.f32 %v2758, %v2826
  %v2859 = vadd.f32 %v2759, %v2827
  %v2860 = vadd.f32 %v2760, %v2828
  %v2861 = vadd.f32 %v2761, %v2829
  %v2862 = vadd.f32 %v2762, %v2830
  %v2863 = vadd.f32 %v2763, %v2831
  %v2864 = vadd.f32 %v2764, %v2832
  %v2865 = vadd.f32 %v2765, %v2833
  %v2866 = vadd.f32 %v2766, %v2834
  %v2867 = vadd.f32 %v2767, %v2835
  %v2868 = vadd.f32 %v2768, %v2836
  %v2869 = vadd.f32 %v2769, %v2837
  %v2870 = vadd.f32 %v2770, %v2838
  %v2871 = vadd.f32 %v2771, %v2839
  %v2872 = vadd.f32 %v2772, %v2840
  %v2873 = vadd.f32 %v2773, %v2841
  %v2874 = vadd.f32 %v2774, %v2842
  %v2875 = vadd.f32 %v2775, %v2843
  %v2876 = vadd.f32 %v2776, %v2844
  %v2877 = vadd.f32 %v2777, %v2845
  %v2878 = vadd.f32 %v2778, %v2846
  %v2879 = vadd.f32 %v2779, %v2847
  %v2880 = vadd.f32 %v2780, %v2848
  %v2881 = vadd.f32 %v2781, %v2849
  %v2882 = vadd.f32 %v2782, %v2850
  %v2883 = vadd.f32 %v2783, %v2851
  %v2884 = vadd.f32 %v2784, %v2852
  %v2885 = vadd.f32 %v2785, %v2853
  %v2886 = vadd.f32 %v2786, %v2854
  %v2887 = vadd.f32 %v2787, %v2855
  %v2888 = vld [vmem:[%s2587 + $0xa] sm:$0xff]
  %v2889 = vld [vmem:[%s2587 + $0x12] sm:$0xff]
  %v2890 = vld [vmem:[%s2587 + $0x2a] sm:$0xff]
  %v2891 = vld [vmem:[%s2587 + $0x32] sm:$0xff]
  %v2892 = vld [vmem:[%s2587 + $0x4a] sm:$0xff]
  %v2893 = vld [vmem:[%s2587 + $0x52] sm:$0xff]
  %v2894 = vld [vmem:[%s2587 + $0x6a] sm:$0xff]
  %v2895 = vld [vmem:[%s2587 + $0x72] sm:$0xff]
  %v2896 = vld [vmem:[%s2587 + $0x8a] sm:$0xff]
  %v2897 = vld [vmem:[%s2587 + $0x92] sm:$0xff]
  %v2898 = vld [vmem:[%s2587 + $0xaa] sm:$0xff]
  %v2899 = vld [vmem:[%s2587 + $0xb2] sm:$0xff]
  %v2900 = vld [vmem:[%s2587 + $0xca] sm:$0xff]
  %v2901 = vld [vmem:[%s2587 + $0xd2] sm:$0xff]
  %v2902 = vld [vmem:[%s2587 + $0xea] sm:$0xff]
  %v2903 = vld [vmem:[%s2587 + $0xf2] sm:$0xff]
  %v2904 = vld [vmem:[%s2587 + $0x10a] sm:$0xff]
  %v2905 = vld [vmem:[%s2587 + $0x112] sm:$0xff]
  %v2906 = vld [vmem:[%s2587 + $0x12a] sm:$0xff]
  %v2907 = vld [vmem:[%s2587 + $0x132] sm:$0xff]
  %v2908 = vld [vmem:[%s2587 + $0x14a] sm:$0xff]
  %v2909 = vld [vmem:[%s2587 + $0x152] sm:$0xff]
  %v2910 = vld [vmem:[%s2587 + $0x16a] sm:$0xff]
  %v2911 = vld [vmem:[%s2587 + $0x172] sm:$0xff]
  %v2912 = vld [vmem:[%s2587 + $0x18a] sm:$0xff]
  %v2913 = vld [vmem:[%s2587 + $0x192] sm:$0xff]
  %v2914 = vld [vmem:[%s2587 + $0x1aa] sm:$0xff]
  %v2915 = vld [vmem:[%s2587 + $0x1b2] sm:$0xff]
  %v2916 = vld [vmem:[%s2587 + $0x1ca] sm:$0xff]
  %v2917 = vld [vmem:[%s2587 + $0x1d2] sm:$0xff]
  %v2918 = vld [vmem:[%s2587 + $0x1ea] sm:$0xff]
  %v2919 = vld [vmem:[%s2587 + $0x1f2] sm:$0xff]
  %v2920 = vlaneseq
  %v2921 = vshrl.u32 %v2920, 7
  %v2922 = vsub.s32 2, %v2921
  %v2923 = vrot.slane %v1164, %v2922
  %v2924 = vmul.f32 %v2888, %v2923
  %v2925 = vmul.f32 %v2889, %v2923
  %v2926 = vmul.f32 %v2890, %v2923
  %v2927 = vmul.f32 %v2891, %v2923
  %v2928 = vmul.f32 %v2892, %v2923
  %v2929 = vmul.f32 %v2893, %v2923
  %v2930 = vmul.f32 %v2894, %v2923
  %v2931 = vmul.f32 %v2895, %v2923
  %v2932 = vmul.f32 %v2896, %v2923
  %v2933 = vmul.f32 %v2897, %v2923
  %v2934 = vmul.f32 %v2898, %v2923
  %v2935 = vmul.f32 %v2899, %v2923
  %v2936 = vmul.f32 %v2900, %v2923
  %v2937 = vmul.f32 %v2901, %v2923
  %v2938 = vmul.f32 %v2902, %v2923
  %v2939 = vmul.f32 %v2903, %v2923
  %v2940 = vmul.f32 %v2904, %v2923
  %v2941 = vmul.f32 %v2905, %v2923
  %v2942 = vmul.f32 %v2906, %v2923
  %v2943 = vmul.f32 %v2907, %v2923
  %v2944 = vmul.f32 %v2908, %v2923
  %v2945 = vmul.f32 %v2909, %v2923
  %v2946 = vmul.f32 %v2910, %v2923
  %v2947 = vmul.f32 %v2911, %v2923
  %v2948 = vmul.f32 %v2912, %v2923
  %v2949 = vmul.f32 %v2913, %v2923
  %v2950 = vmul.f32 %v2914, %v2923
  %v2951 = vmul.f32 %v2915, %v2923
  %v2952 = vmul.f32 %v2916, %v2923
  %v2953 = vmul.f32 %v2917, %v2923
  %v2954 = vmul.f32 %v2918, %v2923
  %v2955 = vmul.f32 %v2919, %v2923
  %v2956 = vadd.f32 %v2856, %v2924
  %v2957 = vadd.f32 %v2857, %v2925
  %v2958 = vadd.f32 %v2858, %v2926
  %v2959 = vadd.f32 %v2859, %v2927
  %v2960 = vadd.f32 %v2860, %v2928
  %v2961 = vadd.f32 %v2861, %v2929
  %v2962 = vadd.f32 %v2862, %v2930
  %v2963 = vadd.f32 %v2863, %v2931
  %v2964 = vadd.f32 %v2864, %v2932
  %v2965 = vadd.f32 %v2865, %v2933
  %v2966 = vadd.f32 %v2866, %v2934
  %v2967 = vadd.f32 %v2867, %v2935
  %v2968 = vadd.f32 %v2868, %v2936
  %v2969 = vadd.f32 %v2869, %v2937
  %v2970 = vadd.f32 %v2870, %v2938
  %v2971 = vadd.f32 %v2871, %v2939
  %v2972 = vadd.f32 %v2872, %v2940
  %v2973 = vadd.f32 %v2873, %v2941
  %v2974 = vadd.f32 %v2874, %v2942
  %v2975 = vadd.f32 %v2875, %v2943
  %v2976 = vadd.f32 %v2876, %v2944
  %v2977 = vadd.f32 %v2877, %v2945
  %v2978 = vadd.f32 %v2878, %v2946
  %v2979 = vadd.f32 %v2879, %v2947
  %v2980 = vadd.f32 %v2880, %v2948
  %v2981 = vadd.f32 %v2881, %v2949
  %v2982 = vadd.f32 %v2882, %v2950
  %v2983 = vadd.f32 %v2883, %v2951
  %v2984 = vadd.f32 %v2884, %v2952
  %v2985 = vadd.f32 %v2885, %v2953
  %v2986 = vadd.f32 %v2886, %v2954
  %v2987 = vadd.f32 %v2887, %v2955
  %v2988 = vld [vmem:[%s2587 + $0x14] sm:$0xff]
  %v2989 = vld [vmem:[%s2587 + $0x34] sm:$0xff]
  %v2990 = vld [vmem:[%s2587 + $0x54] sm:$0xff]
  %v2991 = vld [vmem:[%s2587 + $0x74] sm:$0xff]
  %v2992 = vld [vmem:[%s2587 + $0x94] sm:$0xff]
  %v2993 = vld [vmem:[%s2587 + $0xb4] sm:$0xff]
  %v2994 = vld [vmem:[%s2587 + $0xd4] sm:$0xff]
  %v2995 = vld [vmem:[%s2587 + $0xf4] sm:$0xff]
  %v2996 = vld [vmem:[%s2587 + $0x114] sm:$0xff]
  %v2997 = vld [vmem:[%s2587 + $0x134] sm:$0xff]
  %v2998 = vld [vmem:[%s2587 + $0x154] sm:$0xff]
  %v2999 = vld [vmem:[%s2587 + $0x174] sm:$0xff]
  %v3000 = vld [vmem:[%s2587 + $0x194] sm:$0xff]
  %v3001 = vld [vmem:[%s2587 + $0x1b4] sm:$0xff]
  %v3002 = vld [vmem:[%s2587 + $0x1d4] sm:$0xff]
  %v3003 = vld [vmem:[%s2587 + $0x1f4] sm:$0xff]
  %v3004 = vlaneseq
  %v3005 = vshrl.u32 %v3004, 7
  %v3006 = vsub.s32 3, %v3005
  %v3007 = vrot.slane %v1164, %v3006
  %v3008 = vmul.f32 %v2589, %v3007
  %v3009 = vmul.f32 %v2988, %v3007
  %v3010 = vmul.f32 %v2591, %v3007
  %v3011 = vmul.f32 %v2989, %v3007
  %v3012 = vmul.f32 %v2593, %v3007
  %v3013 = vmul.f32 %v2990, %v3007
  %v3014 = vmul.f32 %v2595, %v3007
  %v3015 = vmul.f32 %v2991, %v3007
  %v3016 = vmul.f32 %v2597, %v3007
  %v3017 = vmul.f32 %v2992, %v3007
  %v3018 = vmul.f32 %v2599, %v3007
  %v3019 = vmul.f32 %v2993, %v3007
  %v3020 = vmul.f32 %v2601, %v3007
  %v3021 = vmul.f32 %v2994, %v3007
  %v3022 = vmul.f32 %v2603, %v3007
  %v3023 = vmul.f32 %v2995, %v3007
  %v3024 = vmul.f32 %v2605, %v3007
  %v3025 = vmul.f32 %v2996, %v3007
  %v3026 = vmul.f32 %v2607, %v3007
  %v3027 = vmul.f32 %v2997, %v3007
  %v3028 = vmul.f32 %v2609, %v3007
  %v3029 = vmul.f32 %v2998, %v3007
  %v3030 = vmul.f32 %v2611, %v3007
  %v3031 = vmul.f32 %v2999, %v3007
  %v3032 = vmul.f32 %v2613, %v3007
  %v3033 = vmul.f32 %v3000, %v3007
  %v3034 = vmul.f32 %v2615, %v3007
  %v3035 = vmul.f32 %v3001, %v3007
  %v3036 = vmul.f32 %v2617, %v3007
  %v3037 = vmul.f32 %v3002, %v3007
  %v3038 = vmul.f32 %v2619, %v3007
  %v3039 = vmul.f32 %v3003, %v3007
  %v3040 = vadd.f32 %v2956, %v3008
  %v3041 = vadd.f32 %v2957, %v3009
  %v3042 = vadd.f32 %v2958, %v3010
  %v3043 = vadd.f32 %v2959, %v3011
  %v3044 = vadd.f32 %v2960, %v3012
  %v3045 = vadd.f32 %v2961, %v3013
  %v3046 = vadd.f32 %v2962, %v3014
  %v3047 = vadd.f32 %v2963, %v3015
  %v3048 = vadd.f32 %v2964, %v3016
  %v3049 = vadd.f32 %v2965, %v3017
  %v3050 = vadd.f32 %v2966, %v3018
  %v3051 = vadd.f32 %v2967, %v3019
  %v3052 = vadd.f32 %v2968, %v3020
  %v3053 = vadd.f32 %v2969, %v3021
  %v3054 = vadd.f32 %v2970, %v3022
  %v3055 = vadd.f32 %v2971, %v3023
  %v3056 = vadd.f32 %v2972, %v3024
  %v3057 = vadd.f32 %v2973, %v3025
  %v3058 = vadd.f32 %v2974, %v3026
  %v3059 = vadd.f32 %v2975, %v3027
  %v3060 = vadd.f32 %v2976, %v3028
  %v3061 = vadd.f32 %v2977, %v3029
  %v3062 = vadd.f32 %v2978, %v3030
  %v3063 = vadd.f32 %v2979, %v3031
  %v3064 = vadd.f32 %v2980, %v3032
  %v3065 = vadd.f32 %v2981, %v3033
  %v3066 = vadd.f32 %v2982, %v3034
  %v3067 = vadd.f32 %v2983, %v3035
  %v3068 = vadd.f32 %v2984, %v3036
  %v3069 = vadd.f32 %v2985, %v3037
  %v3070 = vadd.f32 %v2986, %v3038
  %v3071 = vadd.f32 %v2987, %v3039
  %s3072 = scalar_lea.vmem [#allocation3], 256
  %v3073 = vld [vmem:[%s3072 + $0x4] sm:$0xff]
  %v3074 = vld [vmem:[%s3072 + $0xc] sm:$0xff]
  %v3075 = vld [vmem:[%s3072 + $0x24] sm:$0xff]
  %v3076 = vld [vmem:[%s3072 + $0x2c] sm:$0xff]
  %v3077 = vld [vmem:[%s3072 + $0x44] sm:$0xff]
  %v3078 = vld [vmem:[%s3072 + $0x4c] sm:$0xff]
  %v3079 = vld [vmem:[%s3072 + $0x64] sm:$0xff]
  %v3080 = vld [vmem:[%s3072 + $0x6c] sm:$0xff]
  %v3081 = vld [vmem:[%s3072 + $0x84] sm:$0xff]
  %v3082 = vld [vmem:[%s3072 + $0x8c] sm:$0xff]
  %v3083 = vld [vmem:[%s3072 + $0xa4] sm:$0xff]
  %v3084 = vld [vmem:[%s3072 + $0xac] sm:$0xff]
  %v3085 = vld [vmem:[%s3072 + $0xc4] sm:$0xff]
  %v3086 = vld [vmem:[%s3072 + $0xcc] sm:$0xff]
  %v3087 = vld [vmem:[%s3072 + $0xe4] sm:$0xff]
  %v3088 = vld [vmem:[%s3072 + $0xec] sm:$0xff]
  %v3089 = vld [vmem:[%s3072 + $0x104] sm:$0xff]
  %v3090 = vld [vmem:[%s3072 + $0x10c] sm:$0xff]
  %v3091 = vld [vmem:[%s3072 + $0x124] sm:$0xff]
  %v3092 = vld [vmem:[%s3072 + $0x12c] sm:$0xff]
  %v3093 = vld [vmem:[%s3072 + $0x144] sm:$0xff]
  %v3094 = vld [vmem:[%s3072 + $0x14c] sm:$0xff]
  %v3095 = vld [vmem:[%s3072 + $0x164] sm:$0xff]
  %v3096 = vld [vmem:[%s3072 + $0x16c] sm:$0xff]
  %v3097 = vld [vmem:[%s3072 + $0x184] sm:$0xff]
  %v3098 = vld [vmem:[%s3072 + $0x18c] sm:$0xff]
  %v3099 = vld [vmem:[%s3072 + $0x1a4] sm:$0xff]
  %v3100 = vld [vmem:[%s3072 + $0x1ac] sm:$0xff]
  %v3101 = vld [vmem:[%s3072 + $0x1c4] sm:$0xff]
  %v3102 = vld [vmem:[%s3072 + $0x1cc] sm:$0xff]
  %v3103 = vld [vmem:[%s3072 + $0x1e4] sm:$0xff]
  %v3104 = vld [vmem:[%s3072 + $0x1ec] sm:$0xff]
  %v3105 = vlaneseq
  %v3106 = vshrl.u32 %v3105, 7
  %v3107 = vsub.s32 4, %v3106
  %v3108 = vrot.slane %v1164, %v3107
  %v3109 = vmul.f32 %v3073, %v3108
  %v3110 = vmul.f32 %v3074, %v3108
  %v3111 = vmul.f32 %v3075, %v3108
  %v3112 = vmul.f32 %v3076, %v3108
  %v3113 = vmul.f32 %v3077, %v3108
  %v3114 = vmul.f32 %v3078, %v3108
  %v3115 = vmul.f32 %v3079, %v3108
  %v3116 = vmul.f32 %v3080, %v3108
  %v3117 = vmul.f32 %v3081, %v3108
  %v3118 = vmul.f32 %v3082, %v3108
  %v3119 = vmul.f32 %v3083, %v3108
  %v3120 = vmul.f32 %v3084, %v3108
  %v3121 = vmul.f32 %v3085, %v3108
  %v3122 = vmul.f32 %v3086, %v3108
  %v3123 = vmul.f32 %v3087, %v3108
  %v3124 = vmul.f32 %v3088, %v3108
  %v3125 = vmul.f32 %v3089, %v3108
  %v3126 = vmul.f32 %v3090, %v3108
  %v3127 = vmul.f32 %v3091, %v3108
  %v3128 = vmul.f32 %v3092, %v3108
  %v3129 = vmul.f32 %v3093, %v3108
  %v3130 = vmul.f32 %v3094, %v3108
  %v3131 = vmul.f32 %v3095, %v3108
  %v3132 = vmul.f32 %v3096, %v3108
  %v3133 = vmul.f32 %v3097, %v3108
  %v3134 = vmul.f32 %v3098, %v3108
  %v3135 = vmul.f32 %v3099, %v3108
  %v3136 = vmul.f32 %v3100, %v3108
  %v3137 = vmul.f32 %v3101, %v3108
  %v3138 = vmul.f32 %v3102, %v3108
  %v3139 = vmul.f32 %v3103, %v3108
  %v3140 = vmul.f32 %v3104, %v3108
  %v3141 = vadd.f32 %v3040, %v3109
  %v3142 = vadd.f32 %v3041, %v3110
  %v3143 = vadd.f32 %v3042, %v3111
  %v3144 = vadd.f32 %v3043, %v3112
  %v3145 = vadd.f32 %v3044, %v3113
  %v3146 = vadd.f32 %v3045, %v3114
  %v3147 = vadd.f32 %v3046, %v3115
  %v3148 = vadd.f32 %v3047, %v3116
  %v3149 = vadd.f32 %v3048, %v3117
  %v3150 = vadd.f32 %v3049, %v3118
  %v3151 = vadd.f32 %v3050, %v3119
  %v3152 = vadd.f32 %v3051, %v3120
  %v3153 = vadd.f32 %v3052, %v3121
  %v3154 = vadd.f32 %v3053, %v3122
  %v3155 = vadd.f32 %v3054, %v3123
  %v3156 = vadd.f32 %v3055, %v3124
  %v3157 = vadd.f32 %v3056, %v3125
  %v3158 = vadd.f32 %v3057, %v3126
  %v3159 = vadd.f32 %v3058, %v3127
  %v3160 = vadd.f32 %v3059, %v3128
  %v3161 = vadd.f32 %v3060, %v3129
  %v3162 = vadd.f32 %v3061, %v3130
  %v3163 = vadd.f32 %v3062, %v3131
  %v3164 = vadd.f32 %v3063, %v3132
  %v3165 = vadd.f32 %v3064, %v3133
  %v3166 = vadd.f32 %v3065, %v3134
  %v3167 = vadd.f32 %v3066, %v3135
  %v3168 = vadd.f32 %v3067, %v3136
  %v3169 = vadd.f32 %v3068, %v3137
  %v3170 = vadd.f32 %v3069, %v3138
  %v3171 = vadd.f32 %v3070, %v3139
  %v3172 = vadd.f32 %v3071, %v3140
  %v3173 = vld [vmem:[%s3072 + $0x6] sm:$0xff]
  %v3174 = vld [vmem:[%s3072 + $0xe] sm:$0xff]
  %v3175 = vld [vmem:[%s3072 + $0x26] sm:$0xff]
  %v3176 = vld [vmem:[%s3072 + $0x2e] sm:$0xff]
  %v3177 = vld [vmem:[%s3072 + $0x46] sm:$0xff]
  %v3178 = vld [vmem:[%s3072 + $0x4e] sm:$0xff]
  %v3179 = vld [vmem:[%s3072 + $0x66] sm:$0xff]
  %v3180 = vld [vmem:[%s3072 + $0x6e] sm:$0xff]
  %v3181 = vld [vmem:[%s3072 + $0x86] sm:$0xff]
  %v3182 = vld [vmem:[%s3072 + $0x8e] sm:$0xff]
  %v3183 = vld [vmem:[%s3072 + $0xa6] sm:$0xff]
  %v3184 = vld [vmem:[%s3072 + $0xae] sm:$0xff]
  %v3185 = vld [vmem:[%s3072 + $0xc6] sm:$0xff]
  %v3186 = vld [vmem:[%s3072 + $0xce] sm:$0xff]
  %v3187 = vld [vmem:[%s3072 + $0xe6] sm:$0xff]
  %v3188 = vld [vmem:[%s3072 + $0xee] sm:$0xff]
  %v3189 = vld [vmem:[%s3072 + $0x106] sm:$0xff]
  %v3190 = vld [vmem:[%s3072 + $0x10e] sm:$0xff]
  %v3191 = vld [vmem:[%s3072 + $0x126] sm:$0xff]
  %v3192 = vld [vmem:[%s3072 + $0x12e] sm:$0xff]
  %v3193 = vld [vmem:[%s3072 + $0x146] sm:$0xff]
  %v3194 = vld [vmem:[%s3072 + $0x14e] sm:$0xff]
  %v3195 = vld [vmem:[%s3072 + $0x166] sm:$0xff]
  %v3196 = vld [vmem:[%s3072 + $0x16e] sm:$0xff]
  %v3197 = vld [vmem:[%s3072 + $0x186] sm:$0xff]
  %v3198 = vld [vmem:[%s3072 + $0x18e] sm:$0xff]
  %v3199 = vld [vmem:[%s3072 + $0x1a6] sm:$0xff]
  %v3200 = vld [vmem:[%s3072 + $0x1ae] sm:$0xff]
  %v3201 = vld [vmem:[%s3072 + $0x1c6] sm:$0xff]
  %v3202 = vld [vmem:[%s3072 + $0x1ce] sm:$0xff]
  %v3203 = vld [vmem:[%s3072 + $0x1e6] sm:$0xff]
  %v3204 = vld [vmem:[%s3072 + $0x1ee] sm:$0xff]
  %v3205 = vlaneseq
  %v3206 = vshrl.u32 %v3205, 7
  %v3207 = vsub.s32 5, %v3206
  %v3208 = vrot.slane %v1164, %v3207
  %v3209 = vmul.f32 %v3173, %v3208
  %v3210 = vmul.f32 %v3174, %v3208
  %v3211 = vmul.f32 %v3175, %v3208
  %v3212 = vmul.f32 %v3176, %v3208
  %v3213 = vmul.f32 %v3177, %v3208
  %v3214 = vmul.f32 %v3178, %v3208
  %v3215 = vmul.f32 %v3179, %v3208
  %v3216 = vmul.f32 %v3180, %v3208
  %v3217 = vmul.f32 %v3181, %v3208
  %v3218 = vmul.f32 %v3182, %v3208
  %v3219 = vmul.f32 %v3183, %v3208
  %v3220 = vmul.f32 %v3184, %v3208
  %v3221 = vmul.f32 %v3185, %v3208
  %v3222 = vmul.f32 %v3186, %v3208
  %v3223 = vmul.f32 %v3187, %v3208
  %v3224 = vmul.f32 %v3188, %v3208
  %v3225 = vmul.f32 %v3189, %v3208
  %v3226 = vmul.f32 %v3190, %v3208
  %v3227 = vmul.f32 %v3191, %v3208
  %v3228 = vmul.f32 %v3192, %v3208
  %v3229 = vmul.f32 %v3193, %v3208
  %v3230 = vmul.f32 %v3194, %v3208
  %v3231 = vmul.f32 %v3195, %v3208
  %v3232 = vmul.f32 %v3196, %v3208
  %v3233 = vmul.f32 %v3197, %v3208
  %v3234 = vmul.f32 %v3198, %v3208
  %v3235 = vmul.f32 %v3199, %v3208
  %v3236 = vmul.f32 %v3200, %v3208
  %v3237 = vmul.f32 %v3201, %v3208
  %v3238 = vmul.f32 %v3202, %v3208
  %v3239 = vmul.f32 %v3203, %v3208
  %v3240 = vmul.f32 %v3204, %v3208
  %v3241 = vadd.f32 %v3141, %v3209
  %v3242 = vadd.f32 %v3142, %v3210
  %v3243 = vadd.f32 %v3143, %v3211
  %v3244 = vadd.f32 %v3144, %v3212
  %v3245 = vadd.f32 %v3145, %v3213
  %v3246 = vadd.f32 %v3146, %v3214
  %v3247 = vadd.f32 %v3147, %v3215
  %v3248 = vadd.f32 %v3148, %v3216
  %v3249 = vadd.f32 %v3149, %v3217
  %v3250 = vadd.f32 %v3150, %v3218
  %v3251 = vadd.f32 %v3151, %v3219
  %v3252 = vadd.f32 %v3152, %v3220
  %v3253 = vadd.f32 %v3153, %v3221
  %v3254 = vadd.f32 %v3154, %v3222
  %v3255 = vadd.f32 %v3155, %v3223
  %v3256 = vadd.f32 %v3156, %v3224
  %v3257 = vadd.f32 %v3157, %v3225
  %v3258 = vadd.f32 %v3158, %v3226
  %v3259 = vadd.f32 %v3159, %v3227
  %v3260 = vadd.f32 %v3160, %v3228
  %v3261 = vadd.f32 %v3161, %v3229
  %v3262 = vadd.f32 %v3162, %v3230
  %v3263 = vadd.f32 %v3163, %v3231
  %v3264 = vadd.f32 %v3164, %v3232
  %v3265 = vadd.f32 %v3165, %v3233
  %v3266 = vadd.f32 %v3166, %v3234
  %v3267 = vadd.f32 %v3167, %v3235
  %v3268 = vadd.f32 %v3168, %v3236
  %v3269 = vadd.f32 %v3169, %v3237
  %v3270 = vadd.f32 %v3170, %v3238
  %v3271 = vadd.f32 %v3171, %v3239
  %v3272 = vadd.f32 %v3172, %v3240
  %v3273 = vld [vmem:[%s3072 + $0x8] sm:$0xff]
  %v3274 = vld [vmem:[%s3072 + $0x10] sm:$0xff]
  %v3275 = vld [vmem:[%s3072 + $0x28] sm:$0xff]
  %v3276 = vld [vmem:[%s3072 + $0x30] sm:$0xff]
  %v3277 = vld [vmem:[%s3072 + $0x48] sm:$0xff]
  %v3278 = vld [vmem:[%s3072 + $0x50] sm:$0xff]
  %v3279 = vld [vmem:[%s3072 + $0x68] sm:$0xff]
  %v3280 = vld [vmem:[%s3072 + $0x70] sm:$0xff]
  %v3281 = vld [vmem:[%s3072 + $0x88] sm:$0xff]
  %v3282 = vld [vmem:[%s3072 + $0x90] sm:$0xff]
  %v3283 = vld [vmem:[%s3072 + $0xa8] sm:$0xff]
  %v3284 = vld [vmem:[%s3072 + $0xb0] sm:$0xff]
  %v3285 = vld [vmem:[%s3072 + $0xc8] sm:$0xff]
  %v3286 = vld [vmem:[%s3072 + $0xd0] sm:$0xff]
  %v3287 = vld [vmem:[%s3072 + $0xe8] sm:$0xff]
  %v3288 = vld [vmem:[%s3072 + $0xf0] sm:$0xff]
  %v3289 = vld [vmem:[%s3072 + $0x108] sm:$0xff]
  %v3290 = vld [vmem:[%s3072 + $0x110] sm:$0xff]
  %v3291 = vld [vmem:[%s3072 + $0x128] sm:$0xff]
  %v3292 = vld [vmem:[%s3072 + $0x130] sm:$0xff]
  %v3293 = vld [vmem:[%s3072 + $0x148] sm:$0xff]
  %v3294 = vld [vmem:[%s3072 + $0x150] sm:$0xff]
  %v3295 = vld [vmem:[%s3072 + $0x168] sm:$0xff]
  %v3296 = vld [vmem:[%s3072 + $0x170] sm:$0xff]
  %v3297 = vld [vmem:[%s3072 + $0x188] sm:$0xff]
  %v3298 = vld [vmem:[%s3072 + $0x190] sm:$0xff]
  %v3299 = vld [vmem:[%s3072 + $0x1a8] sm:$0xff]
  %v3300 = vld [vmem:[%s3072 + $0x1b0] sm:$0xff]
  %v3301 = vld [vmem:[%s3072 + $0x1c8] sm:$0xff]
  %v3302 = vld [vmem:[%s3072 + $0x1d0] sm:$0xff]
  %v3303 = vld [vmem:[%s3072 + $0x1e8] sm:$0xff]
  %v3304 = vld [vmem:[%s3072 + $0x1f0] sm:$0xff]
  %v3305 = vlaneseq
  %v3306 = vshrl.u32 %v3305, 7
  %v3307 = vsub.s32 6, %v3306
  %v3308 = vrot.slane %v1164, %v3307
  %v3309 = vmul.f32 %v3273, %v3308
  %v3310 = vmul.f32 %v3274, %v3308
  %v3311 = vmul.f32 %v3275, %v3308
  %v3312 = vmul.f32 %v3276, %v3308
  %v3313 = vmul.f32 %v3277, %v3308
  %v3314 = vmul.f32 %v3278, %v3308
  %v3315 = vmul.f32 %v3279, %v3308
  %v3316 = vmul.f32 %v3280, %v3308
  %v3317 = vmul.f32 %v3281, %v3308
  %v3318 = vmul.f32 %v3282, %v3308
  %v3319 = vmul.f32 %v3283, %v3308
  %v3320 = vmul.f32 %v3284, %v3308
  %v3321 = vmul.f32 %v3285, %v3308
  %v3322 = vmul.f32 %v3286, %v3308
  %v3323 = vmul.f32 %v3287, %v3308
  %v3324 = vmul.f32 %v3288, %v3308
  %v3325 = vmul.f32 %v3289, %v3308
  %v3326 = vmul.f32 %v3290, %v3308
  %v3327 = vmul.f32 %v3291, %v3308
  %v3328 = vmul.f32 %v3292, %v3308
  %v3329 = vmul.f32 %v3293, %v3308
  %v3330 = vmul.f32 %v3294, %v3308
  %v3331 = vmul.f32 %v3295, %v3308
  %v3332 = vmul.f32 %v3296, %v3308
  %v3333 = vmul.f32 %v3297, %v3308
  %v3334 = vmul.f32 %v3298, %v3308
  %v3335 = vmul.f32 %v3299, %v3308
  %v3336 = vmul.f32 %v3300, %v3308
  %v3337 = vmul.f32 %v3301, %v3308
  %v3338 = vmul.f32 %v3302, %v3308
  %v3339 = vmul.f32 %v3303, %v3308
  %v3340 = vmul.f32 %v3304, %v3308
  %v3341 = vadd.f32 %v3241, %v3309
  %v3342 = vadd.f32 %v3242, %v3310
  %v3343 = vadd.f32 %v3243, %v3311
  %v3344 = vadd.f32 %v3244, %v3312
  %v3345 = vadd.f32 %v3245, %v3313
  %v3346 = vadd.f32 %v3246, %v3314
  %v3347 = vadd.f32 %v3247, %v3315
  %v3348 = vadd.f32 %v3248, %v3316
  %v3349 = vadd.f32 %v3249, %v3317
  %v3350 = vadd.f32 %v3250, %v3318
  %v3351 = vadd.f32 %v3251, %v3319
  %v3352 = vadd.f32 %v3252, %v3320
  %v3353 = vadd.f32 %v3253, %v3321
  %v3354 = vadd.f32 %v3254, %v3322
  %v3355 = vadd.f32 %v3255, %v3323
  %v3356 = vadd.f32 %v3256, %v3324
  %v3357 = vadd.f32 %v3257, %v3325
  %v3358 = vadd.f32 %v3258, %v3326
  %v3359 = vadd.f32 %v3259, %v3327
  %v3360 = vadd.f32 %v3260, %v3328
  %v3361 = vadd.f32 %v3261, %v3329
  %v3362 = vadd.f32 %v3262, %v3330
  %v3363 = vadd.f32 %v3263, %v3331
  %v3364 = vadd.f32 %v3264, %v3332
  %v3365 = vadd.f32 %v3265, %v3333
  %v3366 = vadd.f32 %v3266, %v3334
  %v3367 = vadd.f32 %v3267, %v3335
  %v3368 = vadd.f32 %v3268, %v3336
  %v3369 = vadd.f32 %v3269, %v3337
  %v3370 = vadd.f32 %v3270, %v3338
  %v3371 = vadd.f32 %v3271, %v3339
  %v3372 = vadd.f32 %v3272, %v3340
  %v3373 = vld [vmem:[%s3072 + $0xa] sm:$0xff]
  %v3374 = vld [vmem:[%s3072 + $0x12] sm:$0xff]
  %v3375 = vld [vmem:[%s3072 + $0x2a] sm:$0xff]
  %v3376 = vld [vmem:[%s3072 + $0x32] sm:$0xff]
  %v3377 = vld [vmem:[%s3072 + $0x4a] sm:$0xff]
  %v3378 = vld [vmem:[%s3072 + $0x52] sm:$0xff]
  %v3379 = vld [vmem:[%s3072 + $0x6a] sm:$0xff]
  %v3380 = vld [vmem:[%s3072 + $0x72] sm:$0xff]
  %v3381 = vld [vmem:[%s3072 + $0x8a] sm:$0xff]
  %v3382 = vld [vmem:[%s3072 + $0x92] sm:$0xff]
  %v3383 = vld [vmem:[%s3072 + $0xaa] sm:$0xff]
  %v3384 = vld [vmem:[%s3072 + $0xb2] sm:$0xff]
  %v3385 = vld [vmem:[%s3072 + $0xca] sm:$0xff]
  %v3386 = vld [vmem:[%s3072 + $0xd2] sm:$0xff]
  %v3387 = vld [vmem:[%s3072 + $0xea] sm:$0xff]
  %v3388 = vld [vmem:[%s3072 + $0xf2] sm:$0xff]
  %v3389 = vld [vmem:[%s3072 + $0x10a] sm:$0xff]
  %v3390 = vld [vmem:[%s3072 + $0x112] sm:$0xff]
  %v3391 = vld [vmem:[%s3072 + $0x12a] sm:$0xff]
  %v3392 = vld [vmem:[%s3072 + $0x132] sm:$0xff]
  %v3393 = vld [vmem:[%s3072 + $0x14a] sm:$0xff]
  %v3394 = vld [vmem:[%s3072 + $0x152] sm:$0xff]
  %v3395 = vld [vmem:[%s3072 + $0x16a] sm:$0xff]
  %v3396 = vld [vmem:[%s3072 + $0x172] sm:$0xff]
  %v3397 = vld [vmem:[%s3072 + $0x18a] sm:$0xff]
  %v3398 = vld [vmem:[%s3072 + $0x192] sm:$0xff]
  %v3399 = vld [vmem:[%s3072 + $0x1aa] sm:$0xff]
  %v3400 = vld [vmem:[%s3072 + $0x1b2] sm:$0xff]
  %v3401 = vld [vmem:[%s3072 + $0x1ca] sm:$0xff]
  %v3402 = vld [vmem:[%s3072 + $0x1d2] sm:$0xff]
  %v3403 = vld [vmem:[%s3072 + $0x1ea] sm:$0xff]
  %v3404 = vld [vmem:[%s3072 + $0x1f2] sm:$0xff]
  %v3405 = vlaneseq
  %v3406 = vshrl.u32 %v3405, 7
  %v3407 = vsub.s32 7, %v3406
  %v3408 = vrot.slane %v1164, %v3407
  %v3409 = vmul.f32 %v3373, %v3408
  %v3410 = vmul.f32 %v3374, %v3408
  %v3411 = vmul.f32 %v3375, %v3408
  %v3412 = vmul.f32 %v3376, %v3408
  %v3413 = vmul.f32 %v3377, %v3408
  %v3414 = vmul.f32 %v3378, %v3408
  %v3415 = vmul.f32 %v3379, %v3408
  %v3416 = vmul.f32 %v3380, %v3408
  %v3417 = vmul.f32 %v3381, %v3408
  %v3418 = vmul.f32 %v3382, %v3408
  %v3419 = vmul.f32 %v3383, %v3408
  %v3420 = vmul.f32 %v3384, %v3408
  %v3421 = vmul.f32 %v3385, %v3408
  %v3422 = vmul.f32 %v3386, %v3408
  %v3423 = vmul.f32 %v3387, %v3408
  %v3424 = vmul.f32 %v3388, %v3408
  %v3425 = vmul.f32 %v3389, %v3408
  %v3426 = vmul.f32 %v3390, %v3408
  %v3427 = vmul.f32 %v3391, %v3408
  %v3428 = vmul.f32 %v3392, %v3408
  %v3429 = vmul.f32 %v3393, %v3408
  %v3430 = vmul.f32 %v3394, %v3408
  %v3431 = vmul.f32 %v3395, %v3408
  %v3432 = vmul.f32 %v3396, %v3408
  %v3433 = vmul.f32 %v3397, %v3408
  %v3434 = vmul.f32 %v3398, %v3408
  %v3435 = vmul.f32 %v3399, %v3408
  %v3436 = vmul.f32 %v3400, %v3408
  %v3437 = vmul.f32 %v3401, %v3408
  %v3438 = vmul.f32 %v3402, %v3408
  %v3439 = vmul.f32 %v3403, %v3408
  %v3440 = vmul.f32 %v3404, %v3408
  %v3441 = vadd.f32 %v3341, %v3409
  %v3442 = vadd.f32 %v3342, %v3410
  %v3443 = vadd.f32 %v3343, %v3411
  %v3444 = vadd.f32 %v3344, %v3412
  %v3445 = vadd.f32 %v3345, %v3413
  %v3446 = vadd.f32 %v3346, %v3414
  %v3447 = vadd.f32 %v3347, %v3415
  %v3448 = vadd.f32 %v3348, %v3416
  %v3449 = vadd.f32 %v3349, %v3417
  %v3450 = vadd.f32 %v3350, %v3418
  %v3451 = vadd.f32 %v3351, %v3419
  %v3452 = vadd.f32 %v3352, %v3420
  %v3453 = vadd.f32 %v3353, %v3421
  %v3454 = vadd.f32 %v3354, %v3422
  %v3455 = vadd.f32 %v3355, %v3423
  %v3456 = vadd.f32 %v3356, %v3424
  %v3457 = vadd.f32 %v3357, %v3425
  %v3458 = vadd.f32 %v3358, %v3426
  %v3459 = vadd.f32 %v3359, %v3427
  %v3460 = vadd.f32 %v3360, %v3428
  %v3461 = vadd.f32 %v3361, %v3429
  %v3462 = vadd.f32 %v3362, %v3430
  %v3463 = vadd.f32 %v3363, %v3431
  %v3464 = vadd.f32 %v3364, %v3432
  %v3465 = vadd.f32 %v3365, %v3433
  %v3466 = vadd.f32 %v3366, %v3434
  %v3467 = vadd.f32 %v3367, %v3435
  %v3468 = vadd.f32 %v3368, %v3436
  %v3469 = vadd.f32 %v3369, %v3437
  %v3470 = vadd.f32 %v3370, %v3438
  %v3471 = vadd.f32 %v3371, %v3439
  %v3472 = vadd.f32 %v3372, %v3440
  %v3473 = vld [vmem:[%s3072 + $0x14] sm:$0xff]
  %v3474 = vld [vmem:[%s3072 + $0x34] sm:$0xff]
  %v3475 = vld [vmem:[%s3072 + $0x54] sm:$0xff]
  %v3476 = vld [vmem:[%s3072 + $0x74] sm:$0xff]
  %v3477 = vld [vmem:[%s3072 + $0x94] sm:$0xff]
  %v3478 = vld [vmem:[%s3072 + $0xb4] sm:$0xff]
  %v3479 = vld [vmem:[%s3072 + $0xd4] sm:$0xff]
  %v3480 = vld [vmem:[%s3072 + $0xf4] sm:$0xff]
  %v3481 = vld [vmem:[%s3072 + $0x114] sm:$0xff]
  %v3482 = vld [vmem:[%s3072 + $0x134] sm:$0xff]
  %v3483 = vld [vmem:[%s3072 + $0x154] sm:$0xff]
  %v3484 = vld [vmem:[%s3072 + $0x174] sm:$0xff]
  %v3485 = vld [vmem:[%s3072 + $0x194] sm:$0xff]
  %v3486 = vld [vmem:[%s3072 + $0x1b4] sm:$0xff]
  %v3487 = vld [vmem:[%s3072 + $0x1d4] sm:$0xff]
  %v3488 = vld [vmem:[%s3072 + $0x1f4] sm:$0xff]
  %v3489 = vlaneseq
  %v3490 = vshrl.u32 %v3489, 7
  %v3491 = vsub.s32 0, %v3490
  %v3492 = vrot.slane %v1165, %v3491
  %v3493 = vmul.f32 %v3074, %v3492
  %v3494 = vmul.f32 %v3473, %v3492
  %v3495 = vmul.f32 %v3076, %v3492
  %v3496 = vmul.f32 %v3474, %v3492
  %v3497 = vmul.f32 %v3078, %v3492
  %v3498 = vmul.f32 %v3475, %v3492
  %v3499 = vmul.f32 %v3080, %v3492
  %v3500 = vmul.f32 %v3476, %v3492
  %v3501 = vmul.f32 %v3082, %v3492
  %v3502 = vmul.f32 %v3477, %v3492
  %v3503 = vmul.f32 %v3084, %v3492
  %v3504 = vmul.f32 %v3478, %v3492
  %v3505 = vmul.f32 %v3086, %v3492
  %v3506 = vmul.f32 %v3479, %v3492
  %v3507 = vmul.f32 %v3088, %v3492
  %v3508 = vmul.f32 %v3480, %v3492
  %v3509 = vmul.f32 %v3090, %v3492
  %v3510 = vmul.f32 %v3481, %v3492
  %v3511 = vmul.f32 %v3092, %v3492
  %v3512 = vmul.f32 %v3482, %v3492
  %v3513 = vmul.f32 %v3094, %v3492
  %v3514 = vmul.f32 %v3483, %v3492
  %v3515 = vmul.f32 %v3096, %v3492
  %v3516 = vmul.f32 %v3484, %v3492
  %v3517 = vmul.f32 %v3098, %v3492
  %v3518 = vmul.f32 %v3485, %v3492
  %v3519 = vmul.f32 %v3100, %v3492
  %v3520 = vmul.f32 %v3486, %v3492
  %v3521 = vmul.f32 %v3102, %v3492
  %v3522 = vmul.f32 %v3487, %v3492
  %v3523 = vmul.f32 %v3104, %v3492
  %v3524 = vmul.f32 %v3488, %v3492
  %v3525 = vadd.f32 %v3441, %v3493
  %v3526 = vadd.f32 %v3442, %v3494
  %v3527 = vadd.f32 %v3443, %v3495
  %v3528 = vadd.f32 %v3444, %v3496
  %v3529 = vadd.f32 %v3445, %v3497
  %v3530 = vadd.f32 %v3446, %v3498
  %v3531 = vadd.f32 %v3447, %v3499
  %v3532 = vadd.f32 %v3448, %v3500
  %v3533 = vadd.f32 %v3449, %v3501
  %v3534 = vadd.f32 %v3450, %v3502
  %v3535 = vadd.f32 %v3451, %v3503
  %v3536 = vadd.f32 %v3452, %v3504
  %v3537 = vadd.f32 %v3453, %v3505
  %v3538 = vadd.f32 %v3454, %v3506
  %v3539 = vadd.f32 %v3455, %v3507
  %v3540 = vadd.f32 %v3456, %v3508
  %v3541 = vadd.f32 %v3457, %v3509
  %v3542 = vadd.f32 %v3458, %v3510
  %v3543 = vadd.f32 %v3459, %v3511
  %v3544 = vadd.f32 %v3460, %v3512
  %v3545 = vadd.f32 %v3461, %v3513
  %v3546 = vadd.f32 %v3462, %v3514
  %v3547 = vadd.f32 %v3463, %v3515
  %v3548 = vadd.f32 %v3464, %v3516
  %v3549 = vadd.f32 %v3465, %v3517
  %v3550 = vadd.f32 %v3466, %v3518
  %v3551 = vadd.f32 %v3467, %v3519
  %v3552 = vadd.f32 %v3468, %v3520
  %v3553 = vadd.f32 %v3469, %v3521
  %v3554 = vadd.f32 %v3470, %v3522
  %v3555 = vadd.f32 %v3471, %v3523
  %v3556 = vadd.f32 %v3472, %v3524
  %v3557 = vld [vmem:[%s4] sm:$0x1]
  %v3559 = vlaneseq
  %v3560 = vshrl.u32 %v3559, 7
  %v3561 = vsub.s32 0, %v3560
  %v3562 = vrot.slane %v3557, %v3561
  %v3564 = vadd.f32 %v3525, %v3562
  %v3565 = vadd.f32 %v3526, %v3562
  %v3566 = vadd.f32 %v3527, %v3562
  %v3567 = vadd.f32 %v3528, %v3562
  %v3568 = vadd.f32 %v3529, %v3562
  %v3569 = vadd.f32 %v3530, %v3562
  %v3570 = vadd.f32 %v3531, %v3562
  %v3571 = vadd.f32 %v3532, %v3562
  %v3572 = vadd.f32 %v3533, %v3562
  %v3573 = vadd.f32 %v3534, %v3562
  %v3574 = vadd.f32 %v3535, %v3562
  %v3575 = vadd.f32 %v3536, %v3562
  %v3576 = vadd.f32 %v3537, %v3562
  %v3577 = vadd.f32 %v3538, %v3562
  %v3578 = vadd.f32 %v3539, %v3562
  %v3579 = vadd.f32 %v3540, %v3562
  %v3580 = vadd.f32 %v3541, %v3562
  %v3581 = vadd.f32 %v3542, %v3562
  %v3582 = vadd.f32 %v3543, %v3562
  %v3583 = vadd.f32 %v3544, %v3562
  %v3584 = vadd.f32 %v3545, %v3562
  %v3585 = vadd.f32 %v3546, %v3562
  %v3586 = vadd.f32 %v3547, %v3562
  %v3587 = vadd.f32 %v3548, %v3562
  %v3588 = vadd.f32 %v3549, %v3562
  %v3589 = vadd.f32 %v3550, %v3562
  %v3590 = vadd.f32 %v3551, %v3562
  %v3591 = vadd.f32 %v3552, %v3562
  %v3592 = vadd.f32 %v3553, %v3562
  %v3593 = vadd.f32 %v3554, %v3562
  %v3594 = vadd.f32 %v3555, %v3562
  %v3595 = vadd.f32 %v3556, %v3562
  %v3596 = vpack.c.bf16 %v1033, %v1032
  %v3597 = vpack.c.bf16 %v1035, %v1034
  %v3598 = vpack.c.bf16 %v1037, %v1036
  %v3599 = vpack.c.bf16 %v1039, %v1038
  %v3600 = vpack.c.bf16 %v1041, %v1040
  %v3601 = vpack.c.bf16 %v1043, %v1042
  %v3602 = vpack.c.bf16 %v1045, %v1044
  %v3603 = vpack.c.bf16 %v1047, %v1046
  %v3604 = vpack.c.bf16 %v1049, %v1048
  %v3605 = vpack.c.bf16 %v1051, %v1050
  %v3606 = vpack.c.bf16 %v1053, %v1052
  %v3607 = vpack.c.bf16 %v1055, %v1054
  %v3608 = vpack.c.bf16 %v1057, %v1056
  %v3609 = vpack.c.bf16 %v1059, %v1058
  %v3610 = vpack.c.bf16 %v1061, %v1060
  %v3611 = vpack.c.bf16 %v1063, %v1062
  %v3612 = vpack.c.bf16 %v3565, %v3564
  %v3613 = vpack.c.bf16 %v3567, %v3566
  %v3614 = vpack.c.bf16 %v3569, %v3568
  %v3615 = vpack.c.bf16 %v3571, %v3570
  %v3616 = vpack.c.bf16 %v3573, %v3572
  %v3617 = vpack.c.bf16 %v3575, %v3574
  %v3618 = vpack.c.bf16 %v3577, %v3576
  %v3619 = vpack.c.bf16 %v3579, %v3578
  %v3620 = vpack.c.bf16 %v3581, %v3580
  %v3621 = vpack.c.bf16 %v3583, %v3582
  %v3622 = vpack.c.bf16 %v3585, %v3584
  %v3623 = vpack.c.bf16 %v3587, %v3586
  %v3624 = vpack.c.bf16 %v3589, %v3588
  %v3625 = vpack.c.bf16 %v3591, %v3590
  %v3626 = vpack.c.bf16 %v3593, %v3592
  %v3627 = vpack.c.bf16 %v3595, %v3594
  %v3628 = vld [vmem:[%s5] sm:$0xf]
  %v3629 = vld [vmem:[%s5 + $0x4] sm:$0xf]
  %v3630 = vld [vmem:[%s5 + $0x8] sm:$0xf]
  %v3631 = vld [vmem:[%s5 + $0xc] sm:$0xf]
  %v3632 = vld [vmem:[%s5 + $0x10] sm:$0xf]
  %v3633 = vld [vmem:[%s5 + $0x14] sm:$0xf]
  %v3634 = vld [vmem:[%s5 + $0x18] sm:$0xf]
  %v3635 = vld [vmem:[%s5 + $0x1c] sm:$0xf]
  %v3636 = vld [vmem:[%s5 + $0x20] sm:$0xf]
  %v3637 = vld [vmem:[%s5 + $0x24] sm:$0xf]
  %v3638 = vld [vmem:[%s5 + $0x28] sm:$0xf]
  %v3639 = vld [vmem:[%s5 + $0x2c] sm:$0xf]
  %v3640 = vld [vmem:[%s5 + $0x30] sm:$0xf]
  %v3641 = vld [vmem:[%s5 + $0x34] sm:$0xf]
  %v3642 = vld [vmem:[%s5 + $0x38] sm:$0xf]
  %v3643 = vld [vmem:[%s5 + $0x3c] sm:$0xf]
  %v3644 = vld [vmem:[%s6] sm:$0xf]
  %v3645 = vld [vmem:[%s6 + $0x4] sm:$0xf]
  %v3646 = vld [vmem:[%s6 + $0x8] sm:$0xf]
  %v3647 = vld [vmem:[%s6 + $0xc] sm:$0xf]
  %v3648 = vld [vmem:[%s6 + $0x10] sm:$0xf]
  %v3649 = vld [vmem:[%s6 + $0x14] sm:$0xf]
  %v3650 = vld [vmem:[%s6 + $0x18] sm:$0xf]
  %v3651 = vld [vmem:[%s6 + $0x1c] sm:$0xf]
  %v3652 = vld [vmem:[%s6 + $0x20] sm:$0xf]
  %v3653 = vld [vmem:[%s6 + $0x24] sm:$0xf]
  %v3654 = vld [vmem:[%s6 + $0x28] sm:$0xf]
  %v3655 = vld [vmem:[%s6 + $0x2c] sm:$0xf]
  %v3656 = vld [vmem:[%s6 + $0x30] sm:$0xf]
  %v3657 = vld [vmem:[%s6 + $0x34] sm:$0xf]
  %v3658 = vld [vmem:[%s6 + $0x38] sm:$0xf]
  %v3659 = vld [vmem:[%s6 + $0x3c] sm:$0xf]
  %v3676 = vunpack.c.l.b16 %v3644
  %v3677 = vunpack.c.l.b16 %v3645
  %v3678 = vunpack.c.l.b16 %v3646
  %v3679 = vunpack.c.l.b16 %v3647
  %v3680 = vunpack.c.l.b16 %v3648
  %v3681 = vunpack.c.l.b16 %v3649
  %v3682 = vunpack.c.l.b16 %v3650
  %v3683 = vunpack.c.l.b16 %v3651
  %v3684 = vunpack.c.l.b16 %v3652
  %v3685 = vunpack.c.l.b16 %v3653
  %v3686 = vunpack.c.l.b16 %v3654
  %v3687 = vunpack.c.l.b16 %v3655
  %v3688 = vunpack.c.l.b16 %v3656
  %v3689 = vunpack.c.l.b16 %v3657
  %v3690 = vunpack.c.l.b16 %v3658
  %v3691 = vunpack.c.l.b16 %v3659
  %v3692 = vpack.c.b16 %v3677, %v3676
  %v3693 = vpack.c.b16 %v3679, %v3678
  %v3694 = vpack.c.b16 %v3681, %v3680
  %v3695 = vpack.c.b16 %v3683, %v3682
  %v3696 = vpack.c.b16 %v3685, %v3684
  %v3697 = vpack.c.b16 %v3687, %v3686
  %v3698 = vpack.c.b16 %v3689, %v3688
  %v3699 = vpack.c.b16 %v3691, %v3690
  %3708 = vmatprep.subr.bf16.mxu0 0
  %3709 = vmatpush1.bf16.msra.mxu0 %v3692
  %3710 = vmatprep.subr.bf16.mxu0 0
  %3711 = vmatpush1.bf16.msra.mxu0 %v3693
  %3712 = vmatprep.subr.bf16.mxu0 0
  %3713 = vmatpush1.bf16.msra.mxu0 %v3694
  %3714 = vmatprep.subr.bf16.mxu0 0
  %3715 = vmatpush1.bf16.msra.mxu0 %v3695
  %3716 = vmatprep.subr.bf16.mxu0 0
  %3717 = vmatpush1.bf16.msra.mxu0 %v3696
  %3718 = vmatprep.subr.bf16.mxu0 0
  %3719 = vmatpush1.bf16.msra.mxu0 %v3697
  %3720 = vmatprep.subr.bf16.mxu0 0
  %3721 = vmatpush1.bf16.msra.mxu0 %v3698
  %3722 = vmatprep.subr.bf16.mxu0 0
  %3723 = vmatpush1.bf16.msra.mxu0 %v3699
  %3724 = vmatprep.subr.bf16.mxu0 0
  %3725 = vmatpush1.bf16.msra.mxu0 0
  %3726 = vmatprep.subr.bf16.mxu0 0
  %3727 = vmatpush1.bf16.msra.mxu0 0
  %3728 = vmatprep.subr.bf16.mxu0 0
  %3729 = vmatpush1.bf16.msra.mxu0 0
  %3730 = vmatprep.subr.bf16.mxu0 0
  %3731 = vmatpush1.bf16.msra.mxu0 0
  %3732 = vmatprep.subr.bf16.mxu0 0
  %3733 = vmatpush1.bf16.msra.mxu0 0
  %3734 = vmatprep.subr.bf16.mxu0 0
  %3735 = vmatpush1.bf16.msra.mxu0 0
  %3736 = vmatprep.subr.bf16.mxu0 0
  %3737 = vmatpush1.bf16.msra.mxu0 0
  %3738 = vmatprep.subr.bf16.mxu0 0
  %3739 = vmatpush1.bf16.msra.mxu0 0
  %3740 = vmatprep.mubr.bf16.mxu0 0
  %3741 = vmatmul.mubr.bf16.gmra.mrb[0].mxu0 %v3612
  %v3742 = vpop.f32.mrb[0].mxu0
  %v3743 = vadd.f32 0.0, %v3742
  %v3744 = vpop.f32.mrb[0].mxu0
  %v3745 = vpop.f32.mrb[0].mxu0
  %v3746 = vadd.f32 0.0, %v3745
  %v3747 = vpop.f32.mrb[0].mxu0
  %3748 = vmatprep.mubr.bf16.mxu0 0
  %3749 = vmatmul.mubr.bf16.gmra.mrb[0].mxu0 %v3613
  %v3750 = vpop.f32.mrb[0].mxu0
  %v3751 = vadd.f32 0.0, %v3750
  %v3752 = vpop.f32.mrb[0].mxu0
  %v3753 = vpop.f32.mrb[0].mxu0
  %v3754 = vadd.f32 0.0, %v3753
  %v3755 = vpop.f32.mrb[0].mxu0
  %3756 = vmatprep.mubr.bf16.mxu0 0
  %3757 = vmatmul.mubr.bf16.gmra.mrb[0].mxu0 %v3614
  %v3758 = vpop.f32.mrb[0].mxu0
  %v3759 = vadd.f32 0.0, %v3758
  %v3760 = vpop.f32.mrb[0].mxu0
  %v3761 = vpop.f32.mrb[0].mxu0
  %v3762 = vadd.f32 0.0, %v3761
  %v3763 = vpop.f32.mrb[0].mxu0
  %3764 = vmatprep.mubr.bf16.mxu0 0
  %3765 = vmatmul.mubr.bf16.gmra.mrb[0].mxu0 %v3615
  %v3766 = vpop.f32.mrb[0].mxu0
  %v3767 = vadd.f32 0.0, %v3766
  %v3768 = vpop.f32.mrb[0].mxu0
  %v3769 = vpop.f32.mrb[0].mxu0
  %v3770 = vadd.f32 0.0, %v3769
  %v3771 = vpop.f32.mrb[0].mxu0
  %3772 = vmatprep.mubr.bf16.mxu0 0
  %3773 = vmatmul.mubr.bf16.gmra.mrb[0].mxu0 %v3616
  %v3774 = vpop.f32.mrb[0].mxu0
  %v3775 = vadd.f32 0.0, %v3774
  %v3776 = vpop.f32.mrb[0].mxu0
  %v3777 = vpop.f32.mrb[0].mxu0
  %v3778 = vadd.f32 0.0, %v3777
  %v3779 = vpop.f32.mrb[0].mxu0
  %3780 = vmatprep.mubr.bf16.mxu0 0
  %3781 = vmatmul.mubr.bf16.gmra.mrb[0].mxu0 %v3617
  %v3782 = vpop.f32.mrb[0].mxu0
  %v3783 = vadd.f32 0.0, %v3782
  %v3784 = vpop.f32.mrb[0].mxu0
  %v3785 = vpop.f32.mrb[0].mxu0
  %v3786 = vadd.f32 0.0, %v3785
  %v3787 = vpop.f32.mrb[0].mxu0
  %3788 = vmatprep.mubr.bf16.mxu0 0
  %3789 = vmatmul.mubr.bf16.gmra.mrb[0].mxu0 %v3618
  %v3790 = vpop.f32.mrb[0].mxu0
  %v3791 = vadd.f32 0.0, %v3790
  %v3792 = vpop.f32.mrb[0].mxu0
  %v3793 = vpop.f32.mrb[0].mxu0
  %v3794 = vadd.f32 0.0, %v3793
  %v3795 = vpop.f32.mrb[0].mxu0
  %3796 = vmatprep.mubr.bf16.mxu0 0
  %3797 = vmatmul.mubr.bf16.gmra.mrb[0].mxu0 %v3619
  %v3798 = vpop.f32.mrb[0].mxu0
  %v3799 = vadd.f32 0.0, %v3798
  %v3800 = vpop.f32.mrb[0].mxu0
  %v3801 = vpop.f32.mrb[0].mxu0
  %v3802 = vadd.f32 0.0, %v3801
  %v3803 = vpop.f32.mrb[0].mxu0
  %3804 = vmatprep.mubr.bf16.mxu0 0
  %3805 = vmatmul.mubr.bf16.gmra.mrb[0].mxu0 %v3620
  %v3806 = vpop.f32.mrb[0].mxu0
  %v3807 = vadd.f32 0.0, %v3806
  %v3808 = vpop.f32.mrb[0].mxu0
  %v3809 = vpop.f32.mrb[0].mxu0
  %v3810 = vadd.f32 0.0, %v3809
  %v3811 = vpop.f32.mrb[0].mxu0
  %3812 = vmatprep.mubr.bf16.mxu0 0
  %3813 = vmatmul.mubr.bf16.gmra.mrb[0].mxu0 %v3621
  %v3814 = vpop.f32.mrb[0].mxu0
  %v3815 = vadd.f32 0.0, %v3814
  %v3816 = vpop.f32.mrb[0].mxu0
  %v3817 = vpop.f32.mrb[0].mxu0
  %v3818 = vadd.f32 0.0, %v3817
  %v3819 = vpop.f32.mrb[0].mxu0
  %3820 = vmatprep.mubr.bf16.mxu0 0
  %3821 = vmatmul.mubr.bf16.gmra.mrb[0].mxu0 %v3622
  %v3822 = vpop.f32.mrb[0].mxu0
  %v3823 = vadd.f32 0.0, %v3822
  %v3824 = vpop.f32.mrb[0].mxu0
  %v3825 = vpop.f32.mrb[0].mxu0
  %v3826 = vadd.f32 0.0, %v3825
  %v3827 = vpop.f32.mrb[0].mxu0
  %3828 = vmatprep.mubr.bf16.mxu0 0
  %3829 = vmatmul.mubr.bf16.gmra.mrb[0].mxu0 %v3623
  %v3830 = vpop.f32.mrb[0].mxu0
  %v3831 = vadd.f32 0.0, %v3830
  %v3832 = vpop.f32.mrb[0].mxu0
  %v3833 = vpop.f32.mrb[0].mxu0
  %v3834 = vadd.f32 0.0, %v3833
  %v3835 = vpop.f32.mrb[0].mxu0
  %3836 = vmatprep.mubr.bf16.mxu0 0
  %3837 = vmatmul.mubr.bf16.gmra.mrb[0].mxu0 %v3624
  %v3838 = vpop.f32.mrb[0].mxu0
  %v3839 = vadd.f32 0.0, %v3838
  %v3840 = vpop.f32.mrb[0].mxu0
  %v3841 = vpop.f32.mrb[0].mxu0
  %v3842 = vadd.f32 0.0, %v3841
  %v3843 = vpop.f32.mrb[0].mxu0
  %3844 = vmatprep.mubr.bf16.mxu0 0
  %3845 = vmatmul.mubr.bf16.gmra.mrb[0].mxu0 %v3625
  %v3846 = vpop.f32.mrb[0].mxu0
  %v3847 = vadd.f32 0.0, %v3846
  %v3848 = vpop.f32.mrb[0].mxu0
  %v3849 = vpop.f32.mrb[0].mxu0
  %v3850 = vadd.f32 0.0, %v3849
  %v3851 = vpop.f32.mrb[0].mxu0
  %3852 = vmatprep.mubr.bf16.mxu0 0
  %3853 = vmatmul.mubr.bf16.gmra.mrb[0].mxu0 %v3626
  %v3854 = vpop.f32.mrb[0].mxu0
  %v3855 = vadd.f32 0.0, %v3854
  %v3856 = vpop.f32.mrb[0].mxu0
  %v3857 = vpop.f32.mrb[0].mxu0
  %v3858 = vadd.f32 0.0, %v3857
  %v3859 = vpop.f32.mrb[0].mxu0
  %3860 = vmatprep.mubr.bf16.mxu0 0
  %3861 = vmatmul.mubr.bf16.gmra.mrb[0].mxu0 %v3627
  %v3862 = vpop.f32.mrb[0].mxu0
  %v3863 = vadd.f32 0.0, %v3862
  %v3864 = vpop.f32.mrb[0].mxu0
  %v3865 = vpop.f32.mrb[0].mxu0
  %v3866 = vadd.f32 0.0, %v3865
  %v3867 = vpop.f32.mrb[0].mxu0
  %3868 = vdwg.mxu0
  %v3885 = vunpack.c.l.b16 %v3628
  %v3886 = vunpack.c.l.b16 %v3629
  %v3887 = vunpack.c.l.b16 %v3630
  %v3888 = vunpack.c.l.b16 %v3631
  %v3889 = vunpack.c.l.b16 %v3632
  %v3890 = vunpack.c.l.b16 %v3633
  %v3891 = vunpack.c.l.b16 %v3634
  %v3892 = vunpack.c.l.b16 %v3635
  %v3893 = vunpack.c.l.b16 %v3636
  %v3894 = vunpack.c.l.b16 %v3637
  %v3895 = vunpack.c.l.b16 %v3638
  %v3896 = vunpack.c.l.b16 %v3639
  %v3897 = vunpack.c.l.b16 %v3640
  %v3898 = vunpack.c.l.b16 %v3641
  %v3899 = vunpack.c.l.b16 %v3642
  %v3900 = vunpack.c.l.b16 %v3643
  %v3901 = vpack.c.b16 %v3886, %v3885
  %v3902 = vpack.c.b16 %v3888, %v3887
  %v3903 = vpack.c.b16 %v3890, %v3889
  %v3904 = vpack.c.b16 %v3892, %v3891
  %v3905 = vpack.c.b16 %v3894, %v3893
  %v3906 = vpack.c.b16 %v3896, %v3895
  %v3907 = vpack.c.b16 %v3898, %v3897
  %v3908 = vpack.c.b16 %v3900, %v3899
  %3917 = vmatprep.subr.bf16.mxu0 0
  %3918 = vmatpush1.bf16.msra.mxu0 %v3901
  %3919 = vmatprep.subr.bf16.mxu0 0
  %3920 = vmatpush1.bf16.msra.mxu0 %v3902
  %3921 = vmatprep.subr.bf16.mxu0 0
  %3922 = vmatpush1.bf16.msra.mxu0 %v3903
  %3923 = vmatprep.subr.bf16.mxu0 0
  %3924 = vmatpush1.bf16.msra.mxu0 %v3904
  %3925 = vmatprep.subr.bf16.mxu0 0
  %3926 = vmatpush1.bf16.msra.mxu0 %v3905
  %3927 = vmatprep.subr.bf16.mxu0 0
  %3928 = vmatpush1.bf16.msra.mxu0 %v3906
  %3929 = vmatprep.subr.bf16.mxu0 0
  %3930 = vmatpush1.bf16.msra.mxu0 %v3907
  %3931 = vmatprep.subr.bf16.mxu0 0
  %3932 = vmatpush1.bf16.msra.mxu0 %v3908
  %3933 = vmatprep.subr.bf16.mxu0 0
  %3934 = vmatpush1.bf16.msra.mxu0 0
  %3935 = vmatprep.subr.bf16.mxu0 0
  %3936 = vmatpush1.bf16.msra.mxu0 0
  %3937 = vmatprep.subr.bf16.mxu0 0
  %3938 = vmatpush1.bf16.msra.mxu0 0
  %3939 = vmatprep.subr.bf16.mxu0 0
  %3940 = vmatpush1.bf16.msra.mxu0 0
  %3941 = vmatprep.subr.bf16.mxu0 0
  %3942 = vmatpush1.bf16.msra.mxu0 0
  %3943 = vmatprep.subr.bf16.mxu0 0
  %3944 = vmatpush1.bf16.msra.mxu0 0
  %3945 = vmatprep.subr.bf16.mxu0 0
  %3946 = vmatpush1.bf16.msra.mxu0 0
  %3947 = vmatprep.subr.bf16.mxu0 0
  %3948 = vmatpush1.bf16.msra.mxu0 0
  %3949 = vmatprep.mubr.bf16.mxu0 0
  %3950 = vmatmul.mubr.bf16.gmra.mrb[0].mxu0 %v3596
  %v3951 = vpop.f32.mrb[0].mxu0
  %v3952 = vadd.f32 %v3743, %v3951
  %v3953 = vpop.f32.mrb[0].mxu0
  %v3954 = vpop.f32.mrb[0].mxu0
  %v3955 = vadd.f32 %v3746, %v3954
  %v3956 = vpop.f32.mrb[0].mxu0
  %3957 = vmatprep.mubr.bf16.mxu0 0
  %3958 = vmatmul.mubr.bf16.gmra.mrb[0].mxu0 %v3597
  %v3959 = vpop.f32.mrb[0].mxu0
  %v3960 = vadd.f32 %v3751, %v3959
  %v3961 = vpop.f32.mrb[0].mxu0
  %v3962 = vpop.f32.mrb[0].mxu0
  %v3963 = vadd.f32 %v3754, %v3962
  %v3964 = vpop.f32.mrb[0].mxu0
  %3965 = vmatprep.mubr.bf16.mxu0 0
  %3966 = vmatmul.mubr.bf16.gmra.mrb[0].mxu0 %v3598
  %v3967 = vpop.f32.mrb[0].mxu0
  %v3968 = vadd.f32 %v3759, %v3967
  %v3969 = vpop.f32.mrb[0].mxu0
  %v3970 = vpop.f32.mrb[0].mxu0
  %v3971 = vadd.f32 %v3762, %v3970
  %v3972 = vpop.f32.mrb[0].mxu0
  %3973 = vmatprep.mubr.bf16.mxu0 0
  %3974 = vmatmul.mubr.bf16.gmra.mrb[0].mxu0 %v3599
  %v3975 = vpop.f32.mrb[0].mxu0
  %v3976 = vadd.f32 %v3767, %v3975
  %v3977 = vpop.f32.mrb[0].mxu0
  %v3978 = vpop.f32.mrb[0].mxu0
  %v3979 = vadd.f32 %v3770, %v3978
  %v3980 = vpop.f32.mrb[0].mxu0
  %3981 = vmatprep.mubr.bf16.mxu0 0
  %3982 = vmatmul.mubr.bf16.gmra.mrb[0].mxu0 %v3600
  %v3983 = vpop.f32.mrb[0].mxu0
  %v3984 = vadd.f32 %v3775, %v3983
  %v3985 = vpop.f32.mrb[0].mxu0
  %v3986 = vpop.f32.mrb[0].mxu0
  %v3987 = vadd.f32 %v3778, %v3986
  %v3988 = vpop.f32.mrb[0].mxu0
  %3989 = vmatprep.mubr.bf16.mxu0 0
  %3990 = vmatmul.mubr.bf16.gmra.mrb[0].mxu0 %v3601
  %v3991 = vpop.f32.mrb[0].mxu0
  %v3992 = vadd.f32 %v3783, %v3991
  %v3993 = vpop.f32.mrb[0].mxu0
  %v3994 = vpop.f32.mrb[0].mxu0
  %v3995 = vadd.f32 %v3786, %v3994
  %v3996 = vpop.f32.mrb[0].mxu0
  %3997 = vmatprep.mubr.bf16.mxu0 0
  %3998 = vmatmul.mubr.bf16.gmra.mrb[0].mxu0 %v3602
  %v3999 = vpop.f32.mrb[0].mxu0
  %v4000 = vadd.f32 %v3791, %v3999
  %v4001 = vpop.f32.mrb[0].mxu0
  %v4002 = vpop.f32.mrb[0].mxu0
  %v4003 = vadd.f32 %v3794, %v4002
  %v4004 = vpop.f32.mrb[0].mxu0
  %4005 = vmatprep.mubr.bf16.mxu0 0
  %4006 = vmatmul.mubr.bf16.gmra.mrb[0].mxu0 %v3603
  %v4007 = vpop.f32.mrb[0].mxu0
  %v4008 = vadd.f32 %v3799, %v4007
  %v4009 = vpop.f32.mrb[0].mxu0
  %v4010 = vpop.f32.mrb[0].mxu0
  %v4011 = vadd.f32 %v3802, %v4010
  %v4012 = vpop.f32.mrb[0].mxu0
  %4013 = vmatprep.mubr.bf16.mxu0 0
  %4014 = vmatmul.mubr.bf16.gmra.mrb[0].mxu0 %v3604
  %v4015 = vpop.f32.mrb[0].mxu0
  %v4016 = vadd.f32 %v3807, %v4015
  %v4017 = vpop.f32.mrb[0].mxu0
  %v4018 = vpop.f32.mrb[0].mxu0
  %v4019 = vadd.f32 %v3810, %v4018
  %v4020 = vpop.f32.mrb[0].mxu0
  %4021 = vmatprep.mubr.bf16.mxu0 0
  %4022 = vmatmul.mubr.bf16.gmra.mrb[0].mxu0 %v3605
  %v4023 = vpop.f32.mrb[0].mxu0
  %v4024 = vadd.f32 %v3815, %v4023
  %v4025 = vpop.f32.mrb[0].mxu0
  %v4026 = vpop.f32.mrb[0].mxu0
  %v4027 = vadd.f32 %v3818, %v4026
  %v4028 = vpop.f32.mrb[0].mxu0
  %4029 = vmatprep.mubr.bf16.mxu0 0
  %4030 = vmatmul.mubr.bf16.gmra.mrb[0].mxu0 %v3606
  %v4031 = vpop.f32.mrb[0].mxu0
  %v4032 = vadd.f32 %v3823, %v4031
  %v4033 = vpop.f32.mrb[0].mxu0
  %v4034 = vpop.f32.mrb[0].mxu0
  %v4035 = vadd.f32 %v3826, %v4034
  %v4036 = vpop.f32.mrb[0].mxu0
  %4037 = vmatprep.mubr.bf16.mxu0 0
  %4038 = vmatmul.mubr.bf16.gmra.mrb[0].mxu0 %v3607
  %v4039 = vpop.f32.mrb[0].mxu0
  %v4040 = vadd.f32 %v3831, %v4039
  %v4041 = vpop.f32.mrb[0].mxu0
  %v4042 = vpop.f32.mrb[0].mxu0
  %v4043 = vadd.f32 %v3834, %v4042
  %v4044 = vpop.f32.mrb[0].mxu0
  %4045 = vmatprep.mubr.bf16.mxu0 0
  %4046 = vmatmul.mubr.bf16.gmra.mrb[0].mxu0 %v3608
  %v4047 = vpop.f32.mrb[0].mxu0
  %v4048 = vadd.f32 %v3839, %v4047
  %v4049 = vpop.f32.mrb[0].mxu0
  %v4050 = vpop.f32.mrb[0].mxu0
  %v4051 = vadd.f32 %v3842, %v4050
  %v4052 = vpop.f32.mrb[0].mxu0
  %4053 = vmatprep.mubr.bf16.mxu0 0
  %4054 = vmatmul.mubr.bf16.gmra.mrb[0].mxu0 %v3609
  %v4055 = vpop.f32.mrb[0].mxu0
  %v4056 = vadd.f32 %v3847, %v4055
  %v4057 = vpop.f32.mrb[0].mxu0
  %v4058 = vpop.f32.mrb[0].mxu0
  %v4059 = vadd.f32 %v3850, %v4058
  %v4060 = vpop.f32.mrb[0].mxu0
  %4061 = vmatprep.mubr.bf16.mxu0 0
  %4062 = vmatmul.mubr.bf16.gmra.mrb[0].mxu0 %v3610
  %v4063 = vpop.f32.mrb[0].mxu0
  %v4064 = vadd.f32 %v3855, %v4063
  %v4065 = vpop.f32.mrb[0].mxu0
  %v4066 = vpop.f32.mrb[0].mxu0
  %v4067 = vadd.f32 %v3858, %v4066
  %v4068 = vpop.f32.mrb[0].mxu0
  %4069 = vmatprep.mubr.bf16.mxu0 0
  %4070 = vmatmul.mubr.bf16.gmra.mrb[0].mxu0 %v3611
  %v4071 = vpop.f32.mrb[0].mxu0
  %v4072 = vadd.f32 %v3863, %v4071
  %v4073 = vpop.f32.mrb[0].mxu0
  %v4074 = vpop.f32.mrb[0].mxu0
  %v4075 = vadd.f32 %v3866, %v4074
  %v4076 = vpop.f32.mrb[0].mxu0
  %4077 = vdwg.mxu0
  %v4078 = vld [vmem:[%s7] sm:$0x1]
  %v4080 = vlaneseq
  %v4081 = vshrl.u32 %v4080, 7
  %v4082 = vsub.s32 0, %v4081
  %v4083 = vrot.slane %v4078, %v4082
  %v4085 = vadd.f32 %v3952, %v4083
  %v4086 = vadd.f32 %v3955, %v4083
  %v4087 = vadd.f32 %v3960, %v4083
  %v4088 = vadd.f32 %v3963, %v4083
  %v4089 = vadd.f32 %v3968, %v4083
  %v4090 = vadd.f32 %v3971, %v4083
  %v4091 = vadd.f32 %v3976, %v4083
  %v4092 = vadd.f32 %v3979, %v4083
  %v4093 = vadd.f32 %v3984, %v4083
  %v4094 = vadd.f32 %v3987, %v4083
  %v4095 = vadd.f32 %v3992, %v4083
  %v4096 = vadd.f32 %v3995, %v4083
  %v4097 = vadd.f32 %v4000, %v4083
  %v4098 = vadd.f32 %v4003, %v4083
  %v4099 = vadd.f32 %v4008, %v4083
  %v4100 = vadd.f32 %v4011, %v4083
  %v4101 = vadd.f32 %v4016, %v4083
  %v4102 = vadd.f32 %v4019, %v4083
  %v4103 = vadd.f32 %v4024, %v4083
  %v4104 = vadd.f32 %v4027, %v4083
  %v4105 = vadd.f32 %v4032, %v4083
  %v4106 = vadd.f32 %v4035, %v4083
  %v4107 = vadd.f32 %v4040, %v4083
  %v4108 = vadd.f32 %v4043, %v4083
  %v4109 = vadd.f32 %v4048, %v4083
  %v4110 = vadd.f32 %v4051, %v4083
  %v4111 = vadd.f32 %v4056, %v4083
  %v4112 = vadd.f32 %v4059, %v4083
  %v4113 = vadd.f32 %v4064, %v4083
  %v4114 = vadd.f32 %v4067, %v4083
  %v4115 = vadd.f32 %v4072, %v4083
  %v4116 = vadd.f32 %v4075, %v4083
  %v4117 = vpack.c.bf16 %v4086, %v4085
  %v4118 = vpack.c.bf16 %v4088, %v4087
  %v4119 = vpack.c.bf16 %v4090, %v4089
  %v4120 = vpack.c.bf16 %v4092, %v4091
  %v4121 = vpack.c.bf16 %v4094, %v4093
  %v4122 = vpack.c.bf16 %v4096, %v4095
  %v4123 = vpack.c.bf16 %v4098, %v4097
  %v4124 = vpack.c.bf16 %v4100, %v4099
  %v4125 = vpack.c.bf16 %v4102, %v4101
  %v4126 = vpack.c.bf16 %v4104, %v4103
  %v4127 = vpack.c.bf16 %v4106, %v4105
  %v4128 = vpack.c.bf16 %v4108, %v4107
  %v4129 = vpack.c.bf16 %v4110, %v4109
  %v4130 = vpack.c.bf16 %v4112, %v4111
  %v4131 = vpack.c.bf16 %v4114, %v4113
  %v4132 = vpack.c.bf16 %v4116, %v4115
  %v4133 = vld [vmem:[%s8] sm:$0xf]
  %v4134 = vld [vmem:[%s8 + $0x4] sm:$0xf]
  %v4135 = vld [vmem:[%s8 + $0x8] sm:$0xf]
  %v4136 = vld [vmem:[%s8 + $0xc] sm:$0xf]
  %v4137 = vld [vmem:[%s8 + $0x10] sm:$0xf]
  %v4138 = vld [vmem:[%s8 + $0x14] sm:$0xf]
  %v4139 = vld [vmem:[%s8 + $0x18] sm:$0xf]
  %v4140 = vld [vmem:[%s8 + $0x1c] sm:$0xf]
  %v4141 = vld [vmem:[%s8 + $0x20] sm:$0xf]
  %v4142 = vld [vmem:[%s8 + $0x24] sm:$0xf]
  %v4143 = vld [vmem:[%s8 + $0x28] sm:$0xf]
  %v4144 = vld [vmem:[%s8 + $0x2c] sm:$0xf]
  %v4145 = vld [vmem:[%s8 + $0x30] sm:$0xf]
  %v4146 = vld [vmem:[%s8 + $0x34] sm:$0xf]
  %v4147 = vld [vmem:[%s8 + $0x38] sm:$0xf]
  %v4148 = vld [vmem:[%s8 + $0x3c] sm:$0xf]
  %v4165 = vunpack.c.l.b16 %v4133
  %v4166 = vunpack.c.l.b16 %v4134
  %v4167 = vunpack.c.l.b16 %v4135
  %v4168 = vunpack.c.l.b16 %v4136
  %v4169 = vunpack.c.l.b16 %v4137
  %v4170 = vunpack.c.l.b16 %v4138
  %v4171 = vunpack.c.l.b16 %v4139
  %v4172 = vunpack.c.l.b16 %v4140
  %v4173 = vunpack.c.l.b16 %v4141
  %v4174 = vunpack.c.l.b16 %v4142
  %v4175 = vunpack.c.l.b16 %v4143
  %v4176 = vunpack.c.l.b16 %v4144
  %v4177 = vunpack.c.l.b16 %v4145
  %v4178 = vunpack.c.l.b16 %v4146
  %v4179 = vunpack.c.l.b16 %v4147
  %v4180 = vunpack.c.l.b16 %v4148
  %v4181 = vpack.c.b16 %v4166, %v4165
  %v4182 = vpack.c.b16 %v4168, %v4167
  %v4183 = vpack.c.b16 %v4170, %v4169
  %v4184 = vpack.c.b16 %v4172, %v4171
  %v4185 = vpack.c.b16 %v4174, %v4173
  %v4186 = vpack.c.b16 %v4176, %v4175
  %v4187 = vpack.c.b16 %v4178, %v4177
  %v4188 = vpack.c.b16 %v4180, %v4179
  %4197 = vmatprep.subr.bf16.mxu0 0
  %4198 = vmatpush1.bf16.msra.mxu0 %v4181
  %4199 = vmatprep.subr.bf16.mxu0 0
  %4200 = vmatpush1.bf16.msra.mxu0 %v4182
  %4201 = vmatprep.subr.bf16.mxu0 0
  %4202 = vmatpush1.bf16.msra.mxu0 %v4183
  %4203 = vmatprep.subr.bf16.mxu0 0
  %4204 = vmatpush1.bf16.msra.mxu0 %v4184
  %4205 = vmatprep.subr.bf16.mxu0 0
  %4206 = vmatpush1.bf16.msra.mxu0 %v4185
  %4207 = vmatprep.subr.bf16.mxu0 0
  %4208 = vmatpush1.bf16.msra.mxu0 %v4186
  %4209 = vmatprep.subr.bf16.mxu0 0
  %4210 = vmatpush1.bf16.msra.mxu0 %v4187
  %4211 = vmatprep.subr.bf16.mxu0 0
  %4212 = vmatpush1.bf16.msra.mxu0 %v4188
  %4213 = vmatprep.subr.bf16.mxu0 0
  %4214 = vmatpush1.bf16.msra.mxu0 0
  %4215 = vmatprep.subr.bf16.mxu0 0
  %4216 = vmatpush1.bf16.msra.mxu0 0
  %4217 = vmatprep.subr.bf16.mxu0 0
  %4218 = vmatpush1.bf16.msra.mxu0 0
  %4219 = vmatprep.subr.bf16.mxu0 0
  %4220 = vmatpush1.bf16.msra.mxu0 0
  %4221 = vmatprep.subr.bf16.mxu0 0
  %4222 = vmatpush1.bf16.msra.mxu0 0
  %4223 = vmatprep.subr.bf16.mxu0 0
  %4224 = vmatpush1.bf16.msra.mxu0 0
  %4225 = vmatprep.subr.bf16.mxu0 0
  %4226 = vmatpush1.bf16.msra.mxu0 0
  %4227 = vmatprep.subr.bf16.mxu0 0
  %4228 = vmatpush1.bf16.msra.mxu0 0
  %4229 = vmatprep.mubr.bf16.mxu0 0
  %4230 = vmatmul.mubr.bf16.gmra.mrb[0].mxu0 %v4117
  %v4231 = vpop.f32.mrb[0].mxu0
  %v4232 = vadd.f32 0.0, %v4231
  %v4233 = vpop.f32.mrb[0].mxu0
  %v4234 = vpop.f32.mrb[0].mxu0
  %v4235 = vadd.f32 0.0, %v4234
  %v4236 = vpop.f32.mrb[0].mxu0
  %4237 = vmatprep.mubr.bf16.mxu0 0
  %4238 = vmatmul.mubr.bf16.gmra.mrb[0].mxu0 %v4118
  %v4239 = vpop.f32.mrb[0].mxu0
  %v4240 = vadd.f32 0.0, %v4239
  %v4241 = vpop.f32.mrb[0].mxu0
  %v4242 = vpop.f32.mrb[0].mxu0
  %v4243 = vadd.f32 0.0, %v4242
  %v4244 = vpop.f32.mrb[0].mxu0
  %4245 = vmatprep.mubr.bf16.mxu0 0
  %4246 = vmatmul.mubr.bf16.gmra.mrb[0].mxu0 %v4119
  %v4247 = vpop.f32.mrb[0].mxu0
  %v4248 = vadd.f32 0.0, %v4247
  %v4249 = vpop.f32.mrb[0].mxu0
  %v4250 = vpop.f32.mrb[0].mxu0
  %v4251 = vadd.f32 0.0, %v4250
  %v4252 = vpop.f32.mrb[0].mxu0
  %4253 = vmatprep.mubr.bf16.mxu0 0
  %4254 = vmatmul.mubr.bf16.gmra.mrb[0].mxu0 %v4120
  %v4255 = vpop.f32.mrb[0].mxu0
  %v4256 = vadd.f32 0.0, %v4255
  %v4257 = vpop.f32.mrb[0].mxu0
  %v4258 = vpop.f32.mrb[0].mxu0
  %v4259 = vadd.f32 0.0, %v4258
  %v4260 = vpop.f32.mrb[0].mxu0
  %4261 = vmatprep.mubr.bf16.mxu0 0
  %4262 = vmatmul.mubr.bf16.gmra.mrb[0].mxu0 %v4121
  %v4263 = vpop.f32.mrb[0].mxu0
  %v4264 = vadd.f32 0.0, %v4263
  %v4265 = vpop.f32.mrb[0].mxu0
  %v4266 = vpop.f32.mrb[0].mxu0
  %v4267 = vadd.f32 0.0, %v4266
  %v4268 = vpop.f32.mrb[0].mxu0
  %4269 = vmatprep.mubr.bf16.mxu0 0
  %4270 = vmatmul.mubr.bf16.gmra.mrb[0].mxu0 %v4122
  %v4271 = vpop.f32.mrb[0].mxu0
  %v4272 = vadd.f32 0.0, %v4271
  %v4273 = vpop.f32.mrb[0].mxu0
  %v4274 = vpop.f32.mrb[0].mxu0
  %v4275 = vadd.f32 0.0, %v4274
  %v4276 = vpop.f32.mrb[0].mxu0
  %4277 = vmatprep.mubr.bf16.mxu0 0
  %4278 = vmatmul.mubr.bf16.gmra.mrb[0].mxu0 %v4123
  %v4279 = vpop.f32.mrb[0].mxu0
  %v4280 = vadd.f32 0.0, %v4279
  %v4281 = vpop.f32.mrb[0].mxu0
  %v4282 = vpop.f32.mrb[0].mxu0
  %v4283 = vadd.f32 0.0, %v4282
  %v4284 = vpop.f32.mrb[0].mxu0
  %4285 = vmatprep.mubr.bf16.mxu0 0
  %4286 = vmatmul.mubr.bf16.gmra.mrb[0].mxu0 %v4124
  %v4287 = vpop.f32.mrb[0].mxu0
  %v4288 = vadd.f32 0.0, %v4287
  %v4289 = vpop.f32.mrb[0].mxu0
  %v4290 = vpop.f32.mrb[0].mxu0
  %v4291 = vadd.f32 0.0, %v4290
  %v4292 = vpop.f32.mrb[0].mxu0
  %4293 = vmatprep.mubr.bf16.mxu0 0
  %4294 = vmatmul.mubr.bf16.gmra.mrb[0].mxu0 %v4125
  %v4295 = vpop.f32.mrb[0].mxu0
  %v4296 = vadd.f32 0.0, %v4295
  %v4297 = vpop.f32.mrb[0].mxu0
  %v4298 = vpop.f32.mrb[0].mxu0
  %v4299 = vadd.f32 0.0, %v4298
  %v4300 = vpop.f32.mrb[0].mxu0
  %4301 = vmatprep.mubr.bf16.mxu0 0
  %4302 = vmatmul.mubr.bf16.gmra.mrb[0].mxu0 %v4126
  %v4303 = vpop.f32.mrb[0].mxu0
  %v4304 = vadd.f32 0.0, %v4303
  %v4305 = vpop.f32.mrb[0].mxu0
  %v4306 = vpop.f32.mrb[0].mxu0
  %v4307 = vadd.f32 0.0, %v4306
  %v4308 = vpop.f32.mrb[0].mxu0
  %4309 = vmatprep.mubr.bf16.mxu0 0
  %4310 = vmatmul.mubr.bf16.gmra.mrb[0].mxu0 %v4127
  %v4311 = vpop.f32.mrb[0].mxu0
  %v4312 = vadd.f32 0.0, %v4311
  %v4313 = vpop.f32.mrb[0].mxu0
  %v4314 = vpop.f32.mrb[0].mxu0
  %v4315 = vadd.f32 0.0, %v4314
  %v4316 = vpop.f32.mrb[0].mxu0
  %4317 = vmatprep.mubr.bf16.mxu0 0
  %4318 = vmatmul.mubr.bf16.gmra.mrb[0].mxu0 %v4128
  %v4319 = vpop.f32.mrb[0].mxu0
  %v4320 = vadd.f32 0.0, %v4319
  %v4321 = vpop.f32.mrb[0].mxu0
  %v4322 = vpop.f32.mrb[0].mxu0
  %v4323 = vadd.f32 0.0, %v4322
  %v4324 = vpop.f32.mrb[0].mxu0
  %4325 = vmatprep.mubr.bf16.mxu0 0
  %4326 = vmatmul.mubr.bf16.gmra.mrb[0].mxu0 %v4129
  %v4327 = vpop.f32.mrb[0].mxu0
  %v4328 = vadd.f32 0.0, %v4327
  %v4329 = vpop.f32.mrb[0].mxu0
  %v4330 = vpop.f32.mrb[0].mxu0
  %v4331 = vadd.f32 0.0, %v4330
  %v4332 = vpop.f32.mrb[0].mxu0
  %4333 = vmatprep.mubr.bf16.mxu0 0
  %4334 = vmatmul.mubr.bf16.gmra.mrb[0].mxu0 %v4130
  %v4335 = vpop.f32.mrb[0].mxu0
  %v4336 = vadd.f32 0.0, %v4335
  %v4337 = vpop.f32.mrb[0].mxu0
  %v4338 = vpop.f32.mrb[0].mxu0
  %v4339 = vadd.f32 0.0, %v4338
  %v4340 = vpop.f32.mrb[0].mxu0
  %4341 = vmatprep.mubr.bf16.mxu0 0
  %4342 = vmatmul.mubr.bf16.gmra.mrb[0].mxu0 %v4131
  %v4343 = vpop.f32.mrb[0].mxu0
  %v4344 = vadd.f32 0.0, %v4343
  %v4345 = vpop.f32.mrb[0].mxu0
  %v4346 = vpop.f32.mrb[0].mxu0
  %v4347 = vadd.f32 0.0, %v4346
  %v4348 = vpop.f32.mrb[0].mxu0
  %4349 = vmatprep.mubr.bf16.mxu0 0
  %4350 = vmatmul.mubr.bf16.gmra.mrb[0].mxu0 %v4132
  %v4351 = vpop.f32.mrb[0].mxu0
  %v4352 = vadd.f32 0.0, %v4351
  %v4353 = vpop.f32.mrb[0].mxu0
  %v4354 = vpop.f32.mrb[0].mxu0
  %v4355 = vadd.f32 0.0, %v4354
  %v4356 = vpop.f32.mrb[0].mxu0
  %4357 = vdwg.mxu0
  %v4358 = vadd.f32 %v4085, %v4086
  %v4359 = vadd.f32 %v4358, %v4087
  %v4360 = vadd.f32 %v4359, %v4088
  %v4361 = vadd.f32 %v4360, %v4089
  %v4362 = vadd.f32 %v4361, %v4090
  %v4363 = vadd.f32 %v4362, %v4091
  %v4364 = vadd.f32 %v4363, %v4092
  %v4365 = vadd.f32 %v4364, %v4093
  %v4366 = vadd.f32 %v4365, %v4094
  %v4367 = vadd.f32 %v4366, %v4095
  %v4368 = vadd.f32 %v4367, %v4096
  %v4369 = vadd.f32 %v4368, %v4097
  %v4370 = vadd.f32 %v4369, %v4098
  %v4371 = vadd.f32 %v4370, %v4099
  %v4372 = vadd.f32 %v4371, %v4100
  %v4373 = vadd.f32 %v4372, %v4101
  %v4374 = vadd.f32 %v4373, %v4102
  %v4375 = vadd.f32 %v4374, %v4103
  %v4376 = vadd.f32 %v4375, %v4104
  %v4377 = vadd.f32 %v4376, %v4105
  %v4378 = vadd.f32 %v4377, %v4106
  %v4379 = vadd.f32 %v4378, %v4107
  %v4380 = vadd.f32 %v4379, %v4108
  %v4381 = vadd.f32 %v4380, %v4109
  %v4382 = vadd.f32 %v4381, %v4110
  %v4383 = vadd.f32 %v4382, %v4111
  %v4384 = vadd.f32 %v4383, %v4112
  %v4385 = vadd.f32 %v4384, %v4113
  %v4386 = vadd.f32 %v4385, %v4114
  %v4387 = vadd.f32 %v4386, %v4115
  %v4388 = vadd.f32 %v4387, %v4116
  %v4389 = vrot.slane %v4388, 4
  %v4390 = vadd.f32 %v4388, %v4389
  %v4391 = vrot.slane %v4390, 2
  %v4392 = vadd.f32 %v4390, %v4391
  %v4393 = vrot.slane %v4392, 1
  %v4394 = vadd.f32 %v4392, %v4393
  %v4395 = vrcp.pop 256.0
  %v4396 = vmul.f32 %v4394, %v4395
  %v4397 = vpack.c.bf16 %v4396, %v4396
  %v4398 = vld [vmem:[%s9] sm:$0xf]
  %v4399 = vld [vmem:[%s9 + $0x4] sm:$0xf]
  %v4400 = vld [vmem:[%s9 + $0x8] sm:$0xf]
  %v4401 = vld [vmem:[%s9 + $0xc] sm:$0xf]
  %v4402 = vld [vmem:[%s9 + $0x10] sm:$0xf]
  %v4403 = vld [vmem:[%s9 + $0x14] sm:$0xf]
  %v4404 = vld [vmem:[%s9 + $0x18] sm:$0xf]
  %v4405 = vld [vmem:[%s9 + $0x1c] sm:$0xf]
  %v4406 = vld [vmem:[%s9 + $0x20] sm:$0xf]
  %v4407 = vld [vmem:[%s9 + $0x24] sm:$0xf]
  %v4408 = vld [vmem:[%s9 + $0x28] sm:$0xf]
  %v4409 = vld [vmem:[%s9 + $0x2c] sm:$0xf]
  %v4410 = vld [vmem:[%s9 + $0x30] sm:$0xf]
  %v4411 = vld [vmem:[%s9 + $0x34] sm:$0xf]
  %v4412 = vld [vmem:[%s9 + $0x38] sm:$0xf]
  %v4413 = vld [vmem:[%s9 + $0x3c] sm:$0xf]
  %v4414 = vld [vmem:[%s10] sm:$0x1]
  %v4431 = vunpack.c.l.b16 %v4398
  %v4432 = vunpack.c.l.b16 %v4399
  %v4433 = vunpack.c.l.b16 %v4400
  %v4434 = vunpack.c.l.b16 %v4401
  %v4435 = vunpack.c.l.b16 %v4402
  %v4436 = vunpack.c.l.b16 %v4403
  %v4437 = vunpack.c.l.b16 %v4404
  %v4438 = vunpack.c.l.b16 %v4405
  %v4439 = vunpack.c.l.b16 %v4406
  %v4440 = vunpack.c.l.b16 %v4407
  %v4441 = vunpack.c.l.b16 %v4408
  %v4442 = vunpack.c.l.b16 %v4409
  %v4443 = vunpack.c.l.b16 %v4410
  %v4444 = vunpack.c.l.b16 %v4411
  %v4445 = vunpack.c.l.b16 %v4412
  %v4446 = vunpack.c.l.b16 %v4413
  %v4447 = vpack.c.b16 %v4432, %v4431
  %v4448 = vpack.c.b16 %v4434, %v4433
  %v4449 = vpack.c.b16 %v4436, %v4435
  %v4450 = vpack.c.b16 %v4438, %v4437
  %v4451 = vpack.c.b16 %v4440, %v4439
  %v4452 = vpack.c.b16 %v4442, %v4441
  %v4453 = vpack.c.b16 %v4444, %v4443
  %v4454 = vpack.c.b16 %v4446, %v4445
  %4463 = vmatprep.subr.bf16.mxu0 0
  %4464 = vmatpush1.bf16.msra.mxu0 %v4447
  %4465 = vmatprep.subr.bf16.mxu0 0
  %4466 = vmatpush1.bf16.msra.mxu0 %v4448
  %4467 = vmatprep.subr.bf16.mxu0 0
  %4468 = vmatpush1.bf16.msra.mxu0 %v4449
  %4469 = vmatprep.subr.bf16.mxu0 0
  %4470 = vmatpush1.bf16.msra.mxu0 %v4450
  %4471 = vmatprep.subr.bf16.mxu0 0
  %4472 = vmatpush1.bf16.msra.mxu0 %v4451
  %4473 = vmatprep.subr.bf16.mxu0 0
  %4474 = vmatpush1.bf16.msra.mxu0 %v4452
  %4475 = vmatprep.subr.bf16.mxu0 0
  %4476 = vmatpush1.bf16.msra.mxu0 %v4453
  %4477 = vmatprep.subr.bf16.mxu0 0
  %4478 = vmatpush1.bf16.msra.mxu0 %v4454
  %4479 = vmatprep.subr.bf16.mxu0 0
  %4480 = vmatpush1.bf16.msra.mxu0 0
  %4481 = vmatprep.subr.bf16.mxu0 0
  %4482 = vmatpush1.bf16.msra.mxu0 0
  %4483 = vmatprep.subr.bf16.mxu0 0
  %4484 = vmatpush1.bf16.msra.mxu0 0
  %4485 = vmatprep.subr.bf16.mxu0 0
  %4486 = vmatpush1.bf16.msra.mxu0 0
  %4487 = vmatprep.subr.bf16.mxu0 0
  %4488 = vmatpush1.bf16.msra.mxu0 0
  %4489 = vmatprep.subr.bf16.mxu0 0
  %4490 = vmatpush1.bf16.msra.mxu0 0
  %4491 = vmatprep.subr.bf16.mxu0 0
  %4492 = vmatpush1.bf16.msra.mxu0 0
  %4493 = vmatprep.subr.bf16.mxu0 0
  %4494 = vmatpush1.bf16.msra.mxu0 0
  %4495 = vmatprep.mubr.bf16.mxu0 0
  %4496 = vmatmul.mubr.bf16.gmra.mrb[0].mxu0 %v4397
  %v4497 = vpop.f32.mrb[0].mxu0
  %v4498 = vadd.f32 %v4414, %v4497
  %v4499 = vpop.f32.mrb[0].mxu0
  %v4500 = vpop.f32.mrb[0].mxu0
  %v4501 = vpop.f32.mrb[0].mxu0
  %4502 = vdwg.mxu0
  %v4503 = vmax.f32 %v4498, 0.0
  %v4504 = vpack.c.bf16 %v4503, %v4503
  %v4505 = vld [vmem:[%s11] sm:$0xf]
  %v4506 = vld [vmem:[%s11 + $0x4] sm:$0xf]
  %v4507 = vld [vmem:[%s11 + $0x8] sm:$0xf]
  %v4508 = vld [vmem:[%s11 + $0xc] sm:$0xf]
  %v4509 = vld [vmem:[%s11 + $0x10] sm:$0xf]
  %v4510 = vld [vmem:[%s11 + $0x14] sm:$0xf]
  %v4511 = vld [vmem:[%s11 + $0x18] sm:$0xf]
  %v4512 = vld [vmem:[%s11 + $0x1c] sm:$0xf]
  %v4521 = vunpack.c.l.b16 %v4505
  %v4522 = vunpack.c.l.b16 %v4506
  %v4523 = vunpack.c.l.b16 %v4507
  %v4524 = vunpack.c.l.b16 %v4508
  %v4525 = vunpack.c.l.b16 %v4509
  %v4526 = vunpack.c.l.b16 %v4510
  %v4527 = vunpack.c.l.b16 %v4511
  %v4528 = vunpack.c.l.b16 %v4512
  %v4529 = vpack.c.b16 %v4522, %v4521
  %v4530 = vpack.c.b16 %v4524, %v4523
  %v4531 = vpack.c.b16 %v4526, %v4525
  %v4532 = vpack.c.b16 %v4528, %v4527
  %vm4537 = vcmask 523264
  %v4539 = vsel %vm4537, %v4504, 0
  %4541 = vmatprep.subr.bf16.mxu0 0
  %4542 = vmatpush1.bf16.msra.mxu0 %v4529
  %4543 = vmatprep.subr.bf16.mxu0 0
  %4544 = vmatpush1.bf16.msra.mxu0 %v4530
  %4545 = vmatprep.subr.bf16.mxu0 0
  %4546 = vmatpush1.bf16.msra.mxu0 %v4531
  %4547 = vmatprep.subr.bf16.mxu0 0
  %4548 = vmatpush1.bf16.msra.mxu0 %v4532
  %4549 = vmatprep.subr.bf16.mxu0 0
  %4550 = vmatpush1.bf16.msra.mxu0 0
  %4551 = vmatprep.subr.bf16.mxu0 0
  %4552 = vmatpush1.bf16.msra.mxu0 0
  %4553 = vmatprep.subr.bf16.mxu0 0
  %4554 = vmatpush1.bf16.msra.mxu0 0
  %4555 = vmatprep.subr.bf16.mxu0 0
  %4556 = vmatpush1.bf16.msra.mxu0 0
  %4557 = vmatprep.subr.bf16.mxu0 0
  %4558 = vmatpush1.bf16.msra.mxu0 0
  %4559 = vmatprep.subr.bf16.mxu0 0
  %4560 = vmatpush1.bf16.msra.mxu0 0
  %4561 = vmatprep.subr.bf16.mxu0 0
  %4562 = vmatpush1.bf16.msra.mxu0 0
  %4563 = vmatprep.subr.bf16.mxu0 0
  %4564 = vmatpush1.bf16.msra.mxu0 0
  %4565 = vmatprep.subr.bf16.mxu0 0
  %4566 = vmatpush1.bf16.msra.mxu0 0
  %4567 = vmatprep.subr.bf16.mxu0 0
  %4568 = vmatpush1.bf16.msra.mxu0 0
  %4569 = vmatprep.subr.bf16.mxu0 0
  %4570 = vmatpush1.bf16.msra.mxu0 0
  %4571 = vmatprep.subr.bf16.mxu0 0
  %4572 = vmatpush1.bf16.msra.mxu0 0
  %4573 = vmatprep.mubr.bf16.mxu0 0
  %4574 = vmatmul.mubr.bf16.gmra.mrb[0].mxu0 %v4539
  %v4575 = vpop.f32.mrb[0].mxu0
  %v4576 = vadd.f32 0.0, %v4575
  %v4577 = vpop.f32.mrb[0].mxu0
  %v4578 = vpop.f32.mrb[0].mxu0
  %v4579 = vpop.f32.mrb[0].mxu0
  %4580 = vdwg.mxu0
  %v4581 = vxor.u32 %v4576, 2147483648
  %v4582 = vmul.f32 %v4581, 1.442695
  %v4583 = vpow.pop %v4582
  %v4584 = vadd.f32 %v4583, 1.0
  %v4585 = vrcp.pop %v4584
  %v4586 = vmul.f32 1.0, %v4585
  %v4587 = vlaneseq
  %v4588 = vshrl.u32 %v4587, 7
  %v4589 = vsub.s32 0, %v4588
  %v4590 = vrot.slane %v4586, %v4589
  %v4591 = vmul.f32 %v4085, %v4590
  %v4592 = vmul.f32 %v4086, %v4590
  %v4593 = vmul.f32 %v4087, %v4590
  %v4594 = vmul.f32 %v4088, %v4590
  %v4595 = vmul.f32 %v4089, %v4590
  %v4596 = vmul.f32 %v4090, %v4590
  %v4597 = vmul.f32 %v4091, %v4590
  %v4598 = vmul.f32 %v4092, %v4590
  %v4599 = vmul.f32 %v4093, %v4590
  %v4600 = vmul.f32 %v4094, %v4590
  %v4601 = vmul.f32 %v4095, %v4590
  %v4602 = vmul.f32 %v4096, %v4590
  %v4603 = vmul.f32 %v4097, %v4590
  %v4604 = vmul.f32 %v4098, %v4590
  %v4605 = vmul.f32 %v4099, %v4590
  %v4606 = vmul.f32 %v4100, %v4590
  %v4607 = vmul.f32 %v4101, %v4590
  %v4608 = vmul.f32 %v4102, %v4590
  %v4609 = vmul.f32 %v4103, %v4590
  %v4610 = vmul.f32 %v4104, %v4590
  %v4611 = vmul.f32 %v4105, %v4590
  %v4612 = vmul.f32 %v4106, %v4590
  %v4613 = vmul.f32 %v4107, %v4590
  %v4614 = vmul.f32 %v4108, %v4590
  %v4615 = vmul.f32 %v4109, %v4590
  %v4616 = vmul.f32 %v4110, %v4590
  %v4617 = vmul.f32 %v4111, %v4590
  %v4618 = vmul.f32 %v4112, %v4590
  %v4619 = vmul.f32 %v4113, %v4590
  %v4620 = vmul.f32 %v4114, %v4590
  %v4621 = vmul.f32 %v4115, %v4590
  %v4622 = vmul.f32 %v4116, %v4590
  %v4623 = vmul.f32 %v4591, %v4232
  %v4624 = vmul.f32 %v4592, %v4235
  %v4625 = vmul.f32 %v4593, %v4240
  %v4626 = vmul.f32 %v4594, %v4243
  %v4627 = vmul.f32 %v4595, %v4248
  %v4628 = vmul.f32 %v4596, %v4251
  %v4629 = vmul.f32 %v4597, %v4256
  %v4630 = vmul.f32 %v4598, %v4259
  %v4631 = vmul.f32 %v4599, %v4264
  %v4632 = vmul.f32 %v4600, %v4267
  %v4633 = vmul.f32 %v4601, %v4272
  %v4634 = vmul.f32 %v4602, %v4275
  %v4635 = vmul.f32 %v4603, %v4280
  %v4636 = vmul.f32 %v4604, %v4283
  %v4637 = vmul.f32 %v4605, %v4288
  %v4638 = vmul.f32 %v4606, %v4291
  %v4639 = vmul.f32 %v4607, %v4296
  %v4640 = vmul.f32 %v4608, %v4299
  %v4641 = vmul.f32 %v4609, %v4304
  %v4642 = vmul.f32 %v4610, %v4307
  %v4643 = vmul.f32 %v4611, %v4312
  %v4644 = vmul.f32 %v4612, %v4315
  %v4645 = vmul.f32 %v4613, %v4320
  %v4646 = vmul.f32 %v4614, %v4323
  %v4647 = vmul.f32 %v4615, %v4328
  %v4648 = vmul.f32 %v4616, %v4331
  %v4649 = vmul.f32 %v4617, %v4336
  %v4650 = vmul.f32 %v4618, %v4339
  %v4651 = vmul.f32 %v4619, %v4344
  %v4652 = vmul.f32 %v4620, %v4347
  %v4653 = vmul.f32 %v4621, %v4352
  %v4654 = vmul.f32 %v4622, %v4355
  %v4655 = vpack.c.bf16 %v4624, %v4623
  %v4656 = vpack.c.bf16 %v4626, %v4625
  %v4657 = vpack.c.bf16 %v4628, %v4627
  %v4658 = vpack.c.bf16 %v4630, %v4629
  %v4659 = vpack.c.bf16 %v4632, %v4631
  %v4660 = vpack.c.bf16 %v4634, %v4633
  %v4661 = vpack.c.bf16 %v4636, %v4635
  %v4662 = vpack.c.bf16 %v4638, %v4637
  %v4663 = vpack.c.bf16 %v4640, %v4639
  %v4664 = vpack.c.bf16 %v4642, %v4641
  %v4665 = vpack.c.bf16 %v4644, %v4643
  %v4666 = vpack.c.bf16 %v4646, %v4645
  %v4667 = vpack.c.bf16 %v4648, %v4647
  %v4668 = vpack.c.bf16 %v4650, %v4649
  %v4669 = vpack.c.bf16 %v4652, %v4651
  %v4670 = vpack.c.bf16 %v4654, %v4653
  %v4671 = vld [vmem:[%s12] sm:$0xf]
  %v4672 = vld [vmem:[%s12 + $0x4] sm:$0xf]
  %v4673 = vld [vmem:[%s12 + $0x8] sm:$0xf]
  %v4674 = vld [vmem:[%s12 + $0xc] sm:$0xf]
  %v4675 = vld [vmem:[%s12 + $0x10] sm:$0xf]
  %v4676 = vld [vmem:[%s12 + $0x14] sm:$0xf]
  %v4677 = vld [vmem:[%s12 + $0x18] sm:$0xf]
  %v4678 = vld [vmem:[%s12 + $0x1c] sm:$0xf]
  %v4679 = vld [vmem:[%s12 + $0x20] sm:$0xf]
  %v4680 = vld [vmem:[%s12 + $0x24] sm:$0xf]
  %v4681 = vld [vmem:[%s12 + $0x28] sm:$0xf]
  %v4682 = vld [vmem:[%s12 + $0x2c] sm:$0xf]
  %v4683 = vld [vmem:[%s12 + $0x30] sm:$0xf]
  %v4684 = vld [vmem:[%s12 + $0x34] sm:$0xf]
  %v4685 = vld [vmem:[%s12 + $0x38] sm:$0xf]
  %v4686 = vld [vmem:[%s12 + $0x3c] sm:$0xf]
  %v4687 = vld [vmem:[%s13] sm:$0x1]
  %v4689 = vlaneseq
  %v4690 = vshrl.u32 %v4689, 7
  %v4691 = vsub.s32 0, %v4690
  %v4692 = vrot.slane %v4687, %v4691
  %v4710 = vunpack.c.l.b16 %v4671
  %v4711 = vunpack.c.l.b16 %v4672
  %v4712 = vunpack.c.l.b16 %v4673
  %v4713 = vunpack.c.l.b16 %v4674
  %v4714 = vunpack.c.l.b16 %v4675
  %v4715 = vunpack.c.l.b16 %v4676
  %v4716 = vunpack.c.l.b16 %v4677
  %v4717 = vunpack.c.l.b16 %v4678
  %v4718 = vunpack.c.l.b16 %v4679
  %v4719 = vunpack.c.l.b16 %v4680
  %v4720 = vunpack.c.l.b16 %v4681
  %v4721 = vunpack.c.l.b16 %v4682
  %v4722 = vunpack.c.l.b16 %v4683
  %v4723 = vunpack.c.l.b16 %v4684
  %v4724 = vunpack.c.l.b16 %v4685
  %v4725 = vunpack.c.l.b16 %v4686
  %v4726 = vpack.c.b16 %v4711, %v4710
  %v4727 = vpack.c.b16 %v4713, %v4712
  %v4728 = vpack.c.b16 %v4715, %v4714
  %v4729 = vpack.c.b16 %v4717, %v4716
  %v4730 = vpack.c.b16 %v4719, %v4718
  %v4731 = vpack.c.b16 %v4721, %v4720
  %v4732 = vpack.c.b16 %v4723, %v4722
  %v4733 = vpack.c.b16 %v4725, %v4724
  %4742 = vmatprep.subr.bf16.mxu0 0
  %4743 = vmatpush1.bf16.msra.mxu0 %v4726
  %4744 = vmatprep.subr.bf16.mxu0 0
  %4745 = vmatpush1.bf16.msra.mxu0 %v4727
  %4746 = vmatprep.subr.bf16.mxu0 0
  %4747 = vmatpush1.bf16.msra.mxu0 %v4728
  %4748 = vmatprep.subr.bf16.mxu0 0
  %4749 = vmatpush1.bf16.msra.mxu0 %v4729
  %4750 = vmatprep.subr.bf16.mxu0 0
  %4751 = vmatpush1.bf16.msra.mxu0 %v4730
  %4752 = vmatprep.subr.bf16.mxu0 0
  %4753 = vmatpush1.bf16.msra.mxu0 %v4731
  %4754 = vmatprep.subr.bf16.mxu0 0
  %4755 = vmatpush1.bf16.msra.mxu0 %v4732
  %4756 = vmatprep.subr.bf16.mxu0 0
  %4757 = vmatpush1.bf16.msra.mxu0 %v4733
  %4758 = vmatprep.subr.bf16.mxu0 0
  %4759 = vmatpush1.bf16.msra.mxu0 0
  %4760 = vmatprep.subr.bf16.mxu0 0
  %4761 = vmatpush1.bf16.msra.mxu0 0
  %4762 = vmatprep.subr.bf16.mxu0 0
  %4763 = vmatpush1.bf16.msra.mxu0 0
  %4764 = vmatprep.subr.bf16.mxu0 0
  %4765 = vmatpush1.bf16.msra.mxu0 0
  %4766 = vmatprep.subr.bf16.mxu0 0
  %4767 = vmatpush1.bf16.msra.mxu0 0
  %4768 = vmatprep.subr.bf16.mxu0 0
  %4769 = vmatpush1.bf16.msra.mxu0 0
  %4770 = vmatprep.subr.bf16.mxu0 0
  %4771 = vmatpush1.bf16.msra.mxu0 0
  %4772 = vmatprep.subr.bf16.mxu0 0
  %4773 = vmatpush1.bf16.msra.mxu0 0
  %4774 = vmatprep.mubr.bf16.mxu0 0
  %4775 = vmatmul.mubr.bf16.gmra.mrb[0].mxu0 %v4655
  %v4776 = vpop.f32.mrb[0].mxu0
  %v4777 = vadd.f32 %v4692, %v4776
  %v4778 = vpop.f32.mrb[0].mxu0
  %v4779 = vpop.f32.mrb[0].mxu0
  %v4780 = vadd.f32 %v4692, %v4779
  %v4781 = vpop.f32.mrb[0].mxu0
  %4782 = vmatprep.mubr.bf16.mxu0 0
  %4783 = vmatmul.mubr.bf16.gmra.mrb[0].mxu0 %v4656
  %v4784 = vpop.f32.mrb[0].mxu0
  %v4785 = vadd.f32 %v4692, %v4784
  %v4786 = vpop.f32.mrb[0].mxu0
  %v4787 = vpop.f32.mrb[0].mxu0
  %v4788 = vadd.f32 %v4692, %v4787
  %v4789 = vpop.f32.mrb[0].mxu0
  %4790 = vmatprep.mubr.bf16.mxu0 0
  %4791 = vmatmul.mubr.bf16.gmra.mrb[0].mxu0 %v4657
  %v4792 = vpop.f32.mrb[0].mxu0
  %v4793 = vadd.f32 %v4692, %v4792
  %v4794 = vpop.f32.mrb[0].mxu0
  %v4795 = vpop.f32.mrb[0].mxu0
  %v4796 = vadd.f32 %v4692, %v4795
  %v4797 = vpop.f32.mrb[0].mxu0
  %4798 = vmatprep.mubr.bf16.mxu0 0
  %4799 = vmatmul.mubr.bf16.gmra.mrb[0].mxu0 %v4658
  %v4800 = vpop.f32.mrb[0].mxu0
  %v4801 = vadd.f32 %v4692, %v4800
  %v4802 = vpop.f32.mrb[0].mxu0
  %v4803 = vpop.f32.mrb[0].mxu0
  %v4804 = vadd.f32 %v4692, %v4803
  %v4805 = vpop.f32.mrb[0].mxu0
  %4806 = vmatprep.mubr.bf16.mxu0 0
  %4807 = vmatmul.mubr.bf16.gmra.mrb[0].mxu0 %v4659
  %v4808 = vpop.f32.mrb[0].mxu0
  %v4809 = vadd.f32 %v4692, %v4808
  %v4810 = vpop.f32.mrb[0].mxu0
  %v4811 = vpop.f32.mrb[0].mxu0
  %v4812 = vadd.f32 %v4692, %v4811
  %v4813 = vpop.f32.mrb[0].mxu0
  %4814 = vmatprep.mubr.bf16.mxu0 0
  %4815 = vmatmul.mubr.bf16.gmra.mrb[0].mxu0 %v4660
  %v4816 = vpop.f32.mrb[0].mxu0
  %v4817 = vadd.f32 %v4692, %v4816
  %v4818 = vpop.f32.mrb[0].mxu0
  %v4819 = vpop.f32.mrb[0].mxu0
  %v4820 = vadd.f32 %v4692, %v4819
  %v4821 = vpop.f32.mrb[0].mxu0
  %4822 = vmatprep.mubr.bf16.mxu0 0
  %4823 = vmatmul.mubr.bf16.gmra.mrb[0].mxu0 %v4661
  %v4824 = vpop.f32.mrb[0].mxu0
  %v4825 = vadd.f32 %v4692, %v4824
  %v4826 = vpop.f32.mrb[0].mxu0
  %v4827 = vpop.f32.mrb[0].mxu0
  %v4828 = vadd.f32 %v4692, %v4827
  %v4829 = vpop.f32.mrb[0].mxu0
  %4830 = vmatprep.mubr.bf16.mxu0 0
  %4831 = vmatmul.mubr.bf16.gmra.mrb[0].mxu0 %v4662
  %v4832 = vpop.f32.mrb[0].mxu0
  %v4833 = vadd.f32 %v4692, %v4832
  %v4834 = vpop.f32.mrb[0].mxu0
  %v4835 = vpop.f32.mrb[0].mxu0
  %v4836 = vadd.f32 %v4692, %v4835
  %v4837 = vpop.f32.mrb[0].mxu0
  %4838 = vmatprep.mubr.bf16.mxu0 0
  %4839 = vmatmul.mubr.bf16.gmra.mrb[0].mxu0 %v4663
  %v4840 = vpop.f32.mrb[0].mxu0
  %v4841 = vadd.f32 %v4692, %v4840
  %v4842 = vpop.f32.mrb[0].mxu0
  %v4843 = vpop.f32.mrb[0].mxu0
  %v4844 = vadd.f32 %v4692, %v4843
  %v4845 = vpop.f32.mrb[0].mxu0
  %4846 = vmatprep.mubr.bf16.mxu0 0
  %4847 = vmatmul.mubr.bf16.gmra.mrb[0].mxu0 %v4664
  %v4848 = vpop.f32.mrb[0].mxu0
  %v4849 = vadd.f32 %v4692, %v4848
  %v4850 = vpop.f32.mrb[0].mxu0
  %v4851 = vpop.f32.mrb[0].mxu0
  %v4852 = vadd.f32 %v4692, %v4851
  %v4853 = vpop.f32.mrb[0].mxu0
  %4854 = vmatprep.mubr.bf16.mxu0 0
  %4855 = vmatmul.mubr.bf16.gmra.mrb[0].mxu0 %v4665
  %v4856 = vpop.f32.mrb[0].mxu0
  %v4857 = vadd.f32 %v4692, %v4856
  %v4858 = vpop.f32.mrb[0].mxu0
  %v4859 = vpop.f32.mrb[0].mxu0
  %v4860 = vadd.f32 %v4692, %v4859
  %v4861 = vpop.f32.mrb[0].mxu0
  %4862 = vmatprep.mubr.bf16.mxu0 0
  %4863 = vmatmul.mubr.bf16.gmra.mrb[0].mxu0 %v4666
  %v4864 = vpop.f32.mrb[0].mxu0
  %v4865 = vadd.f32 %v4692, %v4864
  %v4866 = vpop.f32.mrb[0].mxu0
  %v4867 = vpop.f32.mrb[0].mxu0
  %v4868 = vadd.f32 %v4692, %v4867
  %v4869 = vpop.f32.mrb[0].mxu0
  %4870 = vmatprep.mubr.bf16.mxu0 0
  %4871 = vmatmul.mubr.bf16.gmra.mrb[0].mxu0 %v4667
  %v4872 = vpop.f32.mrb[0].mxu0
  %v4873 = vadd.f32 %v4692, %v4872
  %v4874 = vpop.f32.mrb[0].mxu0
  %v4875 = vpop.f32.mrb[0].mxu0
  %v4876 = vadd.f32 %v4692, %v4875
  %v4877 = vpop.f32.mrb[0].mxu0
  %4878 = vmatprep.mubr.bf16.mxu0 0
  %4879 = vmatmul.mubr.bf16.gmra.mrb[0].mxu0 %v4668
  %v4880 = vpop.f32.mrb[0].mxu0
  %v4881 = vadd.f32 %v4692, %v4880
  %v4882 = vpop.f32.mrb[0].mxu0
  %v4883 = vpop.f32.mrb[0].mxu0
  %v4884 = vadd.f32 %v4692, %v4883
  %v4885 = vpop.f32.mrb[0].mxu0
  %4886 = vmatprep.mubr.bf16.mxu0 0
  %4887 = vmatmul.mubr.bf16.gmra.mrb[0].mxu0 %v4669
  %v4888 = vpop.f32.mrb[0].mxu0
  %v4889 = vadd.f32 %v4692, %v4888
  %v4890 = vpop.f32.mrb[0].mxu0
  %v4891 = vpop.f32.mrb[0].mxu0
  %v4892 = vadd.f32 %v4692, %v4891
  %v4893 = vpop.f32.mrb[0].mxu0
  %4894 = vmatprep.mubr.bf16.mxu0 0
  %4895 = vmatmul.mubr.bf16.gmra.mrb[0].mxu0 %v4670
  %v4896 = vpop.f32.mrb[0].mxu0
  %v4897 = vadd.f32 %v4692, %v4896
  %v4898 = vpop.f32.mrb[0].mxu0
  %v4899 = vpop.f32.mrb[0].mxu0
  %v4900 = vadd.f32 %v4692, %v4899
  %v4901 = vpop.f32.mrb[0].mxu0
  %4902 = vdwg.mxu0
  %v4903 = vxor.u32 %v4777, 2147483648
  %v4904 = vxor.u32 %v4780, 2147483648
  %v4905 = vxor.u32 %v4785, 2147483648
  %v4906 = vxor.u32 %v4788, 2147483648
  %v4907 = vxor.u32 %v4793, 2147483648
  %v4908 = vxor.u32 %v4796, 2147483648
  %v4909 = vxor.u32 %v4801, 2147483648
  %v4910 = vxor.u32 %v4804, 2147483648
  %v4911 = vxor.u32 %v4809, 2147483648
  %v4912 = vxor.u32 %v4812, 2147483648
  %v4913 = vxor.u32 %v4817, 2147483648
  %v4914 = vxor.u32 %v4820, 2147483648
  %v4915 = vxor.u32 %v4825, 2147483648
  %v4916 = vxor.u32 %v4828, 2147483648
  %v4917 = vxor.u32 %v4833, 2147483648
  %v4918 = vxor.u32 %v4836, 2147483648
  %v4919 = vxor.u32 %v4841, 2147483648
  %v4920 = vxor.u32 %v4844, 2147483648
  %v4921 = vxor.u32 %v4849, 2147483648
  %v4922 = vxor.u32 %v4852, 2147483648
  %v4923 = vxor.u32 %v4857, 2147483648
  %v4924 = vxor.u32 %v4860, 2147483648
  %v4925 = vxor.u32 %v4865, 2147483648
  %v4926 = vxor.u32 %v4868, 2147483648
  %v4927 = vxor.u32 %v4873, 2147483648
  %v4928 = vxor.u32 %v4876, 2147483648
  %v4929 = vxor.u32 %v4881, 2147483648
  %v4930 = vxor.u32 %v4884, 2147483648
  %v4931 = vxor.u32 %v4889, 2147483648
  %v4932 = vxor.u32 %v4892, 2147483648
  %v4933 = vxor.u32 %v4897, 2147483648
  %v4934 = vxor.u32 %v4900, 2147483648
  %v4935 = vmul.f32 %v4903, 1.442695
  %v4936 = vpow.pop %v4935
  %v4937 = vmul.f32 %v4904, 1.442695
  %v4938 = vpow.pop %v4937
  %v4939 = vmul.f32 %v4905, 1.442695
  %v4940 = vpow.pop %v4939
  %v4941 = vmul.f32 %v4906, 1.442695
  %v4942 = vpow.pop %v4941
  %v4943 = vmul.f32 %v4907, 1.442695
  %v4944 = vpow.pop %v4943
  %v4945 = vmul.f32 %v4908, 1.442695
  %v4946 = vpow.pop %v4945
  %v4947 = vmul.f32 %v4909, 1.442695
  %v4948 = vpow.pop %v4947
  %v4949 = vmul.f32 %v4910, 1.442695
  %v4950 = vpow.pop %v4949
  %v4951 = vmul.f32 %v4911, 1.442695
  %v4952 = vpow.pop %v4951
  %v4953 = vmul.f32 %v4912, 1.442695
  %v4954 = vpow.pop %v4953
  %v4955 = vmul.f32 %v4913, 1.442695
  %v4956 = vpow.pop %v4955
  %v4957 = vmul.f32 %v4914, 1.442695
  %v4958 = vpow.pop %v4957
  %v4959 = vmul.f32 %v4915, 1.442695
  %v4960 = vpow.pop %v4959
  %v4961 = vmul.f32 %v4916, 1.442695
  %v4962 = vpow.pop %v4961
  %v4963 = vmul.f32 %v4917, 1.442695
  %v4964 = vpow.pop %v4963
  %v4965 = vmul.f32 %v4918, 1.442695
  %v4966 = vpow.pop %v4965
  %v4967 = vmul.f32 %v4919, 1.442695
  %v4968 = vpow.pop %v4967
  %v4969 = vmul.f32 %v4920, 1.442695
  %v4970 = vpow.pop %v4969
  %v4971 = vmul.f32 %v4921, 1.442695
  %v4972 = vpow.pop %v4971
  %v4973 = vmul.f32 %v4922, 1.442695
  %v4974 = vpow.pop %v4973
  %v4975 = vmul.f32 %v4923, 1.442695
  %v4976 = vpow.pop %v4975
  %v4977 = vmul.f32 %v4924, 1.442695
  %v4978 = vpow.pop %v4977
  %v4979 = vmul.f32 %v4925, 1.442695
  %v4980 = vpow.pop %v4979
  %v4981 = vmul.f32 %v4926, 1.442695
  %v4982 = vpow.pop %v4981
  %v4983 = vmul.f32 %v4927, 1.442695
  %v4984 = vpow.pop %v4983
  %v4985 = vmul.f32 %v4928, 1.442695
  %v4986 = vpow.pop %v4985
  %v4987 = vmul.f32 %v4929, 1.442695
  %v4988 = vpow.pop %v4987
  %v4989 = vmul.f32 %v4930, 1.442695
  %v4990 = vpow.pop %v4989
  %v4991 = vmul.f32 %v4931, 1.442695
  %v4992 = vpow.pop %v4991
  %v4993 = vmul.f32 %v4932, 1.442695
  %v4994 = vpow.pop %v4993
  %v4995 = vmul.f32 %v4933, 1.442695
  %v4996 = vpow.pop %v4995
  %v4997 = vmul.f32 %v4934, 1.442695
  %v4998 = vpow.pop %v4997
  %v4999 = vadd.f32 %v4936, 1.0
  %v5000 = vadd.f32 %v4938, 1.0
  %v5001 = vadd.f32 %v4940, 1.0
  %v5002 = vadd.f32 %v4942, 1.0
  %v5003 = vadd.f32 %v4944, 1.0
  %v5004 = vadd.f32 %v4946, 1.0
  %v5005 = vadd.f32 %v4948, 1.0
  %v5006 = vadd.f32 %v4950, 1.0
  %v5007 = vadd.f32 %v4952, 1.0
  %v5008 = vadd.f32 %v4954, 1.0
  %v5009 = vadd.f32 %v4956, 1.0
  %v5010 = vadd.f32 %v4958, 1.0
  %v5011 = vadd.f32 %v4960, 1.0
  %v5012 = vadd.f32 %v4962, 1.0
  %v5013 = vadd.f32 %v4964, 1.0
  %v5014 = vadd.f32 %v4966, 1.0
  %v5015 = vadd.f32 %v4968, 1.0
  %v5016 = vadd.f32 %v4970, 1.0
  %v5017 = vadd.f32 %v4972, 1.0
  %v5018 = vadd.f32 %v4974, 1.0
  %v5019 = vadd.f32 %v4976, 1.0
  %v5020 = vadd.f32 %v4978, 1.0
  %v5021 = vadd.f32 %v4980, 1.0
  %v5022 = vadd.f32 %v4982, 1.0
  %v5023 = vadd.f32 %v4984, 1.0
  %v5024 = vadd.f32 %v4986, 1.0
  %v5025 = vadd.f32 %v4988, 1.0
  %v5026 = vadd.f32 %v4990, 1.0
  %v5027 = vadd.f32 %v4992, 1.0
  %v5028 = vadd.f32 %v4994, 1.0
  %v5029 = vadd.f32 %v4996, 1.0
  %v5030 = vadd.f32 %v4998, 1.0
  %v5031 = vrcp.pop %v4999
  %v5032 = vmul.f32 1.0, %v5031
  %v5033 = vrcp.pop %v5000
  %v5034 = vmul.f32 1.0, %v5033
  %v5035 = vrcp.pop %v5001
  %v5036 = vmul.f32 1.0, %v5035
  %v5037 = vrcp.pop %v5002
  %v5038 = vmul.f32 1.0, %v5037
  %v5039 = vrcp.pop %v5003
  %v5040 = vmul.f32 1.0, %v5039
  %v5041 = vrcp.pop %v5004
  %v5042 = vmul.f32 1.0, %v5041
  %v5043 = vrcp.pop %v5005
  %v5044 = vmul.f32 1.0, %v5043
  %v5045 = vrcp.pop %v5006
  %v5046 = vmul.f32 1.0, %v5045
  %v5047 = vrcp.pop %v5007
  %v5048 = vmul.f32 1.0, %v5047
  %v5049 = vrcp.pop %v5008
  %v5050 = vmul.f32 1.0, %v5049
  %v5051 = vrcp.pop %v5009
  %v5052 = vmul.f32 1.0, %v5051
  %v5053 = vrcp.pop %v5010
  %v5054 = vmul.f32 1.0, %v5053
  %v5055 = vrcp.pop %v5011
  %v5056 = vmul.f32 1.0, %v5055
  %v5057 = vrcp.pop %v5012
  %v5058 = vmul.f32 1.0, %v5057
  %v5059 = vrcp.pop %v5013
  %v5060 = vmul.f32 1.0, %v5059
  %v5061 = vrcp.pop %v5014
  %v5062 = vmul.f32 1.0, %v5061
  %v5063 = vrcp.pop %v5015
  %v5064 = vmul.f32 1.0, %v5063
  %v5065 = vrcp.pop %v5016
  %v5066 = vmul.f32 1.0, %v5065
  %v5067 = vrcp.pop %v5017
  %v5068 = vmul.f32 1.0, %v5067
  %v5069 = vrcp.pop %v5018
  %v5070 = vmul.f32 1.0, %v5069
  %v5071 = vrcp.pop %v5019
  %v5072 = vmul.f32 1.0, %v5071
  %v5073 = vrcp.pop %v5020
  %v5074 = vmul.f32 1.0, %v5073
  %v5075 = vrcp.pop %v5021
  %v5076 = vmul.f32 1.0, %v5075
  %v5077 = vrcp.pop %v5022
  %v5078 = vmul.f32 1.0, %v5077
  %v5079 = vrcp.pop %v5023
  %v5080 = vmul.f32 1.0, %v5079
  %v5081 = vrcp.pop %v5024
  %v5082 = vmul.f32 1.0, %v5081
  %v5083 = vrcp.pop %v5025
  %v5084 = vmul.f32 1.0, %v5083
  %v5085 = vrcp.pop %v5026
  %v5086 = vmul.f32 1.0, %v5085
  %v5087 = vrcp.pop %v5027
  %v5088 = vmul.f32 1.0, %v5087
  %v5089 = vrcp.pop %v5028
  %v5090 = vmul.f32 1.0, %v5089
  %v5091 = vrcp.pop %v5029
  %v5092 = vmul.f32 1.0, %v5091
  %v5093 = vrcp.pop %v5030
  %v5094 = vmul.f32 1.0, %v5093
  %v5095 = vmul.f32 %v48, %v5032
  %v5096 = vmul.f32 %v49, %v5034
  %v5097 = vmul.f32 %v50, %v5036
  %v5098 = vmul.f32 %v51, %v5038
  %v5099 = vmul.f32 %v52, %v5040
  %v5100 = vmul.f32 %v53, %v5042
  %v5101 = vmul.f32 %v54, %v5044
  %v5102 = vmul.f32 %v55, %v5046
  %v5103 = vmul.f32 %v56, %v5048
  %v5104 = vmul.f32 %v57, %v5050
  %v5105 = vmul.f32 %v58, %v5052
  %v5106 = vmul.f32 %v59, %v5054
  %v5107 = vmul.f32 %v60, %v5056
  %v5108 = vmul.f32 %v61, %v5058
  %v5109 = vmul.f32 %v62, %v5060
  %v5110 = vmul.f32 %v63, %v5062
  %v5111 = vmul.f32 %v64, %v5064
  %v5112 = vmul.f32 %v65, %v5066
  %v5113 = vmul.f32 %v66, %v5068
  %v5114 = vmul.f32 %v67, %v5070
  %v5115 = vmul.f32 %v68, %v5072
  %v5116 = vmul.f32 %v69, %v5074
  %v5117 = vmul.f32 %v70, %v5076
  %v5118 = vmul.f32 %v71, %v5078
  %v5119 = vmul.f32 %v72, %v5080
  %v5120 = vmul.f32 %v73, %v5082
  %v5121 = vmul.f32 %v74, %v5084
  %v5122 = vmul.f32 %v75, %v5086
  %v5123 = vmul.f32 %v76, %v5088
  %v5124 = vmul.f32 %v77, %v5090
  %v5125 = vmul.f32 %v78, %v5092
  %v5126 = vmul.f32 %v79, %v5094
  %5127 = vst [vmem:[%s14] sm:$0xff] %v5095
  %5128 = vst [vmem:[%s14 + $0x8] sm:$0xff] %v5096
  %5129 = vst [vmem:[%s14 + $0x10] sm:$0xff] %v5097
  %5130 = vst [vmem:[%s14 + $0x18] sm:$0xff] %v5098
  %5131 = vst [vmem:[%s14 + $0x20] sm:$0xff] %v5099
  %5132 = vst [vmem:[%s14 + $0x28] sm:$0xff] %v5100
  %5133 = vst [vmem:[%s14 + $0x30] sm:$0xff] %v5101
  %5134 = vst [vmem:[%s14 + $0x38] sm:$0xff] %v5102
  %5135 = vst [vmem:[%s14 + $0x40] sm:$0xff] %v5103
  %5136 = vst [vmem:[%s14 + $0x48] sm:$0xff] %v5104
  %5137 = vst [vmem:[%s14 + $0x50] sm:$0xff] %v5105
  %5138 = vst [vmem:[%s14 + $0x58] sm:$0xff] %v5106
  %5139 = vst [vmem:[%s14 + $0x60] sm:$0xff] %v5107
  %5140 = vst [vmem:[%s14 + $0x68] sm:$0xff] %v5108
  %5141 = vst [vmem:[%s14 + $0x70] sm:$0xff] %v5109
  %5142 = vst [vmem:[%s14 + $0x78] sm:$0xff] %v5110
  %5143 = vst [vmem:[%s14 + $0x80] sm:$0xff] %v5111
  %5144 = vst [vmem:[%s14 + $0x88] sm:$0xff] %v5112
  %5145 = vst [vmem:[%s14 + $0x90] sm:$0xff] %v5113
  %5146 = vst [vmem:[%s14 + $0x98] sm:$0xff] %v5114
  %5147 = vst [vmem:[%s14 + $0xa0] sm:$0xff] %v5115
  %5148 = vst [vmem:[%s14 + $0xa8] sm:$0xff] %v5116
  %5149 = vst [vmem:[%s14 + $0xb0] sm:$0xff] %v5117
  %5150 = vst [vmem:[%s14 + $0xb8] sm:$0xff] %v5118
  %5151 = vst [vmem:[%s14 + $0xc0] sm:$0xff] %v5119
  %5152 = vst [vmem:[%s14 + $0xc8] sm:$0xff] %v5120
  %5153 = vst [vmem:[%s14 + $0xd0] sm:$0xff] %v5121
  %5154 = vst [vmem:[%s14 + $0xd8] sm:$0xff] %v5122
  %5155 = vst [vmem:[%s14 + $0xe0] sm:$0xff] %v5123
  %5156 = vst [vmem:[%s14 + $0xe8] sm:$0xff] %v5124
  %5157 = vst [vmem:[%s14 + $0xf0] sm:$0xff] %v5125
  %5158 = vst [vmem:[%s14 + $0xf8] sm:$0xff] %v5126
  // Predicated region
  $region58: #{ksfa_forward.1} parent=0 // pred_check
    _
  $region59: #{ksfa_forward.1} parent=0 // pred_check_branch
    %5160 = sbr.rel (0) target = $region61
  $region60: #{ksfa_forward.1} parent=0 // pred_region
    _
  $region61: #{ksfa_forward.1} parent=0 // pred_fallthru
    _
  // Predicated region
  $region62: #{ksfa_forward.1} parent=0 // pred_check
    _
  $region63: #{ksfa_forward.1} parent=0 // pred_check_branch
    %5162 = sbr.rel (0) target = $region65
  $region64: #{ksfa_forward.1} parent=0 // pred_region
    _
  $region65: #{ksfa_forward.1} parent=0 // pred_fallthru
    _

</llo_original>
